<compile_context>
chip_gen: v7x
topology: tpu7x:2x2x1
jax: 0.10.0
libtpu: 0.0.40
codegen_flags: <defaults>
</compile_context>

<pallas_src>
import functools
import numpy as np
import jax
import jax.numpy as jnp
from jax.experimental import pallas as pl
from jax.experimental.pallas import tpu as pltpu

LANE = 128   # channel (lane) padding target
SUB = 16     # N / E (sublane / M-dim) padding target for bf16 operands


def _ceil_to(v, m):
    return ((v + m - 1) // m) * m


# ----------------------------------------------------------------------------
# Fused forward kernel (single invocation; whole network in one pallas_call)
# ----------------------------------------------------------------------------
def _fused_forward_kernel(x_ref, mask_ref, srow_ref, scol_ref, scolT_ref, ahat_ref,
                          wm1_ref, bm1_ref, wm2_ref, bm2_ref,
                          ew1i_ref, ew1j_ref, eb1_ref, ew2_ref, eb2_ref, eat_ref,
                          tw_ref, tb_ref,
                          out_ref, *, kinds, K):
    f32 = jnp.float32
    bf16 = jnp.bfloat16

    # --- mask embedding + residual: x = mask_embd(mask) + x -------------------
    h = jnp.maximum(
        jnp.dot(mask_ref[...], wm1_ref[...], preferred_element_type=f32)
        + bm1_ref[...], 0.0)
    x = (jnp.dot(h.astype(bf16), wm2_ref[...], preferred_element_type=f32)
         + bm2_ref[...] + x_ref[...])

    e_idx = 0
    t_idx = 0
    n_layers = len(kinds)
    for i, kind in enumerate(kinds):          # unrolled at trace time
        xb = x.astype(bf16)                   # bf16 MXU operand, f32 accumulate
        if kind == "edge":
            # gather target (x_i) / source (x_j) features via one-hot matmuls
            xi = jnp.dot(scol_ref[...], xb, preferred_element_type=f32)
            xj = jnp.dot(srow_ref[...], xb, preferred_element_type=f32)
            # sum-of-matmuls (no (E,3P) concatenate); edge_attr@W1e hoisted to host
            pre = (jnp.dot(xi.astype(bf16), ew1i_ref[e_idx],
                           preferred_element_type=f32)
                   + jnp.dot(xj.astype(bf16), ew1j_ref[e_idx],
                             preferred_element_type=f32)
                   + eat_ref[e_idx] + eb1_ref[e_idx])
            hmid = jnp.maximum(pre, 0.0)
            msg = (jnp.dot(hmid.astype(bf16), ew2_ref[e_idx],
                           preferred_element_type=f32) + eb2_ref[e_idx])
            # scatter-add at target nodes (pre-transposed one-hot; no in-kernel .T)
            x = jnp.dot(scolT_ref[...], msg.astype(bf16),
                        preferred_element_type=f32)
            e_idx += 1
        else:
            # TAGConv: running accumulator over hops (no stacked buffer)
            acc = jnp.dot(xb, tw_ref[t_idx * (K + 1)], preferred_element_type=f32)
            xk = xb
            for k in range(1, K + 1):
                xk = jnp.dot(ahat_ref[...], xk,
                             preferred_element_type=f32).astype(bf16)
                acc = acc + jnp.dot(xk, tw_ref[t_idx * (K + 1) + k],
                                    preferred_element_type=f32)
            x = acc + tb_ref[t_idx]
            t_idx += 1
        if i < n_layers - 1:
            # TODO(synk): nn.Dropout has no deterministic Pallas equivalent;
            # identity here (inference / dropout_rate=0).
            x = jnp.maximum(x, 0.0)

    out_ref[...] = x


def fused_forward(x_p, mask_p, srow, scol, scolT, ahat, stacked, K):
    kinds = stacked["kinds"]
    args = (x_p, mask_p, srow, scol, scolT, ahat,
            stacked["wm1"], stacked["bm1"], stacked["wm2"], stacked["bm2"],
            stacked["ew1i"], stacked["ew1j"], stacked["eb1"],
            stacked["ew2"], stacked["eb2"], stacked["eaterm"],
            stacked["tw"], stacked["tb"])
    n_pad, P = x_p.shape
    out_bytes = n_pad * P * 4
    arg_bytes = sum(int(np.prod(a.shape)) * np.dtype(a.dtype).itemsize for a in args)
    # vmem limit derived from actual operand bytes (+headroom), capped < 64 MiB (v7x)
    vmem_limit = int(min(max(2 * (arg_bytes + out_bytes) + (8 << 20), 16 << 20),
                         64 << 20))
    vmem = pltpu.MemorySpace.VMEM
    return pl.pallas_call(
        functools.partial(_fused_forward_kernel, kinds=kinds, K=K),
        in_specs=[pl.BlockSpec(memory_space=vmem) for _ in args],
        out_specs=pl.BlockSpec(memory_space=vmem),
        out_shape=jax.ShapeDtypeStruct((n_pad, P), jnp.float32),
        compiler_params=pltpu.CompilerParams(vmem_limit_bytes=vmem_limit),
    )(*args)


# ----------------------------------------------------------------------------
# Host-side graph glue (data-dependent shapes -> numpy, not Pallas)
# ----------------------------------------------------------------------------
def is_directed(edge_index):
    if edge_index.shape[1] == 0:
        return False
    u0, v0 = edge_index[0, 0], edge_index[1, 0]
    targets_of_v0 = edge_index[1, edge_index[0, :] == v0]
    return u0 not in targets_of_v0


def undirect_graph(edge_index, edge_attr):
    if is_directed(edge_index):
        rev = np.stack([edge_index[1, :], edge_index[0, :]], axis=0)
        edge_index = np.concatenate([edge_index, rev], axis=1)
        edge_attr = np.concatenate([edge_attr, edge_attr], axis=0)
    return edge_index, edge_attr


def build_graph_mats(edge_index, num_nodes, n_pad, e_pad):
    """Dense one-hot gather/scatter matrices + gcn-normalized adjacency (padded).
    One-hot / normalized values are exact (one-hot) or near-exact in bf16."""
    row, col = edge_index[0], edge_index[1]
    E = row.shape[0]
    s_row = np.zeros((e_pad, n_pad), np.float32)   # selects source features (x_j)
    s_col = np.zeros((e_pad, n_pad), np.float32)   # selects target features (x_i)
    s_row[np.arange(E), row] = 1.0
    s_col[np.arange(E), col] = 1.0
    s_colT = np.ascontiguousarray(s_col.T)         # (N, E) pre-transposed scatter
    # gcn_norm (add_self_loops=False), target x source
    deg = np.zeros((num_nodes,), np.float32)
    np.add.at(deg, col, 1.0)
    dis = np.zeros_like(deg)
    nz = deg > 0
    dis[nz] = deg[nz] ** -0.5
    norm = dis[row] * dis[col]
    a_hat = np.zeros((n_pad, n_pad), np.float32)
    np.add.at(a_hat, (col, row), norm)
    return s_row, s_col, s_colT, a_hat


# ----------------------------------------------------------------------------
# Parameter init (unpadded, mirrors MaskEmbdMultiMPN.__init__) + padding/stacking
# ----------------------------------------------------------------------------
def init_params(key, dim_featn, dim_feate, dim_out, dim_hid, n_gnn_layers, K):
    keys = iter(jax.random.split(key, 128))

    def dense(shape, scale=0.2):
        return (scale * jax.random.normal(next(keys), shape)).astype(jnp.float32)

    mask_embd = (dense((dim_featn, dim_hid)), dense((1, dim_hid)),
                 dense((dim_hid, dim_featn)), dense((1, dim_featn)))

    specs = []
    if n_gnn_layers == 1:
        specs.append(("edge", dim_featn, dim_hid))
        specs.append(("tag", dim_hid, dim_out))
    else:
        specs.append(("edge", dim_featn, dim_hid))
        specs.append(("tag", dim_hid, dim_hid))
    for _ in range(n_gnn_layers - 2):
        specs.append(("edge", dim_hid, dim_hid))
        specs.append(("tag", dim_hid, dim_hid))
    specs.append(("edge", dim_hid, dim_out))

    layers = []
    for kind, d_in, d_out in specs:
        if kind == "edge":
            layers.append(("edge", (dense((d_in, dim_hid)),       # W1 slice for x_i
                                    dense((d_in, dim_hid)),       # W1 slice for x_j
                                    dense((dim_feate, dim_hid)),  # W1 slice for edge_attr
                                    dense((1, dim_hid)),
                                    dense((dim_hid, d_out)),
                                    dense((1, d_out)))))
        else:
            layers.append(("tag", (dense((K + 1, d_in, d_out)), dense((1, d_out)))))
    return mask_embd, layers


def _pad2(a, r, c):
    a = np.asarray(a, np.float32)
    out = np.zeros((r, c), np.float32)
    out[:a.shape[0], :a.shape[1]] = a
    return out


def pad_and_stack_params(mask_params, layers, K, P, ea_padded):
    """Pad channel dims to P lanes, stack per-layer-type weights, cast MXU
    operands to bf16, and precompute the x-independent edge_attr@W1e terms."""
    wm1, bm1, wm2, bm2 = mask_params
    kinds = tuple(k for k, _ in layers)

    ew1i, ew1j, eb1, ew2, eb2, eat = [], [], [], [], [], []
    tw, tb = [], []
    for kind, params in layers:
        if kind == "edge":
            w1i, w1j, w1e, b1, w2, b2 = (np.asarray(p, np.float32) for p in params)
            ew1i.append(_pad2(w1i, P, P))
            ew1j.append(_pad2(w1j, P, P))
            eb1.append(_pad2(b1, 1, P))
            ew2.append(_pad2(w2, P, P))
            eb2.append(_pad2(b2, 1, P))
            # hoisted x-independent edge term, computed in f32 on the host
            eat.append(_pad2(ea_padded @ w1e, ea_padded.shape[0], P))
        else:
            w, b = params
            w = np.asarray(w, np.float32)
            for k in range(K + 1):
                tw.append(_pad2(w[k], P, P))
            tb.append(_pad2(np.asarray(b, np.float32), 1, P))

    if not tw:   # defensive: module structure always has >= 1 TAGConv
        tw = [np.zeros((P, P), np.float32)] * (K + 1)
        tb = [np.zeros((1, P), np.float32)]

    bf = jnp.bfloat16
    return dict(
        kinds=kinds,
        wm1=jnp.asarray(_pad2(wm1, P, P), bf), bm1=jnp.asarray(_pad2(bm1, 1, P)),
        wm2=jnp.asarray(_pad2(wm2, P, P), bf), bm2=jnp.asarray(_pad2(bm2, 1, P)),
        ew1i=jnp.asarray(np.stack(ew1i), bf), ew1j=jnp.asarray(np.stack(ew1j), bf),
        eb1=jnp.asarray(np.stack(eb1)),
        ew2=jnp.asarray(np.stack(ew2), bf), eb2=jnp.asarray(np.stack(eb2)),
        eaterm=jnp.asarray(np.stack(eat)),
        tw=jnp.asarray(np.stack(tw), bf), tb=jnp.asarray(np.stack(tb)),
    )


# ----------------------------------------------------------------------------
# Pure-numpy f32 reference (unpadded) of the same math — sanity check
# ----------------------------------------------------------------------------
def forward_ref(x_all, edge_attr, edge_index, mask_params, layers, dim_featn, K):
    x_all = np.asarray(x_all, np.float32)
    edge_attr = np.asarray(edge_attr, np.float32)
    row, col = edge_index[0], edge_index[1]
    num_nodes = x_all.shape[0]
    x = x_all[:, 4:4 + dim_featn]
    mask = x_all[:, -dim_featn:]
    wm1, bm1, wm2, bm2 = (np.asarray(p, np.float32) for p in mask_params)
    x = np.maximum(mask @ wm1 + bm1, 0.0) @ wm2 + bm2 + x

    deg = np.zeros((num_nodes,), np.float32)
    np.add.at(deg, col, 1.0)
    dis = np.zeros_like(deg)
    nz = deg > 0
    dis[nz] = deg[nz] ** -0.5
    a_hat = np.zeros((num_nodes, num_nodes), np.float32)
    np.add.at(a_hat, (col, row), dis[row] * dis[col])

    n_layers = len(layers)
    for i, (kind, params) in enumerate(layers):
        if kind == "edge":
            w1i, w1j, w1e, b1, w2, b2 = (np.asarray(p, np.float32) for p in params)
            h = np.maximum(x[col] @ w1i + x[row] @ w1j + edge_attr @ w1e + b1, 0.0)
            msg = h @ w2 + b2
            out = np.zeros((num_nodes, w2.shape[1]), np.float32)
            np.add.at(out, col, msg)
            x = out
        else:
            w, b = params
            w = np.asarray(w, np.float32)
            b = np.asarray(b, np.float32)
            out = x @ w[0]
            xk = x
            for k in range(1, K + 1):
                xk = a_hat @ xk
                out = out + xk @ w[k]
            x = out + b
        if i < n_layers - 1:
            x = np.maximum(x, 0.0)
    return x


# ----------------------------------------------------------------------------
if __name__ == "__main__":
    dim_featn, dim_feate, dim_out, dim_hid = 4, 4, 4, 32
    n_gnn_layers, K, dropout_rate = 3, 2, 0.0
    num_nodes = 8
    P = LANE

    key = jax.random.PRNGKey(0)
    k_data, k_edge, k_param = jax.random.split(key, 3)

    # data.x : (num_nodes, 2*dim_featn + 4)
    x_all = jax.random.normal(k_data, (num_nodes, 2 * dim_featn + 4), jnp.float32)
    x_all_np = np.asarray(x_all, np.float32)

    # directed ring graph -> undirect_graph duplicates the edges
    edge_index = np.stack(
        [np.arange(num_nodes), (np.arange(num_nodes) + 1) % num_nodes], axis=0
    ).astype(np.int64)
    edge_attr_np = np.asarray(
        jax.random.normal(k_edge, (num_nodes, dim_feate), jnp.float32))
    edge_index, edge_attr_np = undirect_graph(edge_index, edge_attr_np)
    num_edges = edge_index.shape[1]

    # sublane-only padding of N/E; channel dims padded to 128 lanes
    n_pad = _ceil_to(num_nodes, SUB)
    e_pad = _ceil_to(num_edges, SUB)

    x_np = np.zeros((n_pad, P), np.float32)
    x_np[:num_nodes, :dim_featn] = x_all_np[:, 4:4 + dim_featn]
    mask_np = np.zeros((n_pad, P), np.float32)
    mask_np[:num_nodes, :dim_featn] = x_all_np[:, -dim_featn:]
    ea_padded = np.zeros((e_pad, dim_feate), np.float32)
    ea_padded[:num_edges] = edge_attr_np

    srow_p, scol_p, scolT_p, ahat_p = build_graph_mats(
        edge_index, num_nodes, n_pad, e_pad)

    mask_params, layers = init_params(
        k_param, dim_featn, dim_feate, dim_out, dim_hid, n_gnn_layers, K)
    stacked = pad_and_stack_params(mask_params, layers, K, P, ea_padded)

    bf = jnp.bfloat16
    out_p = fused_forward(
        jnp.asarray(x_np),                # f32: residual-add target
        jnp.asarray(mask_np, bf),
        jnp.asarray(srow_p, bf), jnp.asarray(scol_p, bf),
        jnp.asarray(scolT_p, bf), jnp.asarray(ahat_p, bf),
        stacked, K)
    out_p = jax.block_until_ready(out_p)
    out = np.asarray(out_p)[:num_nodes, :dim_out]

    ref = forward_ref(x_all_np, edge_attr_np, edge_index,
                      mask_params, layers, dim_featn, K)

    # bf16 MXU operands (f32 accumulation) -> loosened tolerance vs f32 reference
    np.testing.assert_allclose(out, ref, rtol=5e-2, atol=5e-2)
    assert out.shape == (num_nodes, dim_out)

    print("KERNEL_OK")
</pallas_src>

<mosaic_0001>
module attributes {stable_mosaic.version = 11 : i64} {
  func.func @_fused_forward_kernel(%arg0: memref<16x128xf32, #tpu.memory_space<vmem>>, %arg1: memref<16x128xbf16, #tpu.memory_space<vmem>>, %arg2: memref<16x16xbf16, #tpu.memory_space<vmem>>, %arg3: memref<16x16xbf16, #tpu.memory_space<vmem>>, %arg4: memref<16x16xbf16, #tpu.memory_space<vmem>>, %arg5: memref<16x16xbf16, #tpu.memory_space<vmem>>, %arg6: memref<128x128xbf16, #tpu.memory_space<vmem>>, %arg7: memref<1x128xf32, #tpu.memory_space<vmem>>, %arg8: memref<128x128xbf16, #tpu.memory_space<vmem>>, %arg9: memref<1x128xf32, #tpu.memory_space<vmem>>, %arg10: memref<3x128x128xbf16, #tpu.memory_space<vmem>>, %arg11: memref<3x128x128xbf16, #tpu.memory_space<vmem>>, %arg12: memref<3x1x128xf32, #tpu.memory_space<vmem>>, %arg13: memref<3x128x128xbf16, #tpu.memory_space<vmem>>, %arg14: memref<3x1x128xf32, #tpu.memory_space<vmem>>, %arg15: memref<3x16x128xf32, #tpu.memory_space<vmem>>, %arg16: memref<6x128x128xbf16, #tpu.memory_space<vmem>>, %arg17: memref<2x1x128xf32, #tpu.memory_space<vmem>>, %arg18: memref<16x128xf32, #tpu.memory_space<vmem>>) attributes {dimension_semantics = [], scalar_prefetch = 0 : i64, scratch_operands = 0 : i64, tpu.core_type = #tpu.core_type<tc>} {
    %c0 = arith.constant 0 : index
    %c0_0 = arith.constant 0 : index
    %0 = vector.load %arg1[%c0, %c0_0] : memref<16x128xbf16, #tpu.memory_space<vmem>>, vector<16x128xbf16>
    %c0_1 = arith.constant 0 : index
    %c0_2 = arith.constant 0 : index
    %1 = vector.load %arg6[%c0_1, %c0_2] : memref<128x128xbf16, #tpu.memory_space<vmem>>, vector<128x128xbf16>
    %cst = arith.constant dense<0.000000e+00> : vector<16x128xf32>
    %2 = tpu.matmul %0, %1, %cst {dimension_numbers = #tpu.dot_dimension_numbers<[1], [0], [0], [1], [0, 0, 1, 1], [], []>} : vector<16x128xbf16>, vector<128x128xbf16>, vector<16x128xf32> -> vector<16x128xf32>
    %c0_3 = arith.constant 0 : index
    %c0_4 = arith.constant 0 : index
    %3 = vector.load %arg7[%c0_3, %c0_4] : memref<1x128xf32, #tpu.memory_space<vmem>>, vector<1x128xf32>
    %4 = vector.broadcast %3 : vector<1x128xf32> to vector<16x128xf32>
    %5 = arith.addf %2, %4 : vector<16x128xf32>
    %cst_5 = arith.constant 0.000000e+00 : f32
    %6 = vector.broadcast %cst_5 : f32 to vector<16x128xf32>
    %7 = arith.maximumf %5, %6 : vector<16x128xf32>
    %8 = arith.truncf %7 : vector<16x128xf32> to vector<16x128xbf16>
    %c0_6 = arith.constant 0 : index
    %c0_7 = arith.constant 0 : index
    %9 = vector.load %arg8[%c0_6, %c0_7] : memref<128x128xbf16, #tpu.memory_space<vmem>>, vector<128x128xbf16>
    %cst_8 = arith.constant dense<0.000000e+00> : vector<16x128xf32>
    %10 = tpu.matmul %8, %9, %cst_8 {dimension_numbers = #tpu.dot_dimension_numbers<[1], [0], [0], [1], [0, 0, 1, 1], [], []>} : vector<16x128xbf16>, vector<128x128xbf16>, vector<16x128xf32> -> vector<16x128xf32>
    %c0_9 = arith.constant 0 : index
    %c0_10 = arith.constant 0 : index
    %11 = vector.load %arg9[%c0_9, %c0_10] : memref<1x128xf32, #tpu.memory_space<vmem>>, vector<1x128xf32>
    %12 = vector.broadcast %11 : vector<1x128xf32> to vector<16x128xf32>
    %13 = arith.addf %10, %12 : vector<16x128xf32>
    %c0_11 = arith.constant 0 : index
    %c0_12 = arith.constant 0 : index
    %14 = vector.load %arg0[%c0_11, %c0_12] : memref<16x128xf32, #tpu.memory_space<vmem>>, vector<16x128xf32>
    %15 = arith.addf %13, %14 : vector<16x128xf32>
    %16 = arith.truncf %15 : vector<16x128xf32> to vector<16x128xbf16>
    %c0_13 = arith.constant 0 : index
    %c0_14 = arith.constant 0 : index
    %17 = vector.load %arg3[%c0_13, %c0_14] : memref<16x16xbf16, #tpu.memory_space<vmem>>, vector<16x16xbf16>
    %cst_15 = arith.constant dense<0.000000e+00> : vector<16x128xf32>
    %18 = tpu.matmul %17, %16, %cst_15 {dimension_numbers = #tpu.dot_dimension_numbers<[1], [0], [0], [1], [0, 0, 1, 1], [], []>} : vector<16x16xbf16>, vector<16x128xbf16>, vector<16x128xf32> -> vector<16x128xf32>
    %c0_16 = arith.constant 0 : index
    %c0_17 = arith.constant 0 : index
    %19 = vector.load %arg2[%c0_16, %c0_17] : memref<16x16xbf16, #tpu.memory_space<vmem>>, vector<16x16xbf16>
    %cst_18 = arith.constant dense<0.000000e+00> : vector<16x128xf32>
    %20 = tpu.matmul %19, %16, %cst_18 {dimension_numbers = #tpu.dot_dimension_numbers<[1], [0], [0], [1], [0, 0, 1, 1], [], []>} : vector<16x16xbf16>, vector<16x128xbf16>, vector<16x128xf32> -> vector<16x128xf32>
    %21 = arith.truncf %18 : vector<16x128xf32> to vector<16x128xbf16>
    %c0_19 = arith.constant 0 : index
    %c0_20 = arith.constant 0 : index
    %c0_21 = arith.constant 0 : index
    %22 = vector.load %arg10[%c0_19, %c0_20, %c0_21] : memref<3x128x128xbf16, #tpu.memory_space<vmem>>, vector<1x128x128xbf16>
    %23 = vector.shape_cast %22 : vector<1x128x128xbf16> to vector<128x128xbf16>
    %cst_22 = arith.constant dense<0.000000e+00> : vector<16x128xf32>
    %24 = tpu.matmul %21, %23, %cst_22 {dimension_numbers = #tpu.dot_dimension_numbers<[1], [0], [0], [1], [0, 0, 1, 1], [], []>} : vector<16x128xbf16>, vector<128x128xbf16>, vector<16x128xf32> -> vector<16x128xf32>
    %25 = arith.truncf %20 : vector<16x128xf32> to vector<16x128xbf16>
    %c0_23 = arith.constant 0 : index
    %c0_24 = arith.constant 0 : index
    %c0_25 = arith.constant 0 : index
    %26 = vector.load %arg11[%c0_23, %c0_24, %c0_25] : memref<3x128x128xbf16, #tpu.memory_space<vmem>>, vector<1x128x128xbf16>
    %27 = vector.shape_cast %26 : vector<1x128x128xbf16> to vector<128x128xbf16>
    %cst_26 = arith.constant dense<0.000000e+00> : vector<16x128xf32>
    %28 = tpu.matmul %25, %27, %cst_26 {dimension_numbers = #tpu.dot_dimension_numbers<[1], [0], [0], [1], [0, 0, 1, 1], [], []>} : vector<16x128xbf16>, vector<128x128xbf16>, vector<16x128xf32> -> vector<16x128xf32>
    %29 = arith.addf %24, %28 : vector<16x128xf32>
    %c0_27 = arith.constant 0 : index
    %c0_28 = arith.constant 0 : index
    %c0_29 = arith.constant 0 : index
    %30 = vector.load %arg15[%c0_27, %c0_28, %c0_29] : memref<3x16x128xf32, #tpu.memory_space<vmem>>, vector<1x16x128xf32>
    %31 = vector.shape_cast %30 : vector<1x16x128xf32> to vector<16x128xf32>
    %32 = arith.addf %29, %31 : vector<16x128xf32>
    %c0_30 = arith.constant 0 : index
    %c0_31 = arith.constant 0 : index
    %c0_32 = arith.constant 0 : index
    %33 = vector.load %arg12[%c0_30, %c0_31, %c0_32] : memref<3x1x128xf32, #tpu.memory_space<vmem>>, vector<1x1x128xf32>
    %34 = vector.shape_cast %33 : vector<1x1x128xf32> to vector<1x128xf32>
    %35 = vector.broadcast %34 : vector<1x128xf32> to vector<16x128xf32>
    %36 = arith.addf %32, %35 : vector<16x128xf32>
    %cst_33 = arith.constant 0.000000e+00 : f32
    %37 = vector.broadcast %cst_33 : f32 to vector<16x128xf32>
    %38 = arith.maximumf %36, %37 : vector<16x128xf32>
    %39 = arith.truncf %38 : vector<16x128xf32> to vector<16x128xbf16>
    %c0_34 = arith.constant 0 : index
    %c0_35 = arith.constant 0 : index
    %c0_36 = arith.constant 0 : index
    %40 = vector.load %arg13[%c0_34, %c0_35, %c0_36] : memref<3x128x128xbf16, #tpu.memory_space<vmem>>, vector<1x128x128xbf16>
    %41 = vector.shape_cast %40 : vector<1x128x128xbf16> to vector<128x128xbf16>
    %cst_37 = arith.constant dense<0.000000e+00> : vector<16x128xf32>
    %42 = tpu.matmul %39, %41, %cst_37 {dimension_numbers = #tpu.dot_dimension_numbers<[1], [0], [0], [1], [0, 0, 1, 1], [], []>} : vector<16x128xbf16>, vector<128x128xbf16>, vector<16x128xf32> -> vector<16x128xf32>
    %c0_38 = arith.constant 0 : index
    %c0_39 = arith.constant 0 : index
    %c0_40 = arith.constant 0 : index
    %43 = vector.load %arg14[%c0_38, %c0_39, %c0_40] : memref<3x1x128xf32, #tpu.memory_space<vmem>>, vector<1x1x128xf32>
    %44 = vector.shape_cast %43 : vector<1x1x128xf32> to vector<1x128xf32>
    %45 = vector.broadcast %44 : vector<1x128xf32> to vector<16x128xf32>
    %46 = arith.addf %42, %45 : vector<16x128xf32>
    %c0_41 = arith.constant 0 : index
    %c0_42 = arith.constant 0 : index
    %47 = vector.load %arg4[%c0_41, %c0_42] : memref<16x16xbf16, #tpu.memory_space<vmem>>, vector<16x16xbf16>
    %48 = arith.truncf %46 : vector<16x128xf32> to vector<16x128xbf16>
    %cst_43 = arith.constant dense<0.000000e+00> : vector<16x128xf32>
    %49 = tpu.matmul %47, %48, %cst_43 {dimension_numbers = #tpu.dot_dimension_numbers<[1], [0], [0], [1], [0, 0, 1, 1], [], []>} : vector<16x16xbf16>, vector<16x128xbf16>, vector<16x128xf32> -> vector<16x128xf32>
    %cst_44 = arith.constant 0.000000e+00 : f32
    %50 = vector.broadcast %cst_44 : f32 to vector<16x128xf32>
    %51 = arith.maximumf %49, %50 : vector<16x128xf32>
    %52 = arith.truncf %51 : vector<16x128xf32> to vector<16x128xbf16>
    %c0_45 = arith.constant 0 : index
    %c0_46 = arith.constant 0 : index
    %c0_47 = arith.constant 0 : index
    %53 = vector.load %arg16[%c0_45, %c0_46, %c0_47] : memref<6x128x128xbf16, #tpu.memory_space<vmem>>, vector<1x128x128xbf16>
    %54 = vector.shape_cast %53 : vector<1x128x128xbf16> to vector<128x128xbf16>
    %cst_48 = arith.constant dense<0.000000e+00> : vector<16x128xf32>
    %55 = tpu.matmul %52, %54, %cst_48 {dimension_numbers = #tpu.dot_dimension_numbers<[1], [0], [0], [1], [0, 0, 1, 1], [], []>} : vector<16x128xbf16>, vector<128x128xbf16>, vector<16x128xf32> -> vector<16x128xf32>
    %c0_49 = arith.constant 0 : index
    %c0_50 = arith.constant 0 : index
    %56 = vector.load %arg5[%c0_49, %c0_50] : memref<16x16xbf16, #tpu.memory_space<vmem>>, vector<16x16xbf16>
    %cst_51 = arith.constant dense<0.000000e+00> : vector<16x128xf32>
    %57 = tpu.matmul %56, %52, %cst_51 {dimension_numbers = #tpu.dot_dimension_numbers<[1], [0], [0], [1], [0, 0, 1, 1], [], []>} : vector<16x16xbf16>, vector<16x128xbf16>, vector<16x128xf32> -> vector<16x128xf32>
    %58 = arith.truncf %57 : vector<16x128xf32> to vector<16x128xbf16>
    %c1 = arith.constant 1 : index
    %c0_52 = arith.constant 0 : index
    %c0_53 = arith.constant 0 : index
    %59 = vector.load %arg16[%c1, %c0_52, %c0_53] : memref<6x128x128xbf16, #tpu.memory_space<vmem>>, vector<1x128x128xbf16>
    %60 = vector.shape_cast %59 : vector<1x128x128xbf16> to vector<128x128xbf16>
    %cst_54 = arith.constant dense<0.000000e+00> : vector<16x128xf32>
    %61 = tpu.matmul %58, %60, %cst_54 {dimension_numbers = #tpu.dot_dimension_numbers<[1], [0], [0], [1], [0, 0, 1, 1], [], []>} : vector<16x128xbf16>, vector<128x128xbf16>, vector<16x128xf32> -> vector<16x128xf32>
    %62 = arith.addf %55, %61 : vector<16x128xf32>
    %c0_55 = arith.constant 0 : index
    %c0_56 = arith.constant 0 : index
    %63 = vector.load %arg5[%c0_55, %c0_56] : memref<16x16xbf16, #tpu.memory_space<vmem>>, vector<16x16xbf16>
    %cst_57 = arith.constant dense<0.000000e+00> : vector<16x128xf32>
    %64 = tpu.matmul %63, %58, %cst_57 {dimension_numbers = #tpu.dot_dimension_numbers<[1], [0], [0], [1], [0, 0, 1, 1], [], []>} : vector<16x16xbf16>, vector<16x128xbf16>, vector<16x128xf32> -> vector<16x128xf32>
    %65 = arith.truncf %64 : vector<16x128xf32> to vector<16x128xbf16>
    %c2 = arith.constant 2 : index
    %c0_58 = arith.constant 0 : index
    %c0_59 = arith.constant 0 : index
    %66 = vector.load %arg16[%c2, %c0_58, %c0_59] : memref<6x128x128xbf16, #tpu.memory_space<vmem>>, vector<1x128x128xbf16>
    %67 = vector.shape_cast %66 : vector<1x128x128xbf16> to vector<128x128xbf16>
    %cst_60 = arith.constant dense<0.000000e+00> : vector<16x128xf32>
    %68 = tpu.matmul %65, %67, %cst_60 {dimension_numbers = #tpu.dot_dimension_numbers<[1], [0], [0], [1], [0, 0, 1, 1], [], []>} : vector<16x128xbf16>, vector<128x128xbf16>, vector<16x128xf32> -> vector<16x128xf32>
    %69 = arith.addf %62, %68 : vector<16x128xf32>
    %c0_61 = arith.constant 0 : index
    %c0_62 = arith.constant 0 : index
    %c0_63 = arith.constant 0 : index
    %70 = vector.load %arg17[%c0_61, %c0_62, %c0_63] : memref<2x1x128xf32, #tpu.memory_space<vmem>>, vector<1x1x128xf32>
    %71 = vector.shape_cast %70 : vector<1x1x128xf32> to vector<1x128xf32>
    %72 = vector.broadcast %71 : vector<1x128xf32> to vector<16x128xf32>
    %73 = arith.addf %69, %72 : vector<16x128xf32>
    %cst_64 = arith.constant 0.000000e+00 : f32
    %74 = vector.broadcast %cst_64 : f32 to vector<16x128xf32>
    %75 = arith.maximumf %73, %74 : vector<16x128xf32>
    %76 = arith.truncf %75 : vector<16x128xf32> to vector<16x128xbf16>
    %c0_65 = arith.constant 0 : index
    %c0_66 = arith.constant 0 : index
    %77 = vector.load %arg3[%c0_65, %c0_66] : memref<16x16xbf16, #tpu.memory_space<vmem>>, vector<16x16xbf16>
    %cst_67 = arith.constant dense<0.000000e+00> : vector<16x128xf32>
    %78 = tpu.matmul %77, %76, %cst_67 {dimension_numbers = #tpu.dot_dimension_numbers<[1], [0], [0], [1], [0, 0, 1, 1], [], []>} : vector<16x16xbf16>, vector<16x128xbf16>, vector<16x128xf32> -> vector<16x128xf32>
    %c0_68 = arith.constant 0 : index
    %c0_69 = arith.constant 0 : index
    %79 = vector.load %arg2[%c0_68, %c0_69] : memref<16x16xbf16, #tpu.memory_space<vmem>>, vector<16x16xbf16>
    %cst_70 = arith.constant dense<0.000000e+00> : vector<16x128xf32>
    %80 = tpu.matmul %79, %76, %cst_70 {dimension_numbers = #tpu.dot_dimension_numbers<[1], [0], [0], [1], [0, 0, 1, 1], [], []>} : vector<16x16xbf16>, vector<16x128xbf16>, vector<16x128xf32> -> vector<16x128xf32>
    %81 = arith.truncf %78 : vector<16x128xf32> to vector<16x128xbf16>
    %c1_71 = arith.constant 1 : index
    %c0_72 = arith.constant 0 : index
    %c0_73 = arith.constant 0 : index
    %82 = vector.load %arg10[%c1_71, %c0_72, %c0_73] : memref<3x128x128xbf16, #tpu.memory_space<vmem>>, vector<1x128x128xbf16>
    %83 = vector.shape_cast %82 : vector<1x128x128xbf16> to vector<128x128xbf16>
    %cst_74 = arith.constant dense<0.000000e+00> : vector<16x128xf32>
    %84 = tpu.matmul %81, %83, %cst_74 {dimension_numbers = #tpu.dot_dimension_numbers<[1], [0], [0], [1], [0, 0, 1, 1], [], []>} : vector<16x128xbf16>, vector<128x128xbf16>, vector<16x128xf32> -> vector<16x128xf32>
    %85 = arith.truncf %80 : vector<16x128xf32> to vector<16x128xbf16>
    %c1_75 = arith.constant 1 : index
    %c0_76 = arith.constant 0 : index
    %c0_77 = arith.constant 0 : index
    %86 = vector.load %arg11[%c1_75, %c0_76, %c0_77] : memref<3x128x128xbf16, #tpu.memory_space<vmem>>, vector<1x128x128xbf16>
    %87 = vector.shape_cast %86 : vector<1x128x128xbf16> to vector<128x128xbf16>
    %cst_78 = arith.constant dense<0.000000e+00> : vector<16x128xf32>
    %88 = tpu.matmul %85, %87, %cst_78 {dimension_numbers = #tpu.dot_dimension_numbers<[1], [0], [0], [1], [0, 0, 1, 1], [], []>} : vector<16x128xbf16>, vector<128x128xbf16>, vector<16x128xf32> -> vector<16x128xf32>
    %89 = arith.addf %84, %88 : vector<16x128xf32>
    %c1_79 = arith.constant 1 : index
    %c0_80 = arith.constant 0 : index
    %c0_81 = arith.constant 0 : index
    %90 = vector.load %arg15[%c1_79, %c0_80, %c0_81] : memref<3x16x128xf32, #tpu.memory_space<vmem>>, vector<1x16x128xf32>
    %91 = vector.shape_cast %90 : vector<1x16x128xf32> to vector<16x128xf32>
    %92 = arith.addf %89, %91 : vector<16x128xf32>
    %c1_82 = arith.constant 1 : index
    %c0_83 = arith.constant 0 : index
    %c0_84 = arith.constant 0 : index
    %93 = vector.load %arg12[%c1_82, %c0_83, %c0_84] : memref<3x1x128xf32, #tpu.memory_space<vmem>>, vector<1x1x128xf32>
    %94 = vector.shape_cast %93 : vector<1x1x128xf32> to vector<1x128xf32>
    %95 = vector.broadcast %94 : vector<1x128xf32> to vector<16x128xf32>
    %96 = arith.addf %92, %95 : vector<16x128xf32>
    %cst_85 = arith.constant 0.000000e+00 : f32
    %97 = vector.broadcast %cst_85 : f32 to vector<16x128xf32>
    %98 = arith.maximumf %96, %97 : vector<16x128xf32>
    %99 = arith.truncf %98 : vector<16x128xf32> to vector<16x128xbf16>
    %c1_86 = arith.constant 1 : index
    %c0_87 = arith.constant 0 : index
    %c0_88 = arith.constant 0 : index
    %100 = vector.load %arg13[%c1_86, %c0_87, %c0_88] : memref<3x128x128xbf16, #tpu.memory_space<vmem>>, vector<1x128x128xbf16>
    %101 = vector.shape_cast %100 : vector<1x128x128xbf16> to vector<128x128xbf16>
    %cst_89 = arith.constant dense<0.000000e+00> : vector<16x128xf32>
    %102 = tpu.matmul %99, %101, %cst_89 {dimension_numbers = #tpu.dot_dimension_numbers<[1], [0], [0], [1], [0, 0, 1, 1], [], []>} : vector<16x128xbf16>, vector<128x128xbf16>, vector<16x128xf32> -> vector<16x128xf32>
    %c1_90 = arith.constant 1 : index
    %c0_91 = arith.constant 0 : index
    %c0_92 = arith.constant 0 : index
    %103 = vector.load %arg14[%c1_90, %c0_91, %c0_92] : memref<3x1x128xf32, #tpu.memory_space<vmem>>, vector<1x1x128xf32>
    %104 = vector.shape_cast %103 : vector<1x1x128xf32> to vector<1x128xf32>
    %105 = vector.broadcast %104 : vector<1x128xf32> to vector<16x128xf32>
    %106 = arith.addf %102, %105 : vector<16x128xf32>
    %c0_93 = arith.constant 0 : index
    %c0_94 = arith.constant 0 : index
    %107 = vector.load %arg4[%c0_93, %c0_94] : memref<16x16xbf16, #tpu.memory_space<vmem>>, vector<16x16xbf16>
    %108 = arith.truncf %106 : vector<16x128xf32> to vector<16x128xbf16>
    %cst_95 = arith.constant dense<0.000000e+00> : vector<16x128xf32>
    %109 = tpu.matmul %107, %108, %cst_95 {dimension_numbers = #tpu.dot_dimension_numbers<[1], [0], [0], [1], [0, 0, 1, 1], [], []>} : vector<16x16xbf16>, vector<16x128xbf16>, vector<16x128xf32> -> vector<16x128xf32>
    %cst_96 = arith.constant 0.000000e+00 : f32
    %110 = vector.broadcast %cst_96 : f32 to vector<16x128xf32>
    %111 = arith.maximumf %109, %110 : vector<16x128xf32>
    %112 = arith.truncf %111 : vector<16x128xf32> to vector<16x128xbf16>
    %c3 = arith.constant 3 : index
    %c0_97 = arith.constant 0 : index
    %c0_98 = arith.constant 0 : index
    %113 = vector.load %arg16[%c3, %c0_97, %c0_98] : memref<6x128x128xbf16, #tpu.memory_space<vmem>>, vector<1x128x128xbf16>
    %114 = vector.shape_cast %113 : vector<1x128x128xbf16> to vector<128x128xbf16>
    %cst_99 = arith.constant dense<0.000000e+00> : vector<16x128xf32>
    %115 = tpu.matmul %112, %114, %cst_99 {dimension_numbers = #tpu.dot_dimension_numbers<[1], [0], [0], [1], [0, 0, 1, 1], [], []>} : vector<16x128xbf16>, vector<128x128xbf16>, vector<16x128xf32> -> vector<16x128xf32>
    %c0_100 = arith.constant 0 : index
    %c0_101 = arith.constant 0 : index
    %116 = vector.load %arg5[%c0_100, %c0_101] : memref<16x16xbf16, #tpu.memory_space<vmem>>, vector<16x16xbf16>
    %cst_102 = arith.constant dense<0.000000e+00> : vector<16x128xf32>
    %117 = tpu.matmul %116, %112, %cst_102 {dimension_numbers = #tpu.dot_dimension_numbers<[1], [0], [0], [1], [0, 0, 1, 1], [], []>} : vector<16x16xbf16>, vector<16x128xbf16>, vector<16x128xf32> -> vector<16x128xf32>
    %118 = arith.truncf %117 : vector<16x128xf32> to vector<16x128xbf16>
    %c4 = arith.constant 4 : index
    %c0_103 = arith.constant 0 : index
    %c0_104 = arith.constant 0 : index
    %119 = vector.load %arg16[%c4, %c0_103, %c0_104] : memref<6x128x128xbf16, #tpu.memory_space<vmem>>, vector<1x128x128xbf16>
    %120 = vector.shape_cast %119 : vector<1x128x128xbf16> to vector<128x128xbf16>
    %cst_105 = arith.constant dense<0.000000e+00> : vector<16x128xf32>
    %121 = tpu.matmul %118, %120, %cst_105 {dimension_numbers = #tpu.dot_dimension_numbers<[1], [0], [0], [1], [0, 0, 1, 1], [], []>} : vector<16x128xbf16>, vector<128x128xbf16>, vector<16x128xf32> -> vector<16x128xf32>
    %122 = arith.addf %115, %121 : vector<16x128xf32>
    %c0_106 = arith.constant 0 : index
    %c0_107 = arith.constant 0 : index
    %123 = vector.load %arg5[%c0_106, %c0_107] : memref<16x16xbf16, #tpu.memory_space<vmem>>, vector<16x16xbf16>
    %cst_108 = arith.constant dense<0.000000e+00> : vector<16x128xf32>
    %124 = tpu.matmul %123, %118, %cst_108 {dimension_numbers = #tpu.dot_dimension_numbers<[1], [0], [0], [1], [0, 0, 1, 1], [], []>} : vector<16x16xbf16>, vector<16x128xbf16>, vector<16x128xf32> -> vector<16x128xf32>
    %125 = arith.truncf %124 : vector<16x128xf32> to vector<16x128xbf16>
    %c5 = arith.constant 5 : index
    %c0_109 = arith.constant 0 : index
    %c0_110 = arith.constant 0 : index
    %126 = vector.load %arg16[%c5, %c0_109, %c0_110] : memref<6x128x128xbf16, #tpu.memory_space<vmem>>, vector<1x128x128xbf16>
    %127 = vector.shape_cast %126 : vector<1x128x128xbf16> to vector<128x128xbf16>
    %cst_111 = arith.constant dense<0.000000e+00> : vector<16x128xf32>
    %128 = tpu.matmul %125, %127, %cst_111 {dimension_numbers = #tpu.dot_dimension_numbers<[1], [0], [0], [1], [0, 0, 1, 1], [], []>} : vector<16x128xbf16>, vector<128x128xbf16>, vector<16x128xf32> -> vector<16x128xf32>
    %129 = arith.addf %122, %128 : vector<16x128xf32>
    %c1_112 = arith.constant 1 : index
    %c0_113 = arith.constant 0 : index
    %c0_114 = arith.constant 0 : index
    %130 = vector.load %arg17[%c1_112, %c0_113, %c0_114] : memref<2x1x128xf32, #tpu.memory_space<vmem>>, vector<1x1x128xf32>
    %131 = vector.shape_cast %130 : vector<1x1x128xf32> to vector<1x128xf32>
    %132 = vector.broadcast %131 : vector<1x128xf32> to vector<16x128xf32>
    %133 = arith.addf %129, %132 : vector<16x128xf32>
    %cst_115 = arith.constant 0.000000e+00 : f32
    %134 = vector.broadcast %cst_115 : f32 to vector<16x128xf32>
    %135 = arith.maximumf %133, %134 : vector<16x128xf32>
    %136 = arith.truncf %135 : vector<16x128xf32> to vector<16x128xbf16>
    %c0_116 = arith.constant 0 : index
    %c0_117 = arith.constant 0 : index
    %137 = vector.load %arg3[%c0_116, %c0_117] : memref<16x16xbf16, #tpu.memory_space<vmem>>, vector<16x16xbf16>
    %cst_118 = arith.constant dense<0.000000e+00> : vector<16x128xf32>
    %138 = tpu.matmul %137, %136, %cst_118 {dimension_numbers = #tpu.dot_dimension_numbers<[1], [0], [0], [1], [0, 0, 1, 1], [], []>} : vector<16x16xbf16>, vector<16x128xbf16>, vector<16x128xf32> -> vector<16x128xf32>
    %c0_119 = arith.constant 0 : index
    %c0_120 = arith.constant 0 : index
    %139 = vector.load %arg2[%c0_119, %c0_120] : memref<16x16xbf16, #tpu.memory_space<vmem>>, vector<16x16xbf16>
    %cst_121 = arith.constant dense<0.000000e+00> : vector<16x128xf32>
    %140 = tpu.matmul %139, %136, %cst_121 {dimension_numbers = #tpu.dot_dimension_numbers<[1], [0], [0], [1], [0, 0, 1, 1], [], []>} : vector<16x16xbf16>, vector<16x128xbf16>, vector<16x128xf32> -> vector<16x128xf32>
    %141 = arith.truncf %138 : vector<16x128xf32> to vector<16x128xbf16>
    %c2_122 = arith.constant 2 : index
    %c0_123 = arith.constant 0 : index
    %c0_124 = arith.constant 0 : index
    %142 = vector.load %arg10[%c2_122, %c0_123, %c0_124] : memref<3x128x128xbf16, #tpu.memory_space<vmem>>, vector<1x128x128xbf16>
    %143 = vector.shape_cast %142 : vector<1x128x128xbf16> to vector<128x128xbf16>
    %cst_125 = arith.constant dense<0.000000e+00> : vector<16x128xf32>
    %144 = tpu.matmul %141, %143, %cst_125 {dimension_numbers = #tpu.dot_dimension_numbers<[1], [0], [0], [1], [0, 0, 1, 1], [], []>} : vector<16x128xbf16>, vector<128x128xbf16>, vector<16x128xf32> -> vector<16x128xf32>
    %145 = arith.truncf %140 : vector<16x128xf32> to vector<16x128xbf16>
    %c2_126 = arith.constant 2 : index
    %c0_127 = arith.constant 0 : index
    %c0_128 = arith.constant 0 : index
    %146 = vector.load %arg11[%c2_126, %c0_127, %c0_128] : memref<3x128x128xbf16, #tpu.memory_space<vmem>>, vector<1x128x128xbf16>
    %147 = vector.shape_cast %146 : vector<1x128x128xbf16> to vector<128x128xbf16>
    %cst_129 = arith.constant dense<0.000000e+00> : vector<16x128xf32>
    %148 = tpu.matmul %145, %147, %cst_129 {dimension_numbers = #tpu.dot_dimension_numbers<[1], [0], [0], [1], [0, 0, 1, 1], [], []>} : vector<16x128xbf16>, vector<128x128xbf16>, vector<16x128xf32> -> vector<16x128xf32>
    %149 = arith.addf %144, %148 : vector<16x128xf32>
    %c2_130 = arith.constant 2 : index
    %c0_131 = arith.constant 0 : index
    %c0_132 = arith.constant 0 : index
    %150 = vector.load %arg15[%c2_130, %c0_131, %c0_132] : memref<3x16x128xf32, #tpu.memory_space<vmem>>, vector<1x16x128xf32>
    %151 = vector.shape_cast %150 : vector<1x16x128xf32> to vector<16x128xf32>
    %152 = arith.addf %149, %151 : vector<16x128xf32>
    %c2_133 = arith.constant 2 : index
    %c0_134 = arith.constant 0 : index
    %c0_135 = arith.constant 0 : index
    %153 = vector.load %arg12[%c2_133, %c0_134, %c0_135] : memref<3x1x128xf32, #tpu.memory_space<vmem>>, vector<1x1x128xf32>
    %154 = vector.shape_cast %153 : vector<1x1x128xf32> to vector<1x128xf32>
    %155 = vector.broadcast %154 : vector<1x128xf32> to vector<16x128xf32>
    %156 = arith.addf %152, %155 : vector<16x128xf32>
    %cst_136 = arith.constant 0.000000e+00 : f32
    %157 = vector.broadcast %cst_136 : f32 to vector<16x128xf32>
    %158 = arith.maximumf %156, %157 : vector<16x128xf32>
    %159 = arith.truncf %158 : vector<16x128xf32> to vector<16x128xbf16>
    %c2_137 = arith.constant 2 : index
    %c0_138 = arith.constant 0 : index
    %c0_139 = arith.constant 0 : index
    %160 = vector.load %arg13[%c2_137, %c0_138, %c0_139] : memref<3x128x128xbf16, #tpu.memory_space<vmem>>, vector<1x128x128xbf16>
    %161 = vector.shape_cast %160 : vector<1x128x128xbf16> to vector<128x128xbf16>
    %cst_140 = arith.constant dense<0.000000e+00> : vector<16x128xf32>
    %162 = tpu.matmul %159, %161, %cst_140 {dimension_numbers = #tpu.dot_dimension_numbers<[1], [0], [0], [1], [0, 0, 1, 1], [], []>} : vector<16x128xbf16>, vector<128x128xbf16>, vector<16x128xf32> -> vector<16x128xf32>
    %c2_141 = arith.constant 2 : index
    %c0_142 = arith.constant 0 : index
    %c0_143 = arith.constant 0 : index
    %163 = vector.load %arg14[%c2_141, %c0_142, %c0_143] : memref<3x1x128xf32, #tpu.memory_space<vmem>>, vector<1x1x128xf32>
    %164 = vector.shape_cast %163 : vector<1x1x128xf32> to vector<1x128xf32>
    %165 = vector.broadcast %164 : vector<1x128xf32> to vector<16x128xf32>
    %166 = arith.addf %162, %165 : vector<16x128xf32>
    %c0_144 = arith.constant 0 : index
    %c0_145 = arith.constant 0 : index
    %167 = vector.load %arg4[%c0_144, %c0_145] : memref<16x16xbf16, #tpu.memory_space<vmem>>, vector<16x16xbf16>
    %168 = arith.truncf %166 : vector<16x128xf32> to vector<16x128xbf16>
    %cst_146 = arith.constant dense<0.000000e+00> : vector<16x128xf32>
    %169 = tpu.matmul %167, %168, %cst_146 {dimension_numbers = #tpu.dot_dimension_numbers<[1], [0], [0], [1], [0, 0, 1, 1], [], []>} : vector<16x16xbf16>, vector<16x128xbf16>, vector<16x128xf32> -> vector<16x128xf32>
    %c0_147 = arith.constant 0 : index
    %c0_148 = arith.constant 0 : index
    %170 = vector.load %arg18[%c0_147, %c0_148] : memref<16x128xf32, #tpu.memory_space<vmem>>, vector<16x128xf32>
    tpu.vector_store %arg18[%c0_147, %c0_148], %169 {strides = array<i32>} : memref<16x128xf32, #tpu.memory_space<vmem>>, vector<16x128xf32>,
    return
  }
}

</mosaic_0001>

<llo_original>
// kernel: tpu_custom_call.1
$region0: #{tpu_custom_call.1}
  #allocation0 [shape = 'u32[]', space=smem, size = 0x4, offset = 0x4, fixed_abs, tag = 'smem constant byte address 0x4 - core index']
  #allocation1 [shape = 'u32[144,128]{1,0:T(1,128)}', space=vmem, size = 0x12000, scoped, tag = 'internal scratch']
  %s0 = inlined_call_operand.hbm [shape: f32[16,128], index: 0, kind: input, shape index: {}]
  %s1 = inlined_call_operand.hbm [shape: bf16[16,128], index: 1, kind: input, shape index: {}]
  %s2 = inlined_call_operand.hbm [shape: bf16[16,16], index: 2, kind: input, shape index: {}]
  %s3 = inlined_call_operand.vmem [shape: bf16[16,16], index: 3, kind: input, shape index: {}]
  %s4 = inlined_call_operand.hbm [shape: bf16[16,16], index: 4, kind: input, shape index: {}]
  %s5 = inlined_call_operand.hbm [shape: bf16[16,16], index: 5, kind: input, shape index: {}]
  %s6 = inlined_call_operand.hbm [shape: bf16[128,128], index: 6, kind: input, shape index: {}]
  %s7 = inlined_call_operand.hbm [shape: f32[1,128], index: 7, kind: input, shape index: {}]
  %s8 = inlined_call_operand.hbm [shape: bf16[128,128], index: 8, kind: input, shape index: {}]
  %s9 = inlined_call_operand.hbm [shape: f32[1,128], index: 9, kind: input, shape index: {}]
  %s10 = inlined_call_operand.hbm [shape: bf16[3,128,128], index: 10, kind: input, shape index: {}]
  %s11 = inlined_call_operand.hbm [shape: bf16[3,128,128], index: 11, kind: input, shape index: {}]
  %s12 = inlined_call_operand.hbm [shape: f32[3,1,128], index: 12, kind: input, shape index: {}]
  %s13 = inlined_call_operand.hbm [shape: bf16[3,128,128], index: 13, kind: input, shape index: {}]
  %s14 = inlined_call_operand.hbm [shape: f32[3,1,128], index: 14, kind: input, shape index: {}]
  %s15 = inlined_call_operand.vmem [shape: f32[3,16,128], index: 15, kind: input, shape index: {}]
  %s16 = inlined_call_operand.hbm [shape: bf16[6,128,128], index: 16, kind: input, shape index: {}]
  %s17 = inlined_call_operand.vmem [shape: f32[2,1,128], index: 17, kind: input, shape index: {}]
  %s18 = inlined_call_operand.hbm [shape: f32[16,128], index: 18, kind: output, shape index: {}]
  %s19 = sld [smem:[#allocation0]]
  $region142: #{tpu_custom_call.1} parent=0
    _
  %s21 = ssub.s32 1, %s19
  %s22 = scalar_select 0, %s21, %s19
  $region1: #{tpu_custom_call.1} parent=0
    #allocation2 [shape = 'u8[8192]{0}', space=vmem, size = 0x2000, scoped, tag = 'input window, operand 0, single buffered']
    #allocation3 [shape = 's32[1]{0}', space=sflag, size = 0x4, scoped, tag = 'scoped memory for tpu_custom_call.1']
    #allocation4 [shape = 's32[1]{0}', space=sflag, size = 0x4, scoped, tag = 'scoped memory for tpu_custom_call.1']
    #allocation5 [shape = 'u8[4096]{0}', space=vmem, size = 0x1000, scoped, tag = 'input window, operand 1, single buffered']
    #allocation6 [shape = 's32[1]{0}', space=sflag, size = 0x4, scoped, tag = 'scoped memory for tpu_custom_call.1']
    #allocation7 [shape = 'u8[4096]{0}', space=vmem, size = 0x1000, scoped, tag = 'input window, operand 2, single buffered']
    #allocation8 [shape = 'u8[4096]{0}', space=vmem, size = 0x1000, scoped, tag = 'input window, operand 4, single buffered']
    #allocation9 [shape = 's32[1]{0}', space=sflag, size = 0x4, scoped, tag = 'scoped memory for tpu_custom_call.1']
    #allocation10 [shape = 'u8[4096]{0}', space=vmem, size = 0x1000, scoped, tag = 'input window, operand 5, single buffered']
    #allocation11 [shape = 'u8[32768]{0}', space=vmem, size = 0x8000, scoped, tag = 'input window, operand 6, single buffered']
    #allocation12 [shape = 's32[1]{0}', space=sflag, size = 0x4, scoped, tag = 'scoped memory for tpu_custom_call.1']
    #allocation13 [shape = 'u8[512]{0}', space=vmem, size = 0x400, scoped, tag = 'input window, operand 7, single buffered']
    #allocation14 [shape = 'u8[32768]{0}', space=vmem, size = 0x8000, scoped, tag = 'input window, operand 8, single buffered']
    #allocation15 [shape = 's32[1]{0}', space=sflag, size = 0x4, scoped, tag = 'scoped memory for tpu_custom_call.1']
    #allocation16 [shape = 'u8[512]{0}', space=vmem, size = 0x400, scoped, tag = 'input window, operand 9, single buffered']
    #allocation17 [shape = 'u8[98304]{0}', space=vmem, size = 0x18000, scoped, tag = 'input window, operand 10, single buffered']
    #allocation18 [shape = 's32[1]{0}', space=sflag, size = 0x4, scoped, tag = 'scoped memory for tpu_custom_call.1']
    #allocation19 [shape = 'u8[98304]{0}', space=vmem, size = 0x18000, scoped, tag = 'input window, operand 11, single buffered']
    #allocation20 [shape = 'u8[1536]{0}', space=vmem, size = 0x800, scoped, tag = 'input window, operand 12, single buffered']
    #allocation21 [shape = 's32[1]{0}', space=sflag, size = 0x4, scoped, tag = 'scoped memory for tpu_custom_call.1']
    #allocation22 [shape = 'u8[98304]{0}', space=vmem, size = 0x18000, scoped, tag = 'input window, operand 13, single buffered']
    #allocation23 [shape = 'u8[1536]{0}', space=vmem, size = 0x800, scoped, tag = 'input window, operand 14, single buffered']
    #allocation24 [shape = 's32[1]{0}', space=sflag, size = 0x4, scoped, tag = 'scoped memory for tpu_custom_call.1']
    #allocation25 [shape = 'u8[196608]{0}', space=vmem, size = 0x30000, scoped, tag = 'input window, operand 16, single buffered']
    #allocation26 [shape = 'u8[8192]{0}', space=vmem, size = 0x2000, scoped, tag = 'output window, operand 0, single buffered']
    %23 = vsyncpa [#allocation3], 0
    %24 = vsyncpa [#allocation6], 0
    %25 = vsyncpa [#allocation9], 0
    %26 = vsyncpa [#allocation12], 0
    %27 = vsyncpa [#allocation15], 0
    %28 = vsyncpa [#allocation18], 0
    %29 = vsyncpa [#allocation21], 0
    %30 = vsyncpa [#allocation24], 0
    %31 = vsyncpa [#allocation4], 0
    // Predicated region
    $region2: #{tpu_custom_call.1} parent=1 // pred_check
      _
    $region3: #{tpu_custom_call.1} parent=1 // pred_check_branch
      %33 = sbr.rel (0) target = $region5
    $region4: #{tpu_custom_call.1} parent=1 // pred_region
      %s35 = ssub.s32 256, 256
      %36 = vsyncadd [#allocation3], %s35
      %s37 = sshll.u32 [#allocation2], 4
      %s38 = int_to_ptr.vmem [resolvable:$true] %s37
      %43 = dma.hbm_to_vmem [thread:$0]  %s0, 256, %s38, [#allocation3], 128, 128, 8
    $region5: #{tpu_custom_call.1} parent=1 // pred_fallthru
      _
    // Predicated region
    $region6: #{tpu_custom_call.1} parent=1 // pred_check
      _
    $region7: #{tpu_custom_call.1} parent=1 // pred_check_branch
      %45 = sbr.rel (0) target = $region9
    $region8: #{tpu_custom_call.1} parent=1 // pred_region
      %s47 = ssub.s32 128, 128
      %48 = vsyncadd [#allocation6], %s47
      %s49 = sshll.u32 [#allocation5], 4
      %s50 = int_to_ptr.vmem [resolvable:$true] %s49
      %55 = dma.hbm_to_vmem [thread:$0]  %s1, 128, %s50, [#allocation6], 64, 64, 4
    $region9: #{tpu_custom_call.1} parent=1 // pred_fallthru
      _
    // Predicated region
    $region10: #{tpu_custom_call.1} parent=1 // pred_check
      _
    $region11: #{tpu_custom_call.1} parent=1 // pred_check_branch
      %57 = sbr.rel (0) target = $region13
    $region12: #{tpu_custom_call.1} parent=1 // pred_region
      %s59 = ssub.s32 128, 128
      %60 = vsyncadd [#allocation6], %s59
      %s61 = sshll.u32 [#allocation7], 4
      %s62 = int_to_ptr.vmem [resolvable:$true] %s61
      %67 = dma.hbm_to_vmem [thread:$0]  %s2, 128, %s62, [#allocation6], 64, 64, 4
    $region13: #{tpu_custom_call.1} parent=1 // pred_fallthru
      _
    // Predicated region
    $region14: #{tpu_custom_call.1} parent=1 // pred_check
      _
    $region15: #{tpu_custom_call.1} parent=1 // pred_check_branch
      %69 = sbr.rel (0) target = $region17
    $region16: #{tpu_custom_call.1} parent=1 // pred_region
      _
    $region17: #{tpu_custom_call.1} parent=1 // pred_fallthru
      _
    // Predicated region
    $region18: #{tpu_custom_call.1} parent=1 // pred_check
      _
    $region19: #{tpu_custom_call.1} parent=1 // pred_check_branch
      %71 = sbr.rel (0) target = $region21
    $region20: #{tpu_custom_call.1} parent=1 // pred_region
      %s73 = ssub.s32 128, 128
      %74 = vsyncadd [#allocation9], %s73
      %s75 = sshll.u32 [#allocation8], 4
      %s76 = int_to_ptr.vmem [resolvable:$true] %s75
      %81 = dma.hbm_to_vmem [thread:$0]  %s4, 128, %s76, [#allocation9], 64, 64, 4
    $region21: #{tpu_custom_call.1} parent=1 // pred_fallthru
      _
    // Predicated region
    $region22: #{tpu_custom_call.1} parent=1 // pred_check
      _
    $region23: #{tpu_custom_call.1} parent=1 // pred_check_branch
      %83 = sbr.rel (0) target = $region25
    $region24: #{tpu_custom_call.1} parent=1 // pred_region
      %s85 = ssub.s32 128, 128
      %86 = vsyncadd [#allocation9], %s85
      %s87 = sshll.u32 [#allocation10], 4
      %s88 = int_to_ptr.vmem [resolvable:$true] %s87
      %93 = dma.hbm_to_vmem [thread:$0]  %s5, 128, %s88, [#allocation9], 64, 64, 4
    $region25: #{tpu_custom_call.1} parent=1 // pred_fallthru
      _
    // Predicated region
    $region26: #{tpu_custom_call.1} parent=1 // pred_check
      _
    $region27: #{tpu_custom_call.1} parent=1 // pred_check_branch
      %95 = sbr.rel (0) target = $region29
    $region28: #{tpu_custom_call.1} parent=1 // pred_region
      %s97 = ssub.s32 1024, 1024
      %98 = vsyncadd [#allocation12], %s97
      %s99 = sshll.u32 [#allocation11], 4
      %s100 = int_to_ptr.vmem [resolvable:$true] %s99
      %105 = dma.hbm_to_vmem [thread:$0]  %s6, 1024, %s100, [#allocation12], 64, 64, 4
    $region29: #{tpu_custom_call.1} parent=1 // pred_fallthru
      _
    // Predicated region
    $region30: #{tpu_custom_call.1} parent=1 // pred_check
      _
    $region31: #{tpu_custom_call.1} parent=1 // pred_check_branch
      %107 = sbr.rel (0) target = $region33
    $region32: #{tpu_custom_call.1} parent=1 // pred_region
      %s109 = ssub.s32 16, 16
      %110 = vsyncadd [#allocation12], %s109
      %s112 = sshll.u32 [#allocation13], 4
      %s113 = int_to_ptr.vmem [resolvable:$true] %s112
      %115 = dma.hbm_to_vmem [thread:$0]  %s7, 16, %s113, [#allocation12]
    $region33: #{tpu_custom_call.1} parent=1 // pred_fallthru
      _
    // Predicated region
    $region34: #{tpu_custom_call.1} parent=1 // pred_check
      _
    $region35: #{tpu_custom_call.1} parent=1 // pred_check_branch
      %117 = sbr.rel (0) target = $region37
    $region36: #{tpu_custom_call.1} parent=1 // pred_region
      %s119 = ssub.s32 1024, 1024
      %120 = vsyncadd [#allocation15], %s119
      %s121 = sshll.u32 [#allocation14], 4
      %s122 = int_to_ptr.vmem [resolvable:$true] %s121
      %127 = dma.hbm_to_vmem [thread:$0]  %s8, 1024, %s122, [#allocation15], 64, 64, 4
    $region37: #{tpu_custom_call.1} parent=1 // pred_fallthru
      _
    // Predicated region
    $region38: #{tpu_custom_call.1} parent=1 // pred_check
      _
    $region39: #{tpu_custom_call.1} parent=1 // pred_check_branch
      %129 = sbr.rel (0) target = $region41
    $region40: #{tpu_custom_call.1} parent=1 // pred_region
      %s131 = ssub.s32 16, 16
      %132 = vsyncadd [#allocation15], %s131
      %s134 = sshll.u32 [#allocation16], 4
      %s135 = int_to_ptr.vmem [resolvable:$true] %s134
      %137 = dma.hbm_to_vmem [thread:$0]  %s9, 16, %s135, [#allocation15]
    $region41: #{tpu_custom_call.1} parent=1 // pred_fallthru
      _
    // Predicated region
    $region42: #{tpu_custom_call.1} parent=1 // pred_check
      _
    $region43: #{tpu_custom_call.1} parent=1 // pred_check_branch
      %139 = sbr.rel (0) target = $region45
    $region44: #{tpu_custom_call.1} parent=1 // pred_region
      %s141 = ssub.s32 3072, 3072
      %142 = vsyncadd [#allocation18], %s141
      %s143 = sshll.u32 [#allocation17], 4
      %s144 = int_to_ptr.vmem [resolvable:$true] %s143
      %149 = dma.hbm_to_vmem [thread:$0]  %s10, 3072, %s144, [#allocation18], 64, 64, 4
    $region45: #{tpu_custom_call.1} parent=1 // pred_fallthru
      _
    // Predicated region
    $region46: #{tpu_custom_call.1} parent=1 // pred_check
      _
    $region47: #{tpu_custom_call.1} parent=1 // pred_check_branch
      %151 = sbr.rel (0) target = $region49
    $region48: #{tpu_custom_call.1} parent=1 // pred_region
      %s153 = ssub.s32 3072, 3072
      %154 = vsyncadd [#allocation18], %s153
      %s155 = sshll.u32 [#allocation19], 4
      %s156 = int_to_ptr.vmem [resolvable:$true] %s155
      %161 = dma.hbm_to_vmem [thread:$0]  %s11, 3072, %s156, [#allocation18], 64, 64, 4
    $region49: #{tpu_custom_call.1} parent=1 // pred_fallthru
      _
    // Predicated region
    $region50: #{tpu_custom_call.1} parent=1 // pred_check
      _
    $region51: #{tpu_custom_call.1} parent=1 // pred_check_branch
      %163 = sbr.rel (0) target = $region53
    $region52: #{tpu_custom_call.1} parent=1 // pred_region
      %s165 = ssub.s32 48, 48
      %166 = vsyncadd [#allocation21], %s165
      %s167 = sshll.u32 [#allocation20], 4
      %s168 = int_to_ptr.vmem [resolvable:$true] %s167
      %173 = dma.hbm_to_vmem [thread:$0]  %s12, 48, %s168, [#allocation21], 16, 16, 1
    $region53: #{tpu_custom_call.1} parent=1 // pred_fallthru
      _
    // Predicated region
    $region54: #{tpu_custom_call.1} parent=1 // pred_check
      _
    $region55: #{tpu_custom_call.1} parent=1 // pred_check_branch
      %175 = sbr.rel (0) target = $region57
    $region56: #{tpu_custom_call.1} parent=1 // pred_region
      %s177 = ssub.s32 3072, 3072
      %178 = vsyncadd [#allocation21], %s177
      %s179 = sshll.u32 [#allocation22], 4
      %s180 = int_to_ptr.vmem [resolvable:$true] %s179
      %185 = dma.hbm_to_vmem [thread:$0]  %s13, 3072, %s180, [#allocation21], 64, 64, 4
    $region57: #{tpu_custom_call.1} parent=1 // pred_fallthru
      _
    // Predicated region
    $region58: #{tpu_custom_call.1} parent=1 // pred_check
      _
    $region59: #{tpu_custom_call.1} parent=1 // pred_check_branch
      %187 = sbr.rel (0) target = $region61
    $region60: #{tpu_custom_call.1} parent=1 // pred_region
      %s189 = ssub.s32 48, 48
      %190 = vsyncadd [#allocation24], %s189
      %s191 = sshll.u32 [#allocation23], 4
      %s192 = int_to_ptr.vmem [resolvable:$true] %s191
      %197 = dma.hbm_to_vmem [thread:$0]  %s14, 48, %s192, [#allocation24], 16, 16, 1
    $region61: #{tpu_custom_call.1} parent=1 // pred_fallthru
      _
    // Predicated region
    $region62: #{tpu_custom_call.1} parent=1 // pred_check
      _
    $region63: #{tpu_custom_call.1} parent=1 // pred_check_branch
      %199 = sbr.rel (0) target = $region65
    $region64: #{tpu_custom_call.1} parent=1 // pred_region
      _
    $region65: #{tpu_custom_call.1} parent=1 // pred_fallthru
      _
    // Predicated region
    $region66: #{tpu_custom_call.1} parent=1 // pred_check
      _
    $region67: #{tpu_custom_call.1} parent=1 // pred_check_branch
      %201 = sbr.rel (0) target = $region69
    $region68: #{tpu_custom_call.1} parent=1 // pred_region
      %s203 = ssub.s32 6144, 6144
      %204 = vsyncadd [#allocation24], %s203
      %s205 = sshll.u32 [#allocation25], 4
      %s206 = int_to_ptr.vmem [resolvable:$true] %s205
      %211 = dma.hbm_to_vmem [thread:$0]  %s16, 6144, %s206, [#allocation24], 64, 64, 4
    $region69: #{tpu_custom_call.1} parent=1 // pred_fallthru
      _
    // Predicated region
    $region70: #{tpu_custom_call.1} parent=1 // pred_check
      _
    $region71: #{tpu_custom_call.1} parent=1 // pred_check_branch
      %213 = sbr.rel (0) target = $region73
    $region72: #{tpu_custom_call.1} parent=1 // pred_region
      _
    $region73: #{tpu_custom_call.1} parent=1 // pred_fallthru
      _
    // Predicated region
    $region74: #{tpu_custom_call.1} parent=1 // pred_check
      _
    $region75: #{tpu_custom_call.1} parent=1 // pred_check_branch
      %215 = sbr.rel (0) target = $region77
    $region76: #{tpu_custom_call.1} parent=1 // pred_region
      %216 = dma.done [#allocation3], 256
    $region77: #{tpu_custom_call.1} parent=1 // pred_fallthru
      _
    // Predicated region
    $region78: #{tpu_custom_call.1} parent=1 // pred_check
      _
    $region79: #{tpu_custom_call.1} parent=1 // pred_check_branch
      %218 = sbr.rel (0) target = $region81
    $region80: #{tpu_custom_call.1} parent=1 // pred_region
      %219 = dma.done [#allocation6], 128
    $region81: #{tpu_custom_call.1} parent=1 // pred_fallthru
      _
    // Predicated region
    $region82: #{tpu_custom_call.1} parent=1 // pred_check
      _
    $region83: #{tpu_custom_call.1} parent=1 // pred_check_branch
      %221 = sbr.rel (0) target = $region85
    $region84: #{tpu_custom_call.1} parent=1 // pred_region
      %222 = dma.done [#allocation6], 128
    $region85: #{tpu_custom_call.1} parent=1 // pred_fallthru
      _
    // Predicated region
    $region86: #{tpu_custom_call.1} parent=1 // pred_check
      _
    $region87: #{tpu_custom_call.1} parent=1 // pred_check_branch
      %224 = sbr.rel (0) target = $region89
    $region88: #{tpu_custom_call.1} parent=1 // pred_region
      %225 = dma.done [#allocation9], 128
    $region89: #{tpu_custom_call.1} parent=1 // pred_fallthru
      _
    // Predicated region
    $region90: #{tpu_custom_call.1} parent=1 // pred_check
      _
    $region91: #{tpu_custom_call.1} parent=1 // pred_check_branch
      %227 = sbr.rel (0) target = $region93
    $region92: #{tpu_custom_call.1} parent=1 // pred_region
      %228 = dma.done [#allocation9], 128
    $region93: #{tpu_custom_call.1} parent=1 // pred_fallthru
      _
    // Predicated region
    $region94: #{tpu_custom_call.1} parent=1 // pred_check
      _
    $region95: #{tpu_custom_call.1} parent=1 // pred_check_branch
      %230 = sbr.rel (0) target = $region97
    $region96: #{tpu_custom_call.1} parent=1 // pred_region
      %231 = dma.done [#allocation12], 1024
    $region97: #{tpu_custom_call.1} parent=1 // pred_fallthru
      _
    // Predicated region
    $region98: #{tpu_custom_call.1} parent=1 // pred_check
      _
    $region99: #{tpu_custom_call.1} parent=1 // pred_check_branch
      %233 = sbr.rel (0) target = $region101
    $region100: #{tpu_custom_call.1} parent=1 // pred_region
      %234 = dma.done [#allocation12], 16
    $region101: #{tpu_custom_call.1} parent=1 // pred_fallthru
      _
    // Predicated region
    $region102: #{tpu_custom_call.1} parent=1 // pred_check
      _
    $region103: #{tpu_custom_call.1} parent=1 // pred_check_branch
      %236 = sbr.rel (0) target = $region105
    $region104: #{tpu_custom_call.1} parent=1 // pred_region
      %237 = dma.done [#allocation15], 1024
    $region105: #{tpu_custom_call.1} parent=1 // pred_fallthru
      _
    // Predicated region
    $region106: #{tpu_custom_call.1} parent=1 // pred_check
      _
    $region107: #{tpu_custom_call.1} parent=1 // pred_check_branch
      %239 = sbr.rel (0) target = $region109
    $region108: #{tpu_custom_call.1} parent=1 // pred_region
      %240 = dma.done [#allocation15], 16
    $region109: #{tpu_custom_call.1} parent=1 // pred_fallthru
      _
    // Predicated region
    $region110: #{tpu_custom_call.1} parent=1 // pred_check
      _
    $region111: #{tpu_custom_call.1} parent=1 // pred_check_branch
      %242 = sbr.rel (0) target = $region113
    $region112: #{tpu_custom_call.1} parent=1 // pred_region
      %243 = dma.done [#allocation18], 3072
    $region113: #{tpu_custom_call.1} parent=1 // pred_fallthru
      _
    // Predicated region
    $region114: #{tpu_custom_call.1} parent=1 // pred_check
      _
    $region115: #{tpu_custom_call.1} parent=1 // pred_check_branch
      %245 = sbr.rel (0) target = $region117
    $region116: #{tpu_custom_call.1} parent=1 // pred_region
      %246 = dma.done [#allocation18], 3072
    $region117: #{tpu_custom_call.1} parent=1 // pred_fallthru
      _
    // Predicated region
    $region118: #{tpu_custom_call.1} parent=1 // pred_check
      _
    $region119: #{tpu_custom_call.1} parent=1 // pred_check_branch
      %248 = sbr.rel (0) target = $region121
    $region120: #{tpu_custom_call.1} parent=1 // pred_region
      %249 = dma.done [#allocation21], 48
    $region121: #{tpu_custom_call.1} parent=1 // pred_fallthru
      _
    // Predicated region
    $region122: #{tpu_custom_call.1} parent=1 // pred_check
      _
    $region123: #{tpu_custom_call.1} parent=1 // pred_check_branch
      %251 = sbr.rel (0) target = $region125
    $region124: #{tpu_custom_call.1} parent=1 // pred_region
      %252 = dma.done [#allocation21], 3072
    $region125: #{tpu_custom_call.1} parent=1 // pred_fallthru
      _
    // Predicated region
    $region126: #{tpu_custom_call.1} parent=1 // pred_check
      _
    $region127: #{tpu_custom_call.1} parent=1 // pred_check_branch
      %254 = sbr.rel (0) target = $region129
    $region128: #{tpu_custom_call.1} parent=1 // pred_region
      %255 = dma.done [#allocation24], 48
    $region129: #{tpu_custom_call.1} parent=1 // pred_fallthru
      _
    // Predicated region
    $region130: #{tpu_custom_call.1} parent=1 // pred_check
      _
    $region131: #{tpu_custom_call.1} parent=1 // pred_check_branch
      %257 = sbr.rel (0) target = $region133
    $region132: #{tpu_custom_call.1} parent=1 // pred_region
      %258 = dma.done [#allocation24], 6144
    $region133: #{tpu_custom_call.1} parent=1 // pred_fallthru
      _
    %v260 = vld [vmem:[#allocation5] sm:$0xf]
    %v261 = vld [vmem:[#allocation5 + $0x4] sm:$0xf]
    %v262 = vld [vmem:[#allocation11] sm:$0xf]
    %v263 = vld [vmem:[#allocation11 + $0x4] sm:$0xf]
    %v264 = vld [vmem:[#allocation11 + $0x8] sm:$0xf]
    %v265 = vld [vmem:[#allocation11 + $0xc] sm:$0xf]
    %v266 = vld [vmem:[#allocation11 + $0x10] sm:$0xf]
    %v267 = vld [vmem:[#allocation11 + $0x14] sm:$0xf]
    %v268 = vld [vmem:[#allocation11 + $0x18] sm:$0xf]
    %v269 = vld [vmem:[#allocation11 + $0x1c] sm:$0xf]
    %v270 = vld [vmem:[#allocation11 + $0x20] sm:$0xf]
    %v271 = vld [vmem:[#allocation11 + $0x24] sm:$0xf]
    %v272 = vld [vmem:[#allocation11 + $0x28] sm:$0xf]
    %v273 = vld [vmem:[#allocation11 + $0x2c] sm:$0xf]
    %v274 = vld [vmem:[#allocation11 + $0x30] sm:$0xf]
    %v275 = vld [vmem:[#allocation11 + $0x34] sm:$0xf]
    %v276 = vld [vmem:[#allocation11 + $0x38] sm:$0xf]
    %v277 = vld [vmem:[#allocation11 + $0x3c] sm:$0xf]
    %v278 = vld [vmem:[#allocation13] sm:$0x1]
    %v280 = vlaneseq
    %v281 = vshrl.u32 %v280, 7
    %v282 = vsub.s32 0, %v281
    %v283 = vrot.slane %v278, %v282
    %v287 = vunpack.c.l.b16 %v260
    %v288 = vunpack.c.l.b16 %v261
    %v289 = vpack.c.b16 %v288, %v287
    %v307 = vunpack.c.l.b16 %v262
    %v308 = vunpack.c.l.b16 %v263
    %v309 = vunpack.c.l.b16 %v264
    %v310 = vunpack.c.l.b16 %v265
    %v311 = vunpack.c.l.b16 %v266
    %v312 = vunpack.c.l.b16 %v267
    %v313 = vunpack.c.l.b16 %v268
    %v314 = vunpack.c.l.b16 %v269
    %v315 = vunpack.c.l.b16 %v270
    %v316 = vunpack.c.l.b16 %v271
    %v317 = vunpack.c.l.b16 %v272
    %v318 = vunpack.c.l.b16 %v273
    %v319 = vunpack.c.l.b16 %v274
    %v320 = vunpack.c.l.b16 %v275
    %v321 = vunpack.c.l.b16 %v276
    %v322 = vunpack.c.l.b16 %v277
    %v323 = vpack.c.b16 %v308, %v307
    %v324 = vpack.c.b16 %v310, %v309
    %v325 = vpack.c.b16 %v312, %v311
    %v326 = vpack.c.b16 %v314, %v313
    %v327 = vpack.c.b16 %v316, %v315
    %v328 = vpack.c.b16 %v318, %v317
    %v329 = vpack.c.b16 %v320, %v319
    %v330 = vpack.c.b16 %v322, %v321
    %339 = vmatprep.subr.bf16.mxu0 0
    %340 = vmatpush1.bf16.msra.mxu0 %v323
    %341 = vmatprep.subr.bf16.mxu0 0
    %342 = vmatpush1.bf16.msra.mxu0 %v324
    %343 = vmatprep.subr.bf16.mxu0 0
    %344 = vmatpush1.bf16.msra.mxu0 %v325
    %345 = vmatprep.subr.bf16.mxu0 0
    %346 = vmatpush1.bf16.msra.mxu0 %v326
    %347 = vmatprep.subr.bf16.mxu0 0
    %348 = vmatpush1.bf16.msra.mxu0 %v327
    %349 = vmatprep.subr.bf16.mxu0 0
    %350 = vmatpush1.bf16.msra.mxu0 %v328
    %351 = vmatprep.subr.bf16.mxu0 0
    %352 = vmatpush1.bf16.msra.mxu0 %v329
    %353 = vmatprep.subr.bf16.mxu0 0
    %354 = vmatpush1.bf16.msra.mxu0 %v330
    %355 = vmatprep.subr.bf16.mxu0 0
    %356 = vmatpush1.bf16.msra.mxu0 0
    %357 = vmatprep.subr.bf16.mxu0 0
    %358 = vmatpush1.bf16.msra.mxu0 0
    %359 = vmatprep.subr.bf16.mxu0 0
    %360 = vmatpush1.bf16.msra.mxu0 0
    %361 = vmatprep.subr.bf16.mxu0 0
    %362 = vmatpush1.bf16.msra.mxu0 0
    %363 = vmatprep.subr.bf16.mxu0 0
    %364 = vmatpush1.bf16.msra.mxu0 0
    %365 = vmatprep.subr.bf16.mxu0 0
    %366 = vmatpush1.bf16.msra.mxu0 0
    %367 = vmatprep.subr.bf16.mxu0 0
    %368 = vmatpush1.bf16.msra.mxu0 0
    %369 = vmatprep.subr.bf16.mxu0 0
    %370 = vmatpush1.bf16.msra.mxu0 0
    %371 = vmatprep.mubr.bf16.mxu0 0
    %372 = vmatmul.mubr.bf16.gmra.mrb[0].mxu0 %v289
    %v373 = vpop.f32.mrb[0].mxu0
    %v374 = vadd.f32 %v283, %v373
    %v375 = vpop.f32.mrb[0].mxu0
    %v376 = vpop.f32.mrb[0].mxu0
    %v377 = vadd.f32 %v283, %v376
    %v378 = vpop.f32.mrb[0].mxu0
    %379 = vdwg.mxu0
    %v380 = vmax.f32 %v374, 0.0
    %v381 = vmax.f32 %v377, 0.0
    %v382 = vpack.c.bf16 %v381, %v380
    %v383 = vld [vmem:[#allocation14] sm:$0xf]
    %v384 = vld [vmem:[#allocation14 + $0x4] sm:$0xf]
    %v385 = vld [vmem:[#allocation14 + $0x8] sm:$0xf]
    %v386 = vld [vmem:[#allocation14 + $0xc] sm:$0xf]
    %v387 = vld [vmem:[#allocation14 + $0x10] sm:$0xf]
    %v388 = vld [vmem:[#allocation14 + $0x14] sm:$0xf]
    %v389 = vld [vmem:[#allocation14 + $0x18] sm:$0xf]
    %v390 = vld [vmem:[#allocation14 + $0x1c] sm:$0xf]
    %v391 = vld [vmem:[#allocation14 + $0x20] sm:$0xf]
    %v392 = vld [vmem:[#allocation14 + $0x24] sm:$0xf]
    %v393 = vld [vmem:[#allocation14 + $0x28] sm:$0xf]
    %v394 = vld [vmem:[#allocation14 + $0x2c] sm:$0xf]
    %v395 = vld [vmem:[#allocation14 + $0x30] sm:$0xf]
    %v396 = vld [vmem:[#allocation14 + $0x34] sm:$0xf]
    %v397 = vld [vmem:[#allocation14 + $0x38] sm:$0xf]
    %v398 = vld [vmem:[#allocation14 + $0x3c] sm:$0xf]
    %v399 = vld [vmem:[#allocation16] sm:$0x1]
    %v401 = vlaneseq
    %v402 = vshrl.u32 %v401, 7
    %v403 = vsub.s32 0, %v402
    %v404 = vrot.slane %v399, %v403
    %v422 = vunpack.c.l.b16 %v383
    %v423 = vunpack.c.l.b16 %v384
    %v424 = vunpack.c.l.b16 %v385
    %v425 = vunpack.c.l.b16 %v386
    %v426 = vunpack.c.l.b16 %v387
    %v427 = vunpack.c.l.b16 %v388
    %v428 = vunpack.c.l.b16 %v389
    %v429 = vunpack.c.l.b16 %v390
    %v430 = vunpack.c.l.b16 %v391
    %v431 = vunpack.c.l.b16 %v392
    %v432 = vunpack.c.l.b16 %v393
    %v433 = vunpack.c.l.b16 %v394
    %v434 = vunpack.c.l.b16 %v395
    %v435 = vunpack.c.l.b16 %v396
    %v436 = vunpack.c.l.b16 %v397
    %v437 = vunpack.c.l.b16 %v398
    %v438 = vpack.c.b16 %v423, %v422
    %v439 = vpack.c.b16 %v425, %v424
    %v440 = vpack.c.b16 %v427, %v426
    %v441 = vpack.c.b16 %v429, %v428
    %v442 = vpack.c.b16 %v431, %v430
    %v443 = vpack.c.b16 %v433, %v432
    %v444 = vpack.c.b16 %v435, %v434
    %v445 = vpack.c.b16 %v437, %v436
    %454 = vmatprep.subr.bf16.mxu0 0
    %455 = vmatpush1.bf16.msra.mxu0 %v438
    %456 = vmatprep.subr.bf16.mxu0 0
    %457 = vmatpush1.bf16.msra.mxu0 %v439
    %458 = vmatprep.subr.bf16.mxu0 0
    %459 = vmatpush1.bf16.msra.mxu0 %v440
    %460 = vmatprep.subr.bf16.mxu0 0
    %461 = vmatpush1.bf16.msra.mxu0 %v441
    %462 = vmatprep.subr.bf16.mxu0 0
    %463 = vmatpush1.bf16.msra.mxu0 %v442
    %464 = vmatprep.subr.bf16.mxu0 0
    %465 = vmatpush1.bf16.msra.mxu0 %v443
    %466 = vmatprep.subr.bf16.mxu0 0
    %467 = vmatpush1.bf16.msra.mxu0 %v444
    %468 = vmatprep.subr.bf16.mxu0 0
    %469 = vmatpush1.bf16.msra.mxu0 %v445
    %470 = vmatprep.subr.bf16.mxu0 0
    %471 = vmatpush1.bf16.msra.mxu0 0
    %472 = vmatprep.subr.bf16.mxu0 0
    %473 = vmatpush1.bf16.msra.mxu0 0
    %474 = vmatprep.subr.bf16.mxu0 0
    %475 = vmatpush1.bf16.msra.mxu0 0
    %476 = vmatprep.subr.bf16.mxu0 0
    %477 = vmatpush1.bf16.msra.mxu0 0
    %478 = vmatprep.subr.bf16.mxu0 0
    %479 = vmatpush1.bf16.msra.mxu0 0
    %480 = vmatprep.subr.bf16.mxu0 0
    %481 = vmatpush1.bf16.msra.mxu0 0
    %482 = vmatprep.subr.bf16.mxu0 0
    %483 = vmatpush1.bf16.msra.mxu0 0
    %484 = vmatprep.subr.bf16.mxu0 0
    %485 = vmatpush1.bf16.msra.mxu0 0
    %486 = vmatprep.mubr.bf16.mxu0 0
    %487 = vmatmul.mubr.bf16.gmra.mrb[0].mxu0 %v382
    %v488 = vpop.f32.mrb[0].mxu0
    %v489 = vadd.f32 %v404, %v488
    %v490 = vpop.f32.mrb[0].mxu0
    %v491 = vpop.f32.mrb[0].mxu0
    %v492 = vadd.f32 %v404, %v491
    %v493 = vpop.f32.mrb[0].mxu0
    %494 = vdwg.mxu0
    %v495 = vld [vmem:[#allocation2] sm:$0xff]
    %v496 = vld [vmem:[#allocation2 + $0x8] sm:$0xff]
    %v497 = vadd.f32 %v489, %v495
    %v498 = vadd.f32 %v492, %v496
    %v499 = vpack.c.bf16 %v498, %v497
    %v500 = vld [vmem:[%s3] sm:$0xf]
    %v501 = vld [vmem:[%s3 + $0x4] sm:$0xf]
    %v504 = vunpack.c.l.b16 %v500
    %v505 = vunpack.c.l.b16 %v501
    %v506 = vpack.c.b16 %v505, %v504
    %vm507 = vcmask 130048
    %v509 = vsel %vm507, %v506, 0
    %511 = vmatprep.subr.bf16.mxu0 0
    %512 = vmatpush1.bf16.msra.mxu0 %v499
    %513 = vmatprep.subr.bf16.mxu0 0
    %514 = vmatpush1.bf16.msra.mxu0 0
    %515 = vmatprep.subr.bf16.mxu0 0
    %516 = vmatpush1.bf16.msra.mxu0 0
    %517 = vmatprep.subr.bf16.mxu0 0
    %518 = vmatpush1.bf16.msra.mxu0 0
    %519 = vmatprep.subr.bf16.mxu0 0
    %520 = vmatpush1.bf16.msra.mxu0 0
    %521 = vmatprep.subr.bf16.mxu0 0
    %522 = vmatpush1.bf16.msra.mxu0 0
    %523 = vmatprep.subr.bf16.mxu0 0
    %524 = vmatpush1.bf16.msra.mxu0 0
    %525 = vmatprep.subr.bf16.mxu0 0
    %526 = vmatpush1.bf16.msra.mxu0 0
    %527 = vmatprep.subr.bf16.mxu0 0
    %528 = vmatpush1.bf16.msra.mxu0 0
    %529 = vmatprep.subr.bf16.mxu0 0
    %530 = vmatpush1.bf16.msra.mxu0 0
    %531 = vmatprep.subr.bf16.mxu0 0
    %532 = vmatpush1.bf16.msra.mxu0 0
    %533 = vmatprep.subr.bf16.mxu0 0
    %534 = vmatpush1.bf16.msra.mxu0 0
    %535 = vmatprep.subr.bf16.mxu0 0
    %536 = vmatpush1.bf16.msra.mxu0 0
    %537 = vmatprep.subr.bf16.mxu0 0
    %538 = vmatpush1.bf16.msra.mxu0 0
    %539 = vmatprep.subr.bf16.mxu0 0
    %540 = vmatpush1.bf16.msra.mxu0 0
    %541 = vmatprep.subr.bf16.mxu0 0
    %542 = vmatpush1.bf16.msra.mxu0 0
    %543 = vmatprep.mubr.bf16.mxu0 0
    %544 = vmatmul.mubr.bf16.gmra.mrb[0].mxu0 %v509
    %v545 = vpop.f32.mrb[0].mxu0
    %v546 = vadd.f32 0.0, %v545
    %v547 = vpop.f32.mrb[0].mxu0
    %v548 = vpop.f32.mrb[0].mxu0
    %v549 = vadd.f32 0.0, %v548
    %v550 = vpop.f32.mrb[0].mxu0
    %551 = vdwg.mxu0
    %v552 = vld [vmem:[#allocation7] sm:$0xf]
    %v553 = vld [vmem:[#allocation7 + $0x4] sm:$0xf]
    %v556 = vunpack.c.l.b16 %v552
    %v557 = vunpack.c.l.b16 %v553
    %v558 = vpack.c.b16 %v557, %v556
    %v560 = vsel %vm507, %v558, 0
    %562 = vmatprep.subr.bf16.mxu0 0
    %563 = vmatpush1.bf16.msra.mxu0 %v499
    %564 = vmatprep.subr.bf16.mxu0 0
    %565 = vmatpush1.bf16.msra.mxu0 0
    %566 = vmatprep.subr.bf16.mxu0 0
    %567 = vmatpush1.bf16.msra.mxu0 0
    %568 = vmatprep.subr.bf16.mxu0 0
    %569 = vmatpush1.bf16.msra.mxu0 0
    %570 = vmatprep.subr.bf16.mxu0 0
    %571 = vmatpush1.bf16.msra.mxu0 0
    %572 = vmatprep.subr.bf16.mxu0 0
    %573 = vmatpush1.bf16.msra.mxu0 0
    %574 = vmatprep.subr.bf16.mxu0 0
    %575 = vmatpush1.bf16.msra.mxu0 0
    %576 = vmatprep.subr.bf16.mxu0 0
    %577 = vmatpush1.bf16.msra.mxu0 0
    %578 = vmatprep.subr.bf16.mxu0 0
    %579 = vmatpush1.bf16.msra.mxu0 0
    %580 = vmatprep.subr.bf16.mxu0 0
    %581 = vmatpush1.bf16.msra.mxu0 0
    %582 = vmatprep.subr.bf16.mxu0 0
    %583 = vmatpush1.bf16.msra.mxu0 0
    %584 = vmatprep.subr.bf16.mxu0 0
    %585 = vmatpush1.bf16.msra.mxu0 0
    %586 = vmatprep.subr.bf16.mxu0 0
    %587 = vmatpush1.bf16.msra.mxu0 0
    %588 = vmatprep.subr.bf16.mxu0 0
    %589 = vmatpush1.bf16.msra.mxu0 0
    %590 = vmatprep.subr.bf16.mxu0 0
    %591 = vmatpush1.bf16.msra.mxu0 0
    %592 = vmatprep.subr.bf16.mxu0 0
    %593 = vmatpush1.bf16.msra.mxu0 0
    %594 = vmatprep.mubr.bf16.mxu0 0
    %595 = vmatmul.mubr.bf16.gmra.mrb[0].mxu0 %v560
    %v596 = vpop.f32.mrb[0].mxu0
    %v597 = vadd.f32 0.0, %v596
    %v598 = vpop.f32.mrb[0].mxu0
    %v599 = vpop.f32.mrb[0].mxu0
    %v600 = vadd.f32 0.0, %v599
    %v601 = vpop.f32.mrb[0].mxu0
    %602 = vdwg.mxu0
    %v603 = vpack.c.bf16 %v549, %v546
    %v604 = vld [vmem:[#allocation17] sm:$0xf]
    %v605 = vld [vmem:[#allocation17 + $0x4] sm:$0xf]
    %v606 = vld [vmem:[#allocation17 + $0x8] sm:$0xf]
    %v607 = vld [vmem:[#allocation17 + $0xc] sm:$0xf]
    %v608 = vld [vmem:[#allocation17 + $0x10] sm:$0xf]
    %v609 = vld [vmem:[#allocation17 + $0x14] sm:$0xf]
    %v610 = vld [vmem:[#allocation17 + $0x18] sm:$0xf]
    %v611 = vld [vmem:[#allocation17 + $0x1c] sm:$0xf]
    %v612 = vld [vmem:[#allocation17 + $0x20] sm:$0xf]
    %v613 = vld [vmem:[#allocation17 + $0x24] sm:$0xf]
    %v614 = vld [vmem:[#allocation17 + $0x28] sm:$0xf]
    %v615 = vld [vmem:[#allocation17 + $0x2c] sm:$0xf]
    %v616 = vld [vmem:[#allocation17 + $0x30] sm:$0xf]
    %v617 = vld [vmem:[#allocation17 + $0x34] sm:$0xf]
    %v618 = vld [vmem:[#allocation17 + $0x38] sm:$0xf]
    %v619 = vld [vmem:[#allocation17 + $0x3c] sm:$0xf]
    %v620 = vpack.c.bf16 %v600, %v597
    %v621 = vld [vmem:[#allocation19] sm:$0xf]
    %v622 = vld [vmem:[#allocation19 + $0x4] sm:$0xf]
    %v623 = vld [vmem:[#allocation19 + $0x8] sm:$0xf]
    %v624 = vld [vmem:[#allocation19 + $0xc] sm:$0xf]
    %v625 = vld [vmem:[#allocation19 + $0x10] sm:$0xf]
    %v626 = vld [vmem:[#allocation19 + $0x14] sm:$0xf]
    %v627 = vld [vmem:[#allocation19 + $0x18] sm:$0xf]
    %v628 = vld [vmem:[#allocation19 + $0x1c] sm:$0xf]
    %v629 = vld [vmem:[#allocation19 + $0x20] sm:$0xf]
    %v630 = vld [vmem:[#allocation19 + $0x24] sm:$0xf]
    %v631 = vld [vmem:[#allocation19 + $0x28] sm:$0xf]
    %v632 = vld [vmem:[#allocation19 + $0x2c] sm:$0xf]
    %v633 = vld [vmem:[#allocation19 + $0x30] sm:$0xf]
    %v634 = vld [vmem:[#allocation19 + $0x34] sm:$0xf]
    %v635 = vld [vmem:[#allocation19 + $0x38] sm:$0xf]
    %v636 = vld [vmem:[#allocation19 + $0x3c] sm:$0xf]
    %v653 = vunpack.c.l.b16 %v621
    %v654 = vunpack.c.l.b16 %v622
    %v655 = vunpack.c.l.b16 %v623
    %v656 = vunpack.c.l.b16 %v624
    %v657 = vunpack.c.l.b16 %v625
    %v658 = vunpack.c.l.b16 %v626
    %v659 = vunpack.c.l.b16 %v627
    %v660 = vunpack.c.l.b16 %v628
    %v661 = vunpack.c.l.b16 %v629
    %v662 = vunpack.c.l.b16 %v630
    %v663 = vunpack.c.l.b16 %v631
    %v664 = vunpack.c.l.b16 %v632
    %v665 = vunpack.c.l.b16 %v633
    %v666 = vunpack.c.l.b16 %v634
    %v667 = vunpack.c.l.b16 %v635
    %v668 = vunpack.c.l.b16 %v636
    %v669 = vpack.c.b16 %v654, %v653
    %v670 = vpack.c.b16 %v656, %v655
    %v671 = vpack.c.b16 %v658, %v657
    %v672 = vpack.c.b16 %v660, %v659
    %v673 = vpack.c.b16 %v662, %v661
    %v674 = vpack.c.b16 %v664, %v663
    %v675 = vpack.c.b16 %v666, %v665
    %v676 = vpack.c.b16 %v668, %v667
    %685 = vmatprep.subr.bf16.mxu0 0
    %686 = vmatpush1.bf16.msra.mxu0 %v669
    %687 = vmatprep.subr.bf16.mxu0 0
    %688 = vmatpush1.bf16.msra.mxu0 %v670
    %689 = vmatprep.subr.bf16.mxu0 0
    %690 = vmatpush1.bf16.msra.mxu0 %v671
    %691 = vmatprep.subr.bf16.mxu0 0
    %692 = vmatpush1.bf16.msra.mxu0 %v672
    %693 = vmatprep.subr.bf16.mxu0 0
    %694 = vmatpush1.bf16.msra.mxu0 %v673
    %695 = vmatprep.subr.bf16.mxu0 0
    %696 = vmatpush1.bf16.msra.mxu0 %v674
    %697 = vmatprep.subr.bf16.mxu0 0
    %698 = vmatpush1.bf16.msra.mxu0 %v675
    %699 = vmatprep.subr.bf16.mxu0 0
    %700 = vmatpush1.bf16.msra.mxu0 %v676
    %701 = vmatprep.subr.bf16.mxu0 0
    %702 = vmatpush1.bf16.msra.mxu0 0
    %703 = vmatprep.subr.bf16.mxu0 0
    %704 = vmatpush1.bf16.msra.mxu0 0
    %705 = vmatprep.subr.bf16.mxu0 0
    %706 = vmatpush1.bf16.msra.mxu0 0
    %707 = vmatprep.subr.bf16.mxu0 0
    %708 = vmatpush1.bf16.msra.mxu0 0
    %709 = vmatprep.subr.bf16.mxu0 0
    %710 = vmatpush1.bf16.msra.mxu0 0
    %711 = vmatprep.subr.bf16.mxu0 0
    %712 = vmatpush1.bf16.msra.mxu0 0
    %713 = vmatprep.subr.bf16.mxu0 0
    %714 = vmatpush1.bf16.msra.mxu0 0
    %715 = vmatprep.subr.bf16.mxu0 0
    %716 = vmatpush1.bf16.msra.mxu0 0
    %717 = vmatprep.mubr.bf16.mxu0 0
    %718 = vmatmul.mubr.bf16.gmra.mrb[0].mxu0 %v620
    %v719 = vpop.f32.mrb[0].mxu0
    %v720 = vadd.f32 0.0, %v719
    %v721 = vpop.f32.mrb[0].mxu0
    %v722 = vpop.f32.mrb[0].mxu0
    %v723 = vadd.f32 0.0, %v722
    %v724 = vpop.f32.mrb[0].mxu0
    %725 = vdwg.mxu0
    %v742 = vunpack.c.l.b16 %v604
    %v743 = vunpack.c.l.b16 %v605
    %v744 = vunpack.c.l.b16 %v606
    %v745 = vunpack.c.l.b16 %v607
    %v746 = vunpack.c.l.b16 %v608
    %v747 = vunpack.c.l.b16 %v609
    %v748 = vunpack.c.l.b16 %v610
    %v749 = vunpack.c.l.b16 %v611
    %v750 = vunpack.c.l.b16 %v612
    %v751 = vunpack.c.l.b16 %v613
    %v752 = vunpack.c.l.b16 %v614
    %v753 = vunpack.c.l.b16 %v615
    %v754 = vunpack.c.l.b16 %v616
    %v755 = vunpack.c.l.b16 %v617
    %v756 = vunpack.c.l.b16 %v618
    %v757 = vunpack.c.l.b16 %v619
    %v758 = vpack.c.b16 %v743, %v742
    %v759 = vpack.c.b16 %v745, %v744
    %v760 = vpack.c.b16 %v747, %v746
    %v761 = vpack.c.b16 %v749, %v748
    %v762 = vpack.c.b16 %v751, %v750
    %v763 = vpack.c.b16 %v753, %v752
    %v764 = vpack.c.b16 %v755, %v754
    %v765 = vpack.c.b16 %v757, %v756
    %774 = vmatprep.subr.bf16.mxu0 0
    %775 = vmatpush1.bf16.msra.mxu0 %v758
    %776 = vmatprep.subr.bf16.mxu0 0
    %777 = vmatpush1.bf16.msra.mxu0 %v759
    %778 = vmatprep.subr.bf16.mxu0 0
    %779 = vmatpush1.bf16.msra.mxu0 %v760
    %780 = vmatprep.subr.bf16.mxu0 0
    %781 = vmatpush1.bf16.msra.mxu0 %v761
    %782 = vmatprep.subr.bf16.mxu0 0
    %783 = vmatpush1.bf16.msra.mxu0 %v762
    %784 = vmatprep.subr.bf16.mxu0 0
    %785 = vmatpush1.bf16.msra.mxu0 %v763
    %786 = vmatprep.subr.bf16.mxu0 0
    %787 = vmatpush1.bf16.msra.mxu0 %v764
    %788 = vmatprep.subr.bf16.mxu0 0
    %789 = vmatpush1.bf16.msra.mxu0 %v765
    %790 = vmatprep.subr.bf16.mxu0 0
    %791 = vmatpush1.bf16.msra.mxu0 0
    %792 = vmatprep.subr.bf16.mxu0 0
    %793 = vmatpush1.bf16.msra.mxu0 0
    %794 = vmatprep.subr.bf16.mxu0 0
    %795 = vmatpush1.bf16.msra.mxu0 0
    %796 = vmatprep.subr.bf16.mxu0 0
    %797 = vmatpush1.bf16.msra.mxu0 0
    %798 = vmatprep.subr.bf16.mxu0 0
    %799 = vmatpush1.bf16.msra.mxu0 0
    %800 = vmatprep.subr.bf16.mxu0 0
    %801 = vmatpush1.bf16.msra.mxu0 0
    %802 = vmatprep.subr.bf16.mxu0 0
    %803 = vmatpush1.bf16.msra.mxu0 0
    %804 = vmatprep.subr.bf16.mxu0 0
    %805 = vmatpush1.bf16.msra.mxu0 0
    %806 = vmatprep.mubr.bf16.mxu0 0
    %807 = vmatmul.mubr.bf16.gmra.mrb[0].mxu0 %v603
    %v808 = vpop.f32.mrb[0].mxu0
    %v809 = vadd.f32 %v720, %v808
    %v810 = vpop.f32.mrb[0].mxu0
    %v811 = vpop.f32.mrb[0].mxu0
    %v812 = vadd.f32 %v723, %v811
    %v813 = vpop.f32.mrb[0].mxu0
    %814 = vdwg.mxu0
    %v815 = vld [vmem:[%s15] sm:$0xff]
    %v816 = vld [vmem:[%s15 + $0x8] sm:$0xff]
    %v817 = vadd.f32 %v809, %v815
    %v818 = vadd.f32 %v812, %v816
    %v819 = vld [vmem:[#allocation20] sm:$0x1]
    %v821 = vlaneseq
    %v822 = vshrl.u32 %v821, 7
    %v823 = vsub.s32 0, %v822
    %v824 = vrot.slane %v819, %v823
    %v826 = vadd.f32 %v817, %v824
    %v827 = vadd.f32 %v818, %v824
    %v828 = vmax.f32 %v826, 0.0
    %v829 = vmax.f32 %v827, 0.0
    %v830 = vpack.c.bf16 %v829, %v828
    %v831 = vld [vmem:[#allocation22] sm:$0xf]
    %v832 = vld [vmem:[#allocation22 + $0x4] sm:$0xf]
    %v833 = vld [vmem:[#allocation22 + $0x8] sm:$0xf]
    %v834 = vld [vmem:[#allocation22 + $0xc] sm:$0xf]
    %v835 = vld [vmem:[#allocation22 + $0x10] sm:$0xf]
    %v836 = vld [vmem:[#allocation22 + $0x14] sm:$0xf]
    %v837 = vld [vmem:[#allocation22 + $0x18] sm:$0xf]
    %v838 = vld [vmem:[#allocation22 + $0x1c] sm:$0xf]
    %v839 = vld [vmem:[#allocation22 + $0x20] sm:$0xf]
    %v840 = vld [vmem:[#allocation22 + $0x24] sm:$0xf]
    %v841 = vld [vmem:[#allocation22 + $0x28] sm:$0xf]
    %v842 = vld [vmem:[#allocation22 + $0x2c] sm:$0xf]
    %v843 = vld [vmem:[#allocation22 + $0x30] sm:$0xf]
    %v844 = vld [vmem:[#allocation22 + $0x34] sm:$0xf]
    %v845 = vld [vmem:[#allocation22 + $0x38] sm:$0xf]
    %v846 = vld [vmem:[#allocation22 + $0x3c] sm:$0xf]
    %v847 = vld [vmem:[#allocation23] sm:$0x1]
    %v849 = vlaneseq
    %v850 = vshrl.u32 %v849, 7
    %v851 = vsub.s32 0, %v850
    %v852 = vrot.slane %v847, %v851
    %v870 = vunpack.c.l.b16 %v831
    %v871 = vunpack.c.l.b16 %v832
    %v872 = vunpack.c.l.b16 %v833
    %v873 = vunpack.c.l.b16 %v834
    %v874 = vunpack.c.l.b16 %v835
    %v875 = vunpack.c.l.b16 %v836
    %v876 = vunpack.c.l.b16 %v837
    %v877 = vunpack.c.l.b16 %v838
    %v878 = vunpack.c.l.b16 %v839
    %v879 = vunpack.c.l.b16 %v840
    %v880 = vunpack.c.l.b16 %v841
    %v881 = vunpack.c.l.b16 %v842
    %v882 = vunpack.c.l.b16 %v843
    %v883 = vunpack.c.l.b16 %v844
    %v884 = vunpack.c.l.b16 %v845
    %v885 = vunpack.c.l.b16 %v846
    %v886 = vpack.c.b16 %v871, %v870
    %v887 = vpack.c.b16 %v873, %v872
    %v888 = vpack.c.b16 %v875, %v874
    %v889 = vpack.c.b16 %v877, %v876
    %v890 = vpack.c.b16 %v879, %v878
    %v891 = vpack.c.b16 %v881, %v880
    %v892 = vpack.c.b16 %v883, %v882
    %v893 = vpack.c.b16 %v885, %v884
    %902 = vmatprep.subr.bf16.mxu0 0
    %903 = vmatpush1.bf16.msra.mxu0 %v886
    %904 = vmatprep.subr.bf16.mxu0 0
    %905 = vmatpush1.bf16.msra.mxu0 %v887
    %906 = vmatprep.subr.bf16.mxu0 0
    %907 = vmatpush1.bf16.msra.mxu0 %v888
    %908 = vmatprep.subr.bf16.mxu0 0
    %909 = vmatpush1.bf16.msra.mxu0 %v889
    %910 = vmatprep.subr.bf16.mxu0 0
    %911 = vmatpush1.bf16.msra.mxu0 %v890
    %912 = vmatprep.subr.bf16.mxu0 0
    %913 = vmatpush1.bf16.msra.mxu0 %v891
    %914 = vmatprep.subr.bf16.mxu0 0
    %915 = vmatpush1.bf16.msra.mxu0 %v892
    %916 = vmatprep.subr.bf16.mxu0 0
    %917 = vmatpush1.bf16.msra.mxu0 %v893
    %918 = vmatprep.subr.bf16.mxu0 0
    %919 = vmatpush1.bf16.msra.mxu0 0
    %920 = vmatprep.subr.bf16.mxu0 0
    %921 = vmatpush1.bf16.msra.mxu0 0
    %922 = vmatprep.subr.bf16.mxu0 0
    %923 = vmatpush1.bf16.msra.mxu0 0
    %924 = vmatprep.subr.bf16.mxu0 0
    %925 = vmatpush1.bf16.msra.mxu0 0
    %926 = vmatprep.subr.bf16.mxu0 0
    %927 = vmatpush1.bf16.msra.mxu0 0
    %928 = vmatprep.subr.bf16.mxu0 0
    %929 = vmatpush1.bf16.msra.mxu0 0
    %930 = vmatprep.subr.bf16.mxu0 0
    %931 = vmatpush1.bf16.msra.mxu0 0
    %932 = vmatprep.subr.bf16.mxu0 0
    %933 = vmatpush1.bf16.msra.mxu0 0
    %934 = vmatprep.mubr.bf16.mxu0 0
    %935 = vmatmul.mubr.bf16.gmra.mrb[0].mxu0 %v830
    %v936 = vpop.f32.mrb[0].mxu0
    %v937 = vadd.f32 %v852, %v936
    %v938 = vpop.f32.mrb[0].mxu0
    %v939 = vpop.f32.mrb[0].mxu0
    %v940 = vadd.f32 %v852, %v939
    %v941 = vpop.f32.mrb[0].mxu0
    %942 = vdwg.mxu0
    %v943 = vld [vmem:[#allocation8] sm:$0xf]
    %v944 = vld [vmem:[#allocation8 + $0x4] sm:$0xf]
    %v945 = vpack.c.bf16 %v940, %v937
    %v948 = vunpack.c.l.b16 %v943
    %v949 = vunpack.c.l.b16 %v944
    %v950 = vpack.c.b16 %v949, %v948
    %v952 = vsel %vm507, %v950, 0
    %954 = vmatprep.subr.bf16.mxu0 0
    %955 = vmatpush1.bf16.msra.mxu0 %v945
    %956 = vmatprep.subr.bf16.mxu0 0
    %957 = vmatpush1.bf16.msra.mxu0 0
    %958 = vmatprep.subr.bf16.mxu0 0
    %959 = vmatpush1.bf16.msra.mxu0 0
    %960 = vmatprep.subr.bf16.mxu0 0
    %961 = vmatpush1.bf16.msra.mxu0 0
    %962 = vmatprep.subr.bf16.mxu0 0
    %963 = vmatpush1.bf16.msra.mxu0 0
    %964 = vmatprep.subr.bf16.mxu0 0
    %965 = vmatpush1.bf16.msra.mxu0 0
    %966 = vmatprep.subr.bf16.mxu0 0
    %967 = vmatpush1.bf16.msra.mxu0 0
    %968 = vmatprep.subr.bf16.mxu0 0
    %969 = vmatpush1.bf16.msra.mxu0 0
    %970 = vmatprep.subr.bf16.mxu0 0
    %971 = vmatpush1.bf16.msra.mxu0 0
    %972 = vmatprep.subr.bf16.mxu0 0
    %973 = vmatpush1.bf16.msra.mxu0 0
    %974 = vmatprep.subr.bf16.mxu0 0
    %975 = vmatpush1.bf16.msra.mxu0 0
    %976 = vmatprep.subr.bf16.mxu0 0
    %977 = vmatpush1.bf16.msra.mxu0 0
    %978 = vmatprep.subr.bf16.mxu0 0
    %979 = vmatpush1.bf16.msra.mxu0 0
    %980 = vmatprep.subr.bf16.mxu0 0
    %981 = vmatpush1.bf16.msra.mxu0 0
    %982 = vmatprep.subr.bf16.mxu0 0
    %983 = vmatpush1.bf16.msra.mxu0 0
    %984 = vmatprep.subr.bf16.mxu0 0
    %985 = vmatpush1.bf16.msra.mxu0 0
    %986 = vmatprep.mubr.bf16.mxu0 0
    %987 = vmatmul.mubr.bf16.gmra.mrb[0].mxu0 %v952
    %v988 = vpop.f32.mrb[0].mxu0
    %v989 = vadd.f32 0.0, %v988
    %v990 = vpop.f32.mrb[0].mxu0
    %v991 = vpop.f32.mrb[0].mxu0
    %v992 = vadd.f32 0.0, %v991
    %v993 = vpop.f32.mrb[0].mxu0
    %994 = vdwg.mxu0
    %v995 = vmax.f32 %v989, 0.0
    %v996 = vmax.f32 %v992, 0.0
    %v997 = vpack.c.bf16 %v996, %v995
    %v998 = vld [vmem:[#allocation25] sm:$0xf]
    %v999 = vld [vmem:[#allocation25 + $0x4] sm:$0xf]
    %v1000 = vld [vmem:[#allocation25 + $0x8] sm:$0xf]
    %v1001 = vld [vmem:[#allocation25 + $0xc] sm:$0xf]
    %v1002 = vld [vmem:[#allocation25 + $0x10] sm:$0xf]
    %v1003 = vld [vmem:[#allocation25 + $0x14] sm:$0xf]
    %v1004 = vld [vmem:[#allocation25 + $0x18] sm:$0xf]
    %v1005 = vld [vmem:[#allocation25 + $0x1c] sm:$0xf]
    %v1006 = vld [vmem:[#allocation25 + $0x20] sm:$0xf]
    %v1007 = vld [vmem:[#allocation25 + $0x24] sm:$0xf]
    %v1008 = vld [vmem:[#allocation25 + $0x28] sm:$0xf]
    %v1009 = vld [vmem:[#allocation25 + $0x2c] sm:$0xf]
    %v1010 = vld [vmem:[#allocation25 + $0x30] sm:$0xf]
    %v1011 = vld [vmem:[#allocation25 + $0x34] sm:$0xf]
    %v1012 = vld [vmem:[#allocation25 + $0x38] sm:$0xf]
    %v1013 = vld [vmem:[#allocation25 + $0x3c] sm:$0xf]
    %v1014 = vld [vmem:[#allocation10] sm:$0xf]
    %v1015 = vld [vmem:[#allocation10 + $0x4] sm:$0xf]
    %v1018 = vunpack.c.l.b16 %v1014
    %v1019 = vunpack.c.l.b16 %v1015
    %v1020 = vpack.c.b16 %v1019, %v1018
    %v1022 = vsel %vm507, %v1020, 0
    %1024 = vmatprep.subr.bf16.mxu0 0
    %1025 = vmatpush1.bf16.msra.mxu0 %v997
    %1026 = vmatprep.subr.bf16.mxu0 0
    %1027 = vmatpush1.bf16.msra.mxu0 0
    %1028 = vmatprep.subr.bf16.mxu0 0
    %1029 = vmatpush1.bf16.msra.mxu0 0
    %1030 = vmatprep.subr.bf16.mxu0 0
    %1031 = vmatpush1.bf16.msra.mxu0 0
    %1032 = vmatprep.subr.bf16.mxu0 0
    %1033 = vmatpush1.bf16.msra.mxu0 0
    %1034 = vmatprep.subr.bf16.mxu0 0
    %1035 = vmatpush1.bf16.msra.mxu0 0
    %1036 = vmatprep.subr.bf16.mxu0 0
    %1037 = vmatpush1.bf16.msra.mxu0 0
    %1038 = vmatprep.subr.bf16.mxu0 0
    %1039 = vmatpush1.bf16.msra.mxu0 0
    %1040 = vmatprep.subr.bf16.mxu0 0
    %1041 = vmatpush1.bf16.msra.mxu0 0
    %1042 = vmatprep.subr.bf16.mxu0 0
    %1043 = vmatpush1.bf16.msra.mxu0 0
    %1044 = vmatprep.subr.bf16.mxu0 0
    %1045 = vmatpush1.bf16.msra.mxu0 0
    %1046 = vmatprep.subr.bf16.mxu0 0
    %1047 = vmatpush1.bf16.msra.mxu0 0
    %1048 = vmatprep.subr.bf16.mxu0 0
    %1049 = vmatpush1.bf16.msra.mxu0 0
    %1050 = vmatprep.subr.bf16.mxu0 0
    %1051 = vmatpush1.bf16.msra.mxu0 0
    %1052 = vmatprep.subr.bf16.mxu0 0
    %1053 = vmatpush1.bf16.msra.mxu0 0
    %1054 = vmatprep.subr.bf16.mxu0 0
    %1055 = vmatpush1.bf16.msra.mxu0 0
    %1056 = vmatprep.mubr.bf16.mxu0 0
    %1057 = vmatmul.mubr.bf16.gmra.mrb[0].mxu0 %v1022
    %v1058 = vpop.f32.mrb[0].mxu0
    %v1059 = vadd.f32 0.0, %v1058
    %v1060 = vpop.f32.mrb[0].mxu0
    %v1061 = vpop.f32.mrb[0].mxu0
    %v1062 = vadd.f32 0.0, %v1061
    %v1063 = vpop.f32.mrb[0].mxu0
    %1064 = vdwg.mxu0
    %v1065 = vpack.c.bf16 %v1062, %v1059
    %s1066 = scalar_lea.vmem [#allocation25], 64
    %v1067 = vld [vmem:[%s1066] sm:$0xf]
    %v1068 = vld [vmem:[%s1066 + $0x4] sm:$0xf]
    %v1069 = vld [vmem:[%s1066 + $0x8] sm:$0xf]
    %v1070 = vld [vmem:[%s1066 + $0xc] sm:$0xf]
    %v1071 = vld [vmem:[%s1066 + $0x10] sm:$0xf]
    %v1072 = vld [vmem:[%s1066 + $0x14] sm:$0xf]
    %v1073 = vld [vmem:[%s1066 + $0x18] sm:$0xf]
    %v1074 = vld [vmem:[%s1066 + $0x1c] sm:$0xf]
    %v1075 = vld [vmem:[%s1066 + $0x20] sm:$0xf]
    %v1076 = vld [vmem:[%s1066 + $0x24] sm:$0xf]
    %v1077 = vld [vmem:[%s1066 + $0x28] sm:$0xf]
    %v1078 = vld [vmem:[%s1066 + $0x2c] sm:$0xf]
    %v1079 = vld [vmem:[%s1066 + $0x30] sm:$0xf]
    %v1080 = vld [vmem:[%s1066 + $0x34] sm:$0xf]
    %v1081 = vld [vmem:[%s1066 + $0x38] sm:$0xf]
    %v1082 = vld [vmem:[%s1066 + $0x3c] sm:$0xf]
    %v1099 = vunpack.c.l.b16 %v1067
    %v1100 = vunpack.c.l.b16 %v1068
    %v1101 = vunpack.c.l.b16 %v1069
    %v1102 = vunpack.c.l.b16 %v1070
    %v1103 = vunpack.c.l.b16 %v1071
    %v1104 = vunpack.c.l.b16 %v1072
    %v1105 = vunpack.c.l.b16 %v1073
    %v1106 = vunpack.c.l.b16 %v1074
    %v1107 = vunpack.c.l.b16 %v1075
    %v1108 = vunpack.c.l.b16 %v1076
    %v1109 = vunpack.c.l.b16 %v1077
    %v1110 = vunpack.c.l.b16 %v1078
    %v1111 = vunpack.c.l.b16 %v1079
    %v1112 = vunpack.c.l.b16 %v1080
    %v1113 = vunpack.c.l.b16 %v1081
    %v1114 = vunpack.c.l.b16 %v1082
    %v1115 = vpack.c.b16 %v1100, %v1099
    %v1116 = vpack.c.b16 %v1102, %v1101
    %v1117 = vpack.c.b16 %v1104, %v1103
    %v1118 = vpack.c.b16 %v1106, %v1105
    %v1119 = vpack.c.b16 %v1108, %v1107
    %v1120 = vpack.c.b16 %v1110, %v1109
    %v1121 = vpack.c.b16 %v1112, %v1111
    %v1122 = vpack.c.b16 %v1114, %v1113
    %1131 = vmatprep.subr.bf16.mxu0 0
    %1132 = vmatpush1.bf16.msra.mxu0 %v1115
    %1133 = vmatprep.subr.bf16.mxu0 0
    %1134 = vmatpush1.bf16.msra.mxu0 %v1116
    %1135 = vmatprep.subr.bf16.mxu0 0
    %1136 = vmatpush1.bf16.msra.mxu0 %v1117
    %1137 = vmatprep.subr.bf16.mxu0 0
    %1138 = vmatpush1.bf16.msra.mxu0 %v1118
    %1139 = vmatprep.subr.bf16.mxu0 0
    %1140 = vmatpush1.bf16.msra.mxu0 %v1119
    %1141 = vmatprep.subr.bf16.mxu0 0
    %1142 = vmatpush1.bf16.msra.mxu0 %v1120
    %1143 = vmatprep.subr.bf16.mxu0 0
    %1144 = vmatpush1.bf16.msra.mxu0 %v1121
    %1145 = vmatprep.subr.bf16.mxu0 0
    %1146 = vmatpush1.bf16.msra.mxu0 %v1122
    %1147 = vmatprep.subr.bf16.mxu0 0
    %1148 = vmatpush1.bf16.msra.mxu0 0
    %1149 = vmatprep.subr.bf16.mxu0 0
    %1150 = vmatpush1.bf16.msra.mxu0 0
    %1151 = vmatprep.subr.bf16.mxu0 0
    %1152 = vmatpush1.bf16.msra.mxu0 0
    %1153 = vmatprep.subr.bf16.mxu0 0
    %1154 = vmatpush1.bf16.msra.mxu0 0
    %1155 = vmatprep.subr.bf16.mxu0 0
    %1156 = vmatpush1.bf16.msra.mxu0 0
    %1157 = vmatprep.subr.bf16.mxu0 0
    %1158 = vmatpush1.bf16.msra.mxu0 0
    %1159 = vmatprep.subr.bf16.mxu0 0
    %1160 = vmatpush1.bf16.msra.mxu0 0
    %1161 = vmatprep.subr.bf16.mxu0 0
    %1162 = vmatpush1.bf16.msra.mxu0 0
    %1163 = vmatprep.mubr.bf16.mxu0 0
    %1164 = vmatmul.mubr.bf16.gmra.mrb[0].mxu0 %v1065
    %v1165 = vpop.f32.mrb[0].mxu0
    %v1166 = vadd.f32 0.0, %v1165
    %v1167 = vpop.f32.mrb[0].mxu0
    %v1168 = vpop.f32.mrb[0].mxu0
    %v1169 = vadd.f32 0.0, %v1168
    %v1170 = vpop.f32.mrb[0].mxu0
    %1171 = vdwg.mxu0
    %v1188 = vunpack.c.l.b16 %v998
    %v1189 = vunpack.c.l.b16 %v999
    %v1190 = vunpack.c.l.b16 %v1000
    %v1191 = vunpack.c.l.b16 %v1001
    %v1192 = vunpack.c.l.b16 %v1002
    %v1193 = vunpack.c.l.b16 %v1003
    %v1194 = vunpack.c.l.b16 %v1004
    %v1195 = vunpack.c.l.b16 %v1005
    %v1196 = vunpack.c.l.b16 %v1006
    %v1197 = vunpack.c.l.b16 %v1007
    %v1198 = vunpack.c.l.b16 %v1008
    %v1199 = vunpack.c.l.b16 %v1009
    %v1200 = vunpack.c.l.b16 %v1010
    %v1201 = vunpack.c.l.b16 %v1011
    %v1202 = vunpack.c.l.b16 %v1012
    %v1203 = vunpack.c.l.b16 %v1013
    %v1204 = vpack.c.b16 %v1189, %v1188
    %v1205 = vpack.c.b16 %v1191, %v1190
    %v1206 = vpack.c.b16 %v1193, %v1192
    %v1207 = vpack.c.b16 %v1195, %v1194
    %v1208 = vpack.c.b16 %v1197, %v1196
    %v1209 = vpack.c.b16 %v1199, %v1198
    %v1210 = vpack.c.b16 %v1201, %v1200
    %v1211 = vpack.c.b16 %v1203, %v1202
    %1220 = vmatprep.subr.bf16.mxu0 0
    %1221 = vmatpush1.bf16.msra.mxu0 %v1204
    %1222 = vmatprep.subr.bf16.mxu0 0
    %1223 = vmatpush1.bf16.msra.mxu0 %v1205
    %1224 = vmatprep.subr.bf16.mxu0 0
    %1225 = vmatpush1.bf16.msra.mxu0 %v1206
    %1226 = vmatprep.subr.bf16.mxu0 0
    %1227 = vmatpush1.bf16.msra.mxu0 %v1207
    %1228 = vmatprep.subr.bf16.mxu0 0
    %1229 = vmatpush1.bf16.msra.mxu0 %v1208
    %1230 = vmatprep.subr.bf16.mxu0 0
    %1231 = vmatpush1.bf16.msra.mxu0 %v1209
    %1232 = vmatprep.subr.bf16.mxu0 0
    %1233 = vmatpush1.bf16.msra.mxu0 %v1210
    %1234 = vmatprep.subr.bf16.mxu0 0
    %1235 = vmatpush1.bf16.msra.mxu0 %v1211
    %1236 = vmatprep.subr.bf16.mxu0 0
    %1237 = vmatpush1.bf16.msra.mxu0 0
    %1238 = vmatprep.subr.bf16.mxu0 0
    %1239 = vmatpush1.bf16.msra.mxu0 0
    %1240 = vmatprep.subr.bf16.mxu0 0
    %1241 = vmatpush1.bf16.msra.mxu0 0
    %1242 = vmatprep.subr.bf16.mxu0 0
    %1243 = vmatpush1.bf16.msra.mxu0 0
    %1244 = vmatprep.subr.bf16.mxu0 0
    %1245 = vmatpush1.bf16.msra.mxu0 0
    %1246 = vmatprep.subr.bf16.mxu0 0
    %1247 = vmatpush1.bf16.msra.mxu0 0
    %1248 = vmatprep.subr.bf16.mxu0 0
    %1249 = vmatpush1.bf16.msra.mxu0 0
    %1250 = vmatprep.subr.bf16.mxu0 0
    %1251 = vmatpush1.bf16.msra.mxu0 0
    %1252 = vmatprep.mubr.bf16.mxu0 0
    %1253 = vmatmul.mubr.bf16.gmra.mrb[0].mxu0 %v997
    %v1254 = vpop.f32.mrb[0].mxu0
    %v1255 = vadd.f32 %v1166, %v1254
    %v1256 = vpop.f32.mrb[0].mxu0
    %v1257 = vpop.f32.mrb[0].mxu0
    %v1258 = vadd.f32 %v1169, %v1257
    %v1259 = vpop.f32.mrb[0].mxu0
    %1260 = vdwg.mxu0
    %1261 = vmatprep.subr.bf16.mxu0 0
    %1262 = vmatpush1.bf16.msra.mxu0 %v1065
    %1263 = vmatprep.subr.bf16.mxu0 0
    %1264 = vmatpush1.bf16.msra.mxu0 0
    %1265 = vmatprep.subr.bf16.mxu0 0
    %1266 = vmatpush1.bf16.msra.mxu0 0
    %1267 = vmatprep.subr.bf16.mxu0 0
    %1268 = vmatpush1.bf16.msra.mxu0 0
    %1269 = vmatprep.subr.bf16.mxu0 0
    %1270 = vmatpush1.bf16.msra.mxu0 0
    %1271 = vmatprep.subr.bf16.mxu0 0
    %1272 = vmatpush1.bf16.msra.mxu0 0
    %1273 = vmatprep.subr.bf16.mxu0 0
    %1274 = vmatpush1.bf16.msra.mxu0 0
    %1275 = vmatprep.subr.bf16.mxu0 0
    %1276 = vmatpush1.bf16.msra.mxu0 0
    %1277 = vmatprep.subr.bf16.mxu0 0
    %1278 = vmatpush1.bf16.msra.mxu0 0
    %1279 = vmatprep.subr.bf16.mxu0 0
    %1280 = vmatpush1.bf16.msra.mxu0 0
    %1281 = vmatprep.subr.bf16.mxu0 0
    %1282 = vmatpush1.bf16.msra.mxu0 0
    %1283 = vmatprep.subr.bf16.mxu0 0
    %1284 = vmatpush1.bf16.msra.mxu0 0
    %1285 = vmatprep.subr.bf16.mxu0 0
    %1286 = vmatpush1.bf16.msra.mxu0 0
    %1287 = vmatprep.subr.bf16.mxu0 0
    %1288 = vmatpush1.bf16.msra.mxu0 0
    %1289 = vmatprep.subr.bf16.mxu0 0
    %1290 = vmatpush1.bf16.msra.mxu0 0
    %1291 = vmatprep.subr.bf16.mxu0 0
    %1292 = vmatpush1.bf16.msra.mxu0 0
    %1293 = vmatprep.mubr.bf16.mxu0 0
    %1294 = vmatmul.mubr.bf16.gmra.mrb[0].mxu0 %v1022
    %v1295 = vpop.f32.mrb[0].mxu0
    %v1296 = vadd.f32 0.0, %v1295
    %v1297 = vpop.f32.mrb[0].mxu0
    %v1298 = vpop.f32.mrb[0].mxu0
    %v1299 = vadd.f32 0.0, %v1298
    %v1300 = vpop.f32.mrb[0].mxu0
    %1301 = vdwg.mxu0
    %v1302 = vpack.c.bf16 %v1299, %v1296
    %s1303 = scalar_lea.vmem [#allocation25], 128
    %v1304 = vld [vmem:[%s1303] sm:$0xf]
    %v1305 = vld [vmem:[%s1303 + $0x4] sm:$0xf]
    %v1306 = vld [vmem:[%s1303 + $0x8] sm:$0xf]
    %v1307 = vld [vmem:[%s1303 + $0xc] sm:$0xf]
    %v1308 = vld [vmem:[%s1303 + $0x10] sm:$0xf]
    %v1309 = vld [vmem:[%s1303 + $0x14] sm:$0xf]
    %v1310 = vld [vmem:[%s1303 + $0x18] sm:$0xf]
    %v1311 = vld [vmem:[%s1303 + $0x1c] sm:$0xf]
    %v1312 = vld [vmem:[%s1303 + $0x20] sm:$0xf]
    %v1313 = vld [vmem:[%s1303 + $0x24] sm:$0xf]
    %v1314 = vld [vmem:[%s1303 + $0x28] sm:$0xf]
    %v1315 = vld [vmem:[%s1303 + $0x2c] sm:$0xf]
    %v1316 = vld [vmem:[%s1303 + $0x30] sm:$0xf]
    %v1317 = vld [vmem:[%s1303 + $0x34] sm:$0xf]
    %v1318 = vld [vmem:[%s1303 + $0x38] sm:$0xf]
    %v1319 = vld [vmem:[%s1303 + $0x3c] sm:$0xf]
    %v1336 = vunpack.c.l.b16 %v1304
    %v1337 = vunpack.c.l.b16 %v1305
    %v1338 = vunpack.c.l.b16 %v1306
    %v1339 = vunpack.c.l.b16 %v1307
    %v1340 = vunpack.c.l.b16 %v1308
    %v1341 = vunpack.c.l.b16 %v1309
    %v1342 = vunpack.c.l.b16 %v1310
    %v1343 = vunpack.c.l.b16 %v1311
    %v1344 = vunpack.c.l.b16 %v1312
    %v1345 = vunpack.c.l.b16 %v1313
    %v1346 = vunpack.c.l.b16 %v1314
    %v1347 = vunpack.c.l.b16 %v1315
    %v1348 = vunpack.c.l.b16 %v1316
    %v1349 = vunpack.c.l.b16 %v1317
    %v1350 = vunpack.c.l.b16 %v1318
    %v1351 = vunpack.c.l.b16 %v1319
    %v1352 = vpack.c.b16 %v1337, %v1336
    %v1353 = vpack.c.b16 %v1339, %v1338
    %v1354 = vpack.c.b16 %v1341, %v1340
    %v1355 = vpack.c.b16 %v1343, %v1342
    %v1356 = vpack.c.b16 %v1345, %v1344
    %v1357 = vpack.c.b16 %v1347, %v1346
    %v1358 = vpack.c.b16 %v1349, %v1348
    %v1359 = vpack.c.b16 %v1351, %v1350
    %1368 = vmatprep.subr.bf16.mxu0 0
    %1369 = vmatpush1.bf16.msra.mxu0 %v1352
    %1370 = vmatprep.subr.bf16.mxu0 0
    %1371 = vmatpush1.bf16.msra.mxu0 %v1353
    %1372 = vmatprep.subr.bf16.mxu0 0
    %1373 = vmatpush1.bf16.msra.mxu0 %v1354
    %1374 = vmatprep.subr.bf16.mxu0 0
    %1375 = vmatpush1.bf16.msra.mxu0 %v1355
    %1376 = vmatprep.subr.bf16.mxu0 0
    %1377 = vmatpush1.bf16.msra.mxu0 %v1356
    %1378 = vmatprep.subr.bf16.mxu0 0
    %1379 = vmatpush1.bf16.msra.mxu0 %v1357
    %1380 = vmatprep.subr.bf16.mxu0 0
    %1381 = vmatpush1.bf16.msra.mxu0 %v1358
    %1382 = vmatprep.subr.bf16.mxu0 0
    %1383 = vmatpush1.bf16.msra.mxu0 %v1359
    %1384 = vmatprep.subr.bf16.mxu0 0
    %1385 = vmatpush1.bf16.msra.mxu0 0
    %1386 = vmatprep.subr.bf16.mxu0 0
    %1387 = vmatpush1.bf16.msra.mxu0 0
    %1388 = vmatprep.subr.bf16.mxu0 0
    %1389 = vmatpush1.bf16.msra.mxu0 0
    %1390 = vmatprep.subr.bf16.mxu0 0
    %1391 = vmatpush1.bf16.msra.mxu0 0
    %1392 = vmatprep.subr.bf16.mxu0 0
    %1393 = vmatpush1.bf16.msra.mxu0 0
    %1394 = vmatprep.subr.bf16.mxu0 0
    %1395 = vmatpush1.bf16.msra.mxu0 0
    %1396 = vmatprep.subr.bf16.mxu0 0
    %1397 = vmatpush1.bf16.msra.mxu0 0
    %1398 = vmatprep.subr.bf16.mxu0 0
    %1399 = vmatpush1.bf16.msra.mxu0 0
    %1400 = vmatprep.mubr.bf16.mxu0 0
    %1401 = vmatmul.mubr.bf16.gmra.mrb[0].mxu0 %v1302
    %v1402 = vpop.f32.mrb[0].mxu0
    %v1403 = vadd.f32 0.0, %v1402
    %v1404 = vpop.f32.mrb[0].mxu0
    %v1405 = vpop.f32.mrb[0].mxu0
    %v1406 = vadd.f32 0.0, %v1405
    %v1407 = vpop.f32.mrb[0].mxu0
    %1408 = vdwg.mxu0
    %v1409 = vadd.f32 %v1255, %v1403
    %v1410 = vadd.f32 %v1258, %v1406
    %v1411 = vld [vmem:[%s17] sm:$0x1]
    %v1413 = vlaneseq
    %v1414 = vshrl.u32 %v1413, 7
    %v1415 = vsub.s32 0, %v1414
    %v1416 = vrot.slane %v1411, %v1415
    %v1418 = vadd.f32 %v1409, %v1416
    %v1419 = vadd.f32 %v1410, %v1416
    %v1420 = vmax.f32 %v1418, 0.0
    %v1421 = vmax.f32 %v1419, 0.0
    %v1422 = vpack.c.bf16 %v1421, %v1420
    %1423 = vmatprep.subr.bf16.mxu0 0
    %1424 = vmatpush1.bf16.msra.mxu0 %v1422
    %1425 = vmatprep.subr.bf16.mxu0 0
    %1426 = vmatpush1.bf16.msra.mxu0 0
    %1427 = vmatprep.subr.bf16.mxu0 0
    %1428 = vmatpush1.bf16.msra.mxu0 0
    %1429 = vmatprep.subr.bf16.mxu0 0
    %1430 = vmatpush1.bf16.msra.mxu0 0
    %1431 = vmatprep.subr.bf16.mxu0 0
    %1432 = vmatpush1.bf16.msra.mxu0 0
    %1433 = vmatprep.subr.bf16.mxu0 0
    %1434 = vmatpush1.bf16.msra.mxu0 0
    %1435 = vmatprep.subr.bf16.mxu0 0
    %1436 = vmatpush1.bf16.msra.mxu0 0
    %1437 = vmatprep.subr.bf16.mxu0 0
    %1438 = vmatpush1.bf16.msra.mxu0 0
    %1439 = vmatprep.subr.bf16.mxu0 0
    %1440 = vmatpush1.bf16.msra.mxu0 0
    %1441 = vmatprep.subr.bf16.mxu0 0
    %1442 = vmatpush1.bf16.msra.mxu0 0
    %1443 = vmatprep.subr.bf16.mxu0 0
    %1444 = vmatpush1.bf16.msra.mxu0 0
    %1445 = vmatprep.subr.bf16.mxu0 0
    %1446 = vmatpush1.bf16.msra.mxu0 0
    %1447 = vmatprep.subr.bf16.mxu0 0
    %1448 = vmatpush1.bf16.msra.mxu0 0
    %1449 = vmatprep.subr.bf16.mxu0 0
    %1450 = vmatpush1.bf16.msra.mxu0 0
    %1451 = vmatprep.subr.bf16.mxu0 0
    %1452 = vmatpush1.bf16.msra.mxu0 0
    %1453 = vmatprep.subr.bf16.mxu0 0
    %1454 = vmatpush1.bf16.msra.mxu0 0
    %1455 = vmatprep.mubr.bf16.mxu0 0
    %1456 = vmatmul.mubr.bf16.gmra.mrb[0].mxu0 %v509
    %v1457 = vpop.f32.mrb[0].mxu0
    %v1458 = vadd.f32 0.0, %v1457
    %v1459 = vpop.f32.mrb[0].mxu0
    %v1460 = vpop.f32.mrb[0].mxu0
    %v1461 = vadd.f32 0.0, %v1460
    %v1462 = vpop.f32.mrb[0].mxu0
    %1463 = vdwg.mxu0
    %1464 = vmatprep.subr.bf16.mxu0 0
    %1465 = vmatpush1.bf16.msra.mxu0 %v1422
    %1466 = vmatprep.subr.bf16.mxu0 0
    %1467 = vmatpush1.bf16.msra.mxu0 0
    %1468 = vmatprep.subr.bf16.mxu0 0
    %1469 = vmatpush1.bf16.msra.mxu0 0
    %1470 = vmatprep.subr.bf16.mxu0 0
    %1471 = vmatpush1.bf16.msra.mxu0 0
    %1472 = vmatprep.subr.bf16.mxu0 0
    %1473 = vmatpush1.bf16.msra.mxu0 0
    %1474 = vmatprep.subr.bf16.mxu0 0
    %1475 = vmatpush1.bf16.msra.mxu0 0
    %1476 = vmatprep.subr.bf16.mxu0 0
    %1477 = vmatpush1.bf16.msra.mxu0 0
    %1478 = vmatprep.subr.bf16.mxu0 0
    %1479 = vmatpush1.bf16.msra.mxu0 0
    %1480 = vmatprep.subr.bf16.mxu0 0
    %1481 = vmatpush1.bf16.msra.mxu0 0
    %1482 = vmatprep.subr.bf16.mxu0 0
    %1483 = vmatpush1.bf16.msra.mxu0 0
    %1484 = vmatprep.subr.bf16.mxu0 0
    %1485 = vmatpush1.bf16.msra.mxu0 0
    %1486 = vmatprep.subr.bf16.mxu0 0
    %1487 = vmatpush1.bf16.msra.mxu0 0
    %1488 = vmatprep.subr.bf16.mxu0 0
    %1489 = vmatpush1.bf16.msra.mxu0 0
    %1490 = vmatprep.subr.bf16.mxu0 0
    %1491 = vmatpush1.bf16.msra.mxu0 0
    %1492 = vmatprep.subr.bf16.mxu0 0
    %1493 = vmatpush1.bf16.msra.mxu0 0
    %1494 = vmatprep.subr.bf16.mxu0 0
    %1495 = vmatpush1.bf16.msra.mxu0 0
    %1496 = vmatprep.mubr.bf16.mxu0 0
    %1497 = vmatmul.mubr.bf16.gmra.mrb[0].mxu0 %v560
    %v1498 = vpop.f32.mrb[0].mxu0
    %v1499 = vadd.f32 0.0, %v1498
    %v1500 = vpop.f32.mrb[0].mxu0
    %v1501 = vpop.f32.mrb[0].mxu0
    %v1502 = vadd.f32 0.0, %v1501
    %v1503 = vpop.f32.mrb[0].mxu0
    %1504 = vdwg.mxu0
    %v1505 = vpack.c.bf16 %v1461, %v1458
    %s1506 = scalar_lea.vmem [#allocation17], 64
    %v1507 = vld [vmem:[%s1506] sm:$0xf]
    %v1508 = vld [vmem:[%s1506 + $0x4] sm:$0xf]
    %v1509 = vld [vmem:[%s1506 + $0x8] sm:$0xf]
    %v1510 = vld [vmem:[%s1506 + $0xc] sm:$0xf]
    %v1511 = vld [vmem:[%s1506 + $0x10] sm:$0xf]
    %v1512 = vld [vmem:[%s1506 + $0x14] sm:$0xf]
    %v1513 = vld [vmem:[%s1506 + $0x18] sm:$0xf]
    %v1514 = vld [vmem:[%s1506 + $0x1c] sm:$0xf]
    %v1515 = vld [vmem:[%s1506 + $0x20] sm:$0xf]
    %v1516 = vld [vmem:[%s1506 + $0x24] sm:$0xf]
    %v1517 = vld [vmem:[%s1506 + $0x28] sm:$0xf]
    %v1518 = vld [vmem:[%s1506 + $0x2c] sm:$0xf]
    %v1519 = vld [vmem:[%s1506 + $0x30] sm:$0xf]
    %v1520 = vld [vmem:[%s1506 + $0x34] sm:$0xf]
    %v1521 = vld [vmem:[%s1506 + $0x38] sm:$0xf]
    %v1522 = vld [vmem:[%s1506 + $0x3c] sm:$0xf]
    %v1523 = vpack.c.bf16 %v1502, %v1499
    %s1524 = scalar_lea.vmem [#allocation19], 64
    %v1525 = vld [vmem:[%s1524] sm:$0xf]
    %v1526 = vld [vmem:[%s1524 + $0x4] sm:$0xf]
    %v1527 = vld [vmem:[%s1524 + $0x8] sm:$0xf]
    %v1528 = vld [vmem:[%s1524 + $0xc] sm:$0xf]
    %v1529 = vld [vmem:[%s1524 + $0x10] sm:$0xf]
    %v1530 = vld [vmem:[%s1524 + $0x14] sm:$0xf]
    %v1531 = vld [vmem:[%s1524 + $0x18] sm:$0xf]
    %v1532 = vld [vmem:[%s1524 + $0x1c] sm:$0xf]
    %v1533 = vld [vmem:[%s1524 + $0x20] sm:$0xf]
    %v1534 = vld [vmem:[%s1524 + $0x24] sm:$0xf]
    %v1535 = vld [vmem:[%s1524 + $0x28] sm:$0xf]
    %v1536 = vld [vmem:[%s1524 + $0x2c] sm:$0xf]
    %v1537 = vld [vmem:[%s1524 + $0x30] sm:$0xf]
    %v1538 = vld [vmem:[%s1524 + $0x34] sm:$0xf]
    %v1539 = vld [vmem:[%s1524 + $0x38] sm:$0xf]
    %v1540 = vld [vmem:[%s1524 + $0x3c] sm:$0xf]
    %v1557 = vunpack.c.l.b16 %v1525
    %v1558 = vunpack.c.l.b16 %v1526
    %v1559 = vunpack.c.l.b16 %v1527
    %v1560 = vunpack.c.l.b16 %v1528
    %v1561 = vunpack.c.l.b16 %v1529
    %v1562 = vunpack.c.l.b16 %v1530
    %v1563 = vunpack.c.l.b16 %v1531
    %v1564 = vunpack.c.l.b16 %v1532
    %v1565 = vunpack.c.l.b16 %v1533
    %v1566 = vunpack.c.l.b16 %v1534
    %v1567 = vunpack.c.l.b16 %v1535
    %v1568 = vunpack.c.l.b16 %v1536
    %v1569 = vunpack.c.l.b16 %v1537
    %v1570 = vunpack.c.l.b16 %v1538
    %v1571 = vunpack.c.l.b16 %v1539
    %v1572 = vunpack.c.l.b16 %v1540
    %v1573 = vpack.c.b16 %v1558, %v1557
    %v1574 = vpack.c.b16 %v1560, %v1559
    %v1575 = vpack.c.b16 %v1562, %v1561
    %v1576 = vpack.c.b16 %v1564, %v1563
    %v1577 = vpack.c.b16 %v1566, %v1565
    %v1578 = vpack.c.b16 %v1568, %v1567
    %v1579 = vpack.c.b16 %v1570, %v1569
    %v1580 = vpack.c.b16 %v1572, %v1571
    %1589 = vmatprep.subr.bf16.mxu0 0
    %1590 = vmatpush1.bf16.msra.mxu0 %v1573
    %1591 = vmatprep.subr.bf16.mxu0 0
    %1592 = vmatpush1.bf16.msra.mxu0 %v1574
    %1593 = vmatprep.subr.bf16.mxu0 0
    %1594 = vmatpush1.bf16.msra.mxu0 %v1575
    %1595 = vmatprep.subr.bf16.mxu0 0
    %1596 = vmatpush1.bf16.msra.mxu0 %v1576
    %1597 = vmatprep.subr.bf16.mxu0 0
    %1598 = vmatpush1.bf16.msra.mxu0 %v1577
    %1599 = vmatprep.subr.bf16.mxu0 0
    %1600 = vmatpush1.bf16.msra.mxu0 %v1578
    %1601 = vmatprep.subr.bf16.mxu0 0
    %1602 = vmatpush1.bf16.msra.mxu0 %v1579
    %1603 = vmatprep.subr.bf16.mxu0 0
    %1604 = vmatpush1.bf16.msra.mxu0 %v1580
    %1605 = vmatprep.subr.bf16.mxu0 0
    %1606 = vmatpush1.bf16.msra.mxu0 0
    %1607 = vmatprep.subr.bf16.mxu0 0
    %1608 = vmatpush1.bf16.msra.mxu0 0
    %1609 = vmatprep.subr.bf16.mxu0 0
    %1610 = vmatpush1.bf16.msra.mxu0 0
    %1611 = vmatprep.subr.bf16.mxu0 0
    %1612 = vmatpush1.bf16.msra.mxu0 0
    %1613 = vmatprep.subr.bf16.mxu0 0
    %1614 = vmatpush1.bf16.msra.mxu0 0
    %1615 = vmatprep.subr.bf16.mxu0 0
    %1616 = vmatpush1.bf16.msra.mxu0 0
    %1617 = vmatprep.subr.bf16.mxu0 0
    %1618 = vmatpush1.bf16.msra.mxu0 0
    %1619 = vmatprep.subr.bf16.mxu0 0
    %1620 = vmatpush1.bf16.msra.mxu0 0
    %1621 = vmatprep.mubr.bf16.mxu0 0
    %1622 = vmatmul.mubr.bf16.gmra.mrb[0].mxu0 %v1523
    %v1623 = vpop.f32.mrb[0].mxu0
    %v1624 = vadd.f32 0.0, %v1623
    %v1625 = vpop.f32.mrb[0].mxu0
    %v1626 = vpop.f32.mrb[0].mxu0
    %v1627 = vadd.f32 0.0, %v1626
    %v1628 = vpop.f32.mrb[0].mxu0
    %1629 = vdwg.mxu0
    %v1646 = vunpack.c.l.b16 %v1507
    %v1647 = vunpack.c.l.b16 %v1508
    %v1648 = vunpack.c.l.b16 %v1509
    %v1649 = vunpack.c.l.b16 %v1510
    %v1650 = vunpack.c.l.b16 %v1511
    %v1651 = vunpack.c.l.b16 %v1512
    %v1652 = vunpack.c.l.b16 %v1513
    %v1653 = vunpack.c.l.b16 %v1514
    %v1654 = vunpack.c.l.b16 %v1515
    %v1655 = vunpack.c.l.b16 %v1516
    %v1656 = vunpack.c.l.b16 %v1517
    %v1657 = vunpack.c.l.b16 %v1518
    %v1658 = vunpack.c.l.b16 %v1519
    %v1659 = vunpack.c.l.b16 %v1520
    %v1660 = vunpack.c.l.b16 %v1521
    %v1661 = vunpack.c.l.b16 %v1522
    %v1662 = vpack.c.b16 %v1647, %v1646
    %v1663 = vpack.c.b16 %v1649, %v1648
    %v1664 = vpack.c.b16 %v1651, %v1650
    %v1665 = vpack.c.b16 %v1653, %v1652
    %v1666 = vpack.c.b16 %v1655, %v1654
    %v1667 = vpack.c.b16 %v1657, %v1656
    %v1668 = vpack.c.b16 %v1659, %v1658
    %v1669 = vpack.c.b16 %v1661, %v1660
    %1678 = vmatprep.subr.bf16.mxu0 0
    %1679 = vmatpush1.bf16.msra.mxu0 %v1662
    %1680 = vmatprep.subr.bf16.mxu0 0
    %1681 = vmatpush1.bf16.msra.mxu0 %v1663
    %1682 = vmatprep.subr.bf16.mxu0 0
    %1683 = vmatpush1.bf16.msra.mxu0 %v1664
    %1684 = vmatprep.subr.bf16.mxu0 0
    %1685 = vmatpush1.bf16.msra.mxu0 %v1665
    %1686 = vmatprep.subr.bf16.mxu0 0
    %1687 = vmatpush1.bf16.msra.mxu0 %v1666
    %1688 = vmatprep.subr.bf16.mxu0 0
    %1689 = vmatpush1.bf16.msra.mxu0 %v1667
    %1690 = vmatprep.subr.bf16.mxu0 0
    %1691 = vmatpush1.bf16.msra.mxu0 %v1668
    %1692 = vmatprep.subr.bf16.mxu0 0
    %1693 = vmatpush1.bf16.msra.mxu0 %v1669
    %1694 = vmatprep.subr.bf16.mxu0 0
    %1695 = vmatpush1.bf16.msra.mxu0 0
    %1696 = vmatprep.subr.bf16.mxu0 0
    %1697 = vmatpush1.bf16.msra.mxu0 0
    %1698 = vmatprep.subr.bf16.mxu0 0
    %1699 = vmatpush1.bf16.msra.mxu0 0
    %1700 = vmatprep.subr.bf16.mxu0 0
    %1701 = vmatpush1.bf16.msra.mxu0 0
    %1702 = vmatprep.subr.bf16.mxu0 0
    %1703 = vmatpush1.bf16.msra.mxu0 0
    %1704 = vmatprep.subr.bf16.mxu0 0
    %1705 = vmatpush1.bf16.msra.mxu0 0
    %1706 = vmatprep.subr.bf16.mxu0 0
    %1707 = vmatpush1.bf16.msra.mxu0 0
    %1708 = vmatprep.subr.bf16.mxu0 0
    %1709 = vmatpush1.bf16.msra.mxu0 0
    %1710 = vmatprep.mubr.bf16.mxu0 0
    %1711 = vmatmul.mubr.bf16.gmra.mrb[0].mxu0 %v1505
    %v1712 = vpop.f32.mrb[0].mxu0
    %v1713 = vadd.f32 %v1624, %v1712
    %v1714 = vpop.f32.mrb[0].mxu0
    %v1715 = vpop.f32.mrb[0].mxu0
    %v1716 = vadd.f32 %v1627, %v1715
    %v1717 = vpop.f32.mrb[0].mxu0
    %1718 = vdwg.mxu0
    %s1719 = scalar_lea.vmem %s15, 16
    %v1720 = vld [vmem:[%s1719] sm:$0xff]
    %v1721 = vld [vmem:[%s1719 + $0x8] sm:$0xff]
    %v1722 = vadd.f32 %v1713, %v1720
    %v1723 = vadd.f32 %v1716, %v1721
    %s1724 = scalar_lea.vmem [#allocation20], 1
    %v1725 = vld [vmem:[%s1724] sm:$0x1]
    %v1727 = vlaneseq
    %v1728 = vshrl.u32 %v1727, 7
    %v1729 = vsub.s32 0, %v1728
    %v1730 = vrot.slane %v1725, %v1729
    %v1732 = vadd.f32 %v1722, %v1730
    %v1733 = vadd.f32 %v1723, %v1730
    %v1734 = vmax.f32 %v1732, 0.0
    %v1735 = vmax.f32 %v1733, 0.0
    %v1736 = vpack.c.bf16 %v1735, %v1734
    %s1737 = scalar_lea.vmem [#allocation22], 64
    %v1738 = vld [vmem:[%s1737] sm:$0xf]
    %v1739 = vld [vmem:[%s1737 + $0x4] sm:$0xf]
    %v1740 = vld [vmem:[%s1737 + $0x8] sm:$0xf]
    %v1741 = vld [vmem:[%s1737 + $0xc] sm:$0xf]
    %v1742 = vld [vmem:[%s1737 + $0x10] sm:$0xf]
    %v1743 = vld [vmem:[%s1737 + $0x14] sm:$0xf]
    %v1744 = vld [vmem:[%s1737 + $0x18] sm:$0xf]
    %v1745 = vld [vmem:[%s1737 + $0x1c] sm:$0xf]
    %v1746 = vld [vmem:[%s1737 + $0x20] sm:$0xf]
    %v1747 = vld [vmem:[%s1737 + $0x24] sm:$0xf]
    %v1748 = vld [vmem:[%s1737 + $0x28] sm:$0xf]
    %v1749 = vld [vmem:[%s1737 + $0x2c] sm:$0xf]
    %v1750 = vld [vmem:[%s1737 + $0x30] sm:$0xf]
    %v1751 = vld [vmem:[%s1737 + $0x34] sm:$0xf]
    %v1752 = vld [vmem:[%s1737 + $0x38] sm:$0xf]
    %v1753 = vld [vmem:[%s1737 + $0x3c] sm:$0xf]
    %s1754 = scalar_lea.vmem [#allocation23], 1
    %v1755 = vld [vmem:[%s1754] sm:$0x1]
    %v1757 = vlaneseq
    %v1758 = vshrl.u32 %v1757, 7
    %v1759 = vsub.s32 0, %v1758
    %v1760 = vrot.slane %v1755, %v1759
    %v1778 = vunpack.c.l.b16 %v1738
    %v1779 = vunpack.c.l.b16 %v1739
    %v1780 = vunpack.c.l.b16 %v1740
    %v1781 = vunpack.c.l.b16 %v1741
    %v1782 = vunpack.c.l.b16 %v1742
    %v1783 = vunpack.c.l.b16 %v1743
    %v1784 = vunpack.c.l.b16 %v1744
    %v1785 = vunpack.c.l.b16 %v1745
    %v1786 = vunpack.c.l.b16 %v1746
    %v1787 = vunpack.c.l.b16 %v1747
    %v1788 = vunpack.c.l.b16 %v1748
    %v1789 = vunpack.c.l.b16 %v1749
    %v1790 = vunpack.c.l.b16 %v1750
    %v1791 = vunpack.c.l.b16 %v1751
    %v1792 = vunpack.c.l.b16 %v1752
    %v1793 = vunpack.c.l.b16 %v1753
    %v1794 = vpack.c.b16 %v1779, %v1778
    %v1795 = vpack.c.b16 %v1781, %v1780
    %v1796 = vpack.c.b16 %v1783, %v1782
    %v1797 = vpack.c.b16 %v1785, %v1784
    %v1798 = vpack.c.b16 %v1787, %v1786
    %v1799 = vpack.c.b16 %v1789, %v1788
    %v1800 = vpack.c.b16 %v1791, %v1790
    %v1801 = vpack.c.b16 %v1793, %v1792
    %1810 = vmatprep.subr.bf16.mxu0 0
    %1811 = vmatpush1.bf16.msra.mxu0 %v1794
    %1812 = vmatprep.subr.bf16.mxu0 0
    %1813 = vmatpush1.bf16.msra.mxu0 %v1795
    %1814 = vmatprep.subr.bf16.mxu0 0
    %1815 = vmatpush1.bf16.msra.mxu0 %v1796
    %1816 = vmatprep.subr.bf16.mxu0 0
    %1817 = vmatpush1.bf16.msra.mxu0 %v1797
    %1818 = vmatprep.subr.bf16.mxu0 0
    %1819 = vmatpush1.bf16.msra.mxu0 %v1798
    %1820 = vmatprep.subr.bf16.mxu0 0
    %1821 = vmatpush1.bf16.msra.mxu0 %v1799
    %1822 = vmatprep.subr.bf16.mxu0 0
    %1823 = vmatpush1.bf16.msra.mxu0 %v1800
    %1824 = vmatprep.subr.bf16.mxu0 0
    %1825 = vmatpush1.bf16.msra.mxu0 %v1801
    %1826 = vmatprep.subr.bf16.mxu0 0
    %1827 = vmatpush1.bf16.msra.mxu0 0
    %1828 = vmatprep.subr.bf16.mxu0 0
    %1829 = vmatpush1.bf16.msra.mxu0 0
    %1830 = vmatprep.subr.bf16.mxu0 0
    %1831 = vmatpush1.bf16.msra.mxu0 0
    %1832 = vmatprep.subr.bf16.mxu0 0
    %1833 = vmatpush1.bf16.msra.mxu0 0
    %1834 = vmatprep.subr.bf16.mxu0 0
    %1835 = vmatpush1.bf16.msra.mxu0 0
    %1836 = vmatprep.subr.bf16.mxu0 0
    %1837 = vmatpush1.bf16.msra.mxu0 0
    %1838 = vmatprep.subr.bf16.mxu0 0
    %1839 = vmatpush1.bf16.msra.mxu0 0
    %1840 = vmatprep.subr.bf16.mxu0 0
    %1841 = vmatpush1.bf16.msra.mxu0 0
    %1842 = vmatprep.mubr.bf16.mxu0 0
    %1843 = vmatmul.mubr.bf16.gmra.mrb[0].mxu0 %v1736
    %v1844 = vpop.f32.mrb[0].mxu0
    %v1845 = vadd.f32 %v1760, %v1844
    %v1846 = vpop.f32.mrb[0].mxu0
    %v1847 = vpop.f32.mrb[0].mxu0
    %v1848 = vadd.f32 %v1760, %v1847
    %v1849 = vpop.f32.mrb[0].mxu0
    %1850 = vdwg.mxu0
    %v1851 = vpack.c.bf16 %v1848, %v1845
    %1852 = vmatprep.subr.bf16.mxu0 0
    %1853 = vmatpush1.bf16.msra.mxu0 %v1851
    %1854 = vmatprep.subr.bf16.mxu0 0
    %1855 = vmatpush1.bf16.msra.mxu0 0
    %1856 = vmatprep.subr.bf16.mxu0 0
    %1857 = vmatpush1.bf16.msra.mxu0 0
    %1858 = vmatprep.subr.bf16.mxu0 0
    %1859 = vmatpush1.bf16.msra.mxu0 0
    %1860 = vmatprep.subr.bf16.mxu0 0
    %1861 = vmatpush1.bf16.msra.mxu0 0
    %1862 = vmatprep.subr.bf16.mxu0 0
    %1863 = vmatpush1.bf16.msra.mxu0 0
    %1864 = vmatprep.subr.bf16.mxu0 0
    %1865 = vmatpush1.bf16.msra.mxu0 0
    %1866 = vmatprep.subr.bf16.mxu0 0
    %1867 = vmatpush1.bf16.msra.mxu0 0
    %1868 = vmatprep.subr.bf16.mxu0 0
    %1869 = vmatpush1.bf16.msra.mxu0 0
    %1870 = vmatprep.subr.bf16.mxu0 0
    %1871 = vmatpush1.bf16.msra.mxu0 0
    %1872 = vmatprep.subr.bf16.mxu0 0
    %1873 = vmatpush1.bf16.msra.mxu0 0
    %1874 = vmatprep.subr.bf16.mxu0 0
    %1875 = vmatpush1.bf16.msra.mxu0 0
    %1876 = vmatprep.subr.bf16.mxu0 0
    %1877 = vmatpush1.bf16.msra.mxu0 0
    %1878 = vmatprep.subr.bf16.mxu0 0
    %1879 = vmatpush1.bf16.msra.mxu0 0
    %1880 = vmatprep.subr.bf16.mxu0 0
    %1881 = vmatpush1.bf16.msra.mxu0 0
    %1882 = vmatprep.subr.bf16.mxu0 0
    %1883 = vmatpush1.bf16.msra.mxu0 0
    %1884 = vmatprep.mubr.bf16.mxu0 0
    %1885 = vmatmul.mubr.bf16.gmra.mrb[0].mxu0 %v952
    %v1886 = vpop.f32.mrb[0].mxu0
    %v1887 = vadd.f32 0.0, %v1886
    %v1888 = vpop.f32.mrb[0].mxu0
    %v1889 = vpop.f32.mrb[0].mxu0
    %v1890 = vadd.f32 0.0, %v1889
    %v1891 = vpop.f32.mrb[0].mxu0
    %1892 = vdwg.mxu0
    %v1893 = vmax.f32 %v1887, 0.0
    %v1894 = vmax.f32 %v1890, 0.0
    %v1895 = vpack.c.bf16 %v1894, %v1893
    %s1896 = scalar_lea.vmem [#allocation25], 192
    %v1897 = vld [vmem:[%s1896] sm:$0xf]
    %v1898 = vld [vmem:[%s1896 + $0x4] sm:$0xf]
    %v1899 = vld [vmem:[%s1896 + $0x8] sm:$0xf]
    %v1900 = vld [vmem:[%s1896 + $0xc] sm:$0xf]
    %v1901 = vld [vmem:[%s1896 + $0x10] sm:$0xf]
    %v1902 = vld [vmem:[%s1896 + $0x14] sm:$0xf]
    %v1903 = vld [vmem:[%s1896 + $0x18] sm:$0xf]
    %v1904 = vld [vmem:[%s1896 + $0x1c] sm:$0xf]
    %v1905 = vld [vmem:[%s1896 + $0x20] sm:$0xf]
    %v1906 = vld [vmem:[%s1896 + $0x24] sm:$0xf]
    %v1907 = vld [vmem:[%s1896 + $0x28] sm:$0xf]
    %v1908 = vld [vmem:[%s1896 + $0x2c] sm:$0xf]
    %v1909 = vld [vmem:[%s1896 + $0x30] sm:$0xf]
    %v1910 = vld [vmem:[%s1896 + $0x34] sm:$0xf]
    %v1911 = vld [vmem:[%s1896 + $0x38] sm:$0xf]
    %v1912 = vld [vmem:[%s1896 + $0x3c] sm:$0xf]
    %1913 = vmatprep.subr.bf16.mxu0 0
    %1914 = vmatpush1.bf16.msra.mxu0 %v1895
    %1915 = vmatprep.subr.bf16.mxu0 0
    %1916 = vmatpush1.bf16.msra.mxu0 0
    %1917 = vmatprep.subr.bf16.mxu0 0
    %1918 = vmatpush1.bf16.msra.mxu0 0
    %1919 = vmatprep.subr.bf16.mxu0 0
    %1920 = vmatpush1.bf16.msra.mxu0 0
    %1921 = vmatprep.subr.bf16.mxu0 0
    %1922 = vmatpush1.bf16.msra.mxu0 0
    %1923 = vmatprep.subr.bf16.mxu0 0
    %1924 = vmatpush1.bf16.msra.mxu0 0
    %1925 = vmatprep.subr.bf16.mxu0 0
    %1926 = vmatpush1.bf16.msra.mxu0 0
    %1927 = vmatprep.subr.bf16.mxu0 0
    %1928 = vmatpush1.bf16.msra.mxu0 0
    %1929 = vmatprep.subr.bf16.mxu0 0
    %1930 = vmatpush1.bf16.msra.mxu0 0
    %1931 = vmatprep.subr.bf16.mxu0 0
    %1932 = vmatpush1.bf16.msra.mxu0 0
    %1933 = vmatprep.subr.bf16.mxu0 0
    %1934 = vmatpush1.bf16.msra.mxu0 0
    %1935 = vmatprep.subr.bf16.mxu0 0
    %1936 = vmatpush1.bf16.msra.mxu0 0
    %1937 = vmatprep.subr.bf16.mxu0 0
    %1938 = vmatpush1.bf16.msra.mxu0 0
    %1939 = vmatprep.subr.bf16.mxu0 0
    %1940 = vmatpush1.bf16.msra.mxu0 0
    %1941 = vmatprep.subr.bf16.mxu0 0
    %1942 = vmatpush1.bf16.msra.mxu0 0
    %1943 = vmatprep.subr.bf16.mxu0 0
    %1944 = vmatpush1.bf16.msra.mxu0 0
    %1945 = vmatprep.mubr.bf16.mxu0 0
    %1946 = vmatmul.mubr.bf16.gmra.mrb[0].mxu0 %v1022
    %v1947 = vpop.f32.mrb[0].mxu0
    %v1948 = vadd.f32 0.0, %v1947
    %v1949 = vpop.f32.mrb[0].mxu0
    %v1950 = vpop.f32.mrb[0].mxu0
    %v1951 = vadd.f32 0.0, %v1950
    %v1952 = vpop.f32.mrb[0].mxu0
    %1953 = vdwg.mxu0
    %v1954 = vpack.c.bf16 %v1951, %v1948
    %s1955 = scalar_lea.vmem [#allocation25], 256
    %v1956 = vld [vmem:[%s1955] sm:$0xf]
    %v1957 = vld [vmem:[%s1955 + $0x4] sm:$0xf]
    %v1958 = vld [vmem:[%s1955 + $0x8] sm:$0xf]
    %v1959 = vld [vmem:[%s1955 + $0xc] sm:$0xf]
    %v1960 = vld [vmem:[%s1955 + $0x10] sm:$0xf]
    %v1961 = vld [vmem:[%s1955 + $0x14] sm:$0xf]
    %v1962 = vld [vmem:[%s1955 + $0x18] sm:$0xf]
    %v1963 = vld [vmem:[%s1955 + $0x1c] sm:$0xf]
    %v1964 = vld [vmem:[%s1955 + $0x20] sm:$0xf]
    %v1965 = vld [vmem:[%s1955 + $0x24] sm:$0xf]
    %v1966 = vld [vmem:[%s1955 + $0x28] sm:$0xf]
    %v1967 = vld [vmem:[%s1955 + $0x2c] sm:$0xf]
    %v1968 = vld [vmem:[%s1955 + $0x30] sm:$0xf]
    %v1969 = vld [vmem:[%s1955 + $0x34] sm:$0xf]
    %v1970 = vld [vmem:[%s1955 + $0x38] sm:$0xf]
    %v1971 = vld [vmem:[%s1955 + $0x3c] sm:$0xf]
    %v1988 = vunpack.c.l.b16 %v1956
    %v1989 = vunpack.c.l.b16 %v1957
    %v1990 = vunpack.c.l.b16 %v1958
    %v1991 = vunpack.c.l.b16 %v1959
    %v1992 = vunpack.c.l.b16 %v1960
    %v1993 = vunpack.c.l.b16 %v1961
    %v1994 = vunpack.c.l.b16 %v1962
    %v1995 = vunpack.c.l.b16 %v1963
    %v1996 = vunpack.c.l.b16 %v1964
    %v1997 = vunpack.c.l.b16 %v1965
    %v1998 = vunpack.c.l.b16 %v1966
    %v1999 = vunpack.c.l.b16 %v1967
    %v2000 = vunpack.c.l.b16 %v1968
    %v2001 = vunpack.c.l.b16 %v1969
    %v2002 = vunpack.c.l.b16 %v1970
    %v2003 = vunpack.c.l.b16 %v1971
    %v2004 = vpack.c.b16 %v1989, %v1988
    %v2005 = vpack.c.b16 %v1991, %v1990
    %v2006 = vpack.c.b16 %v1993, %v1992
    %v2007 = vpack.c.b16 %v1995, %v1994
    %v2008 = vpack.c.b16 %v1997, %v1996
    %v2009 = vpack.c.b16 %v1999, %v1998
    %v2010 = vpack.c.b16 %v2001, %v2000
    %v2011 = vpack.c.b16 %v2003, %v2002
    %2020 = vmatprep.subr.bf16.mxu0 0
    %2021 = vmatpush1.bf16.msra.mxu0 %v2004
    %2022 = vmatprep.subr.bf16.mxu0 0
    %2023 = vmatpush1.bf16.msra.mxu0 %v2005
    %2024 = vmatprep.subr.bf16.mxu0 0
    %2025 = vmatpush1.bf16.msra.mxu0 %v2006
    %2026 = vmatprep.subr.bf16.mxu0 0
    %2027 = vmatpush1.bf16.msra.mxu0 %v2007
    %2028 = vmatprep.subr.bf16.mxu0 0
    %2029 = vmatpush1.bf16.msra.mxu0 %v2008
    %2030 = vmatprep.subr.bf16.mxu0 0
    %2031 = vmatpush1.bf16.msra.mxu0 %v2009
    %2032 = vmatprep.subr.bf16.mxu0 0
    %2033 = vmatpush1.bf16.msra.mxu0 %v2010
    %2034 = vmatprep.subr.bf16.mxu0 0
    %2035 = vmatpush1.bf16.msra.mxu0 %v2011
    %2036 = vmatprep.subr.bf16.mxu0 0
    %2037 = vmatpush1.bf16.msra.mxu0 0
    %2038 = vmatprep.subr.bf16.mxu0 0
    %2039 = vmatpush1.bf16.msra.mxu0 0
    %2040 = vmatprep.subr.bf16.mxu0 0
    %2041 = vmatpush1.bf16.msra.mxu0 0
    %2042 = vmatprep.subr.bf16.mxu0 0
    %2043 = vmatpush1.bf16.msra.mxu0 0
    %2044 = vmatprep.subr.bf16.mxu0 0
    %2045 = vmatpush1.bf16.msra.mxu0 0
    %2046 = vmatprep.subr.bf16.mxu0 0
    %2047 = vmatpush1.bf16.msra.mxu0 0
    %2048 = vmatprep.subr.bf16.mxu0 0
    %2049 = vmatpush1.bf16.msra.mxu0 0
    %2050 = vmatprep.subr.bf16.mxu0 0
    %2051 = vmatpush1.bf16.msra.mxu0 0
    %2052 = vmatprep.mubr.bf16.mxu0 0
    %2053 = vmatmul.mubr.bf16.gmra.mrb[0].mxu0 %v1954
    %v2054 = vpop.f32.mrb[0].mxu0
    %v2055 = vadd.f32 0.0, %v2054
    %v2056 = vpop.f32.mrb[0].mxu0
    %v2057 = vpop.f32.mrb[0].mxu0
    %v2058 = vadd.f32 0.0, %v2057
    %v2059 = vpop.f32.mrb[0].mxu0
    %2060 = vdwg.mxu0
    %v2077 = vunpack.c.l.b16 %v1897
    %v2078 = vunpack.c.l.b16 %v1898
    %v2079 = vunpack.c.l.b16 %v1899
    %v2080 = vunpack.c.l.b16 %v1900
    %v2081 = vunpack.c.l.b16 %v1901
    %v2082 = vunpack.c.l.b16 %v1902
    %v2083 = vunpack.c.l.b16 %v1903
    %v2084 = vunpack.c.l.b16 %v1904
    %v2085 = vunpack.c.l.b16 %v1905
    %v2086 = vunpack.c.l.b16 %v1906
    %v2087 = vunpack.c.l.b16 %v1907
    %v2088 = vunpack.c.l.b16 %v1908
    %v2089 = vunpack.c.l.b16 %v1909
    %v2090 = vunpack.c.l.b16 %v1910
    %v2091 = vunpack.c.l.b16 %v1911
    %v2092 = vunpack.c.l.b16 %v1912
    %v2093 = vpack.c.b16 %v2078, %v2077
    %v2094 = vpack.c.b16 %v2080, %v2079
    %v2095 = vpack.c.b16 %v2082, %v2081
    %v2096 = vpack.c.b16 %v2084, %v2083
    %v2097 = vpack.c.b16 %v2086, %v2085
    %v2098 = vpack.c.b16 %v2088, %v2087
    %v2099 = vpack.c.b16 %v2090, %v2089
    %v2100 = vpack.c.b16 %v2092, %v2091
    %2109 = vmatprep.subr.bf16.mxu0 0
    %2110 = vmatpush1.bf16.msra.mxu0 %v2093
    %2111 = vmatprep.subr.bf16.mxu0 0
    %2112 = vmatpush1.bf16.msra.mxu0 %v2094
    %2113 = vmatprep.subr.bf16.mxu0 0
    %2114 = vmatpush1.bf16.msra.mxu0 %v2095
    %2115 = vmatprep.subr.bf16.mxu0 0
    %2116 = vmatpush1.bf16.msra.mxu0 %v2096
    %2117 = vmatprep.subr.bf16.mxu0 0
    %2118 = vmatpush1.bf16.msra.mxu0 %v2097
    %2119 = vmatprep.subr.bf16.mxu0 0
    %2120 = vmatpush1.bf16.msra.mxu0 %v2098
    %2121 = vmatprep.subr.bf16.mxu0 0
    %2122 = vmatpush1.bf16.msra.mxu0 %v2099
    %2123 = vmatprep.subr.bf16.mxu0 0
    %2124 = vmatpush1.bf16.msra.mxu0 %v2100
    %2125 = vmatprep.subr.bf16.mxu0 0
    %2126 = vmatpush1.bf16.msra.mxu0 0
    %2127 = vmatprep.subr.bf16.mxu0 0
    %2128 = vmatpush1.bf16.msra.mxu0 0
    %2129 = vmatprep.subr.bf16.mxu0 0
    %2130 = vmatpush1.bf16.msra.mxu0 0
    %2131 = vmatprep.subr.bf16.mxu0 0
    %2132 = vmatpush1.bf16.msra.mxu0 0
    %2133 = vmatprep.subr.bf16.mxu0 0
    %2134 = vmatpush1.bf16.msra.mxu0 0
    %2135 = vmatprep.subr.bf16.mxu0 0
    %2136 = vmatpush1.bf16.msra.mxu0 0
    %2137 = vmatprep.subr.bf16.mxu0 0
    %2138 = vmatpush1.bf16.msra.mxu0 0
    %2139 = vmatprep.subr.bf16.mxu0 0
    %2140 = vmatpush1.bf16.msra.mxu0 0
    %2141 = vmatprep.mubr.bf16.mxu0 0
    %2142 = vmatmul.mubr.bf16.gmra.mrb[0].mxu0 %v1895
    %v2143 = vpop.f32.mrb[0].mxu0
    %v2144 = vadd.f32 %v2055, %v2143
    %v2145 = vpop.f32.mrb[0].mxu0
    %v2146 = vpop.f32.mrb[0].mxu0
    %v2147 = vadd.f32 %v2058, %v2146
    %v2148 = vpop.f32.mrb[0].mxu0
    %2149 = vdwg.mxu0
    %2150 = vmatprep.subr.bf16.mxu0 0
    %2151 = vmatpush1.bf16.msra.mxu0 %v1954
    %2152 = vmatprep.subr.bf16.mxu0 0
    %2153 = vmatpush1.bf16.msra.mxu0 0
    %2154 = vmatprep.subr.bf16.mxu0 0
    %2155 = vmatpush1.bf16.msra.mxu0 0
    %2156 = vmatprep.subr.bf16.mxu0 0
    %2157 = vmatpush1.bf16.msra.mxu0 0
    %2158 = vmatprep.subr.bf16.mxu0 0
    %2159 = vmatpush1.bf16.msra.mxu0 0
    %2160 = vmatprep.subr.bf16.mxu0 0
    %2161 = vmatpush1.bf16.msra.mxu0 0
    %2162 = vmatprep.subr.bf16.mxu0 0
    %2163 = vmatpush1.bf16.msra.mxu0 0
    %2164 = vmatprep.subr.bf16.mxu0 0
    %2165 = vmatpush1.bf16.msra.mxu0 0
    %2166 = vmatprep.subr.bf16.mxu0 0
    %2167 = vmatpush1.bf16.msra.mxu0 0
    %2168 = vmatprep.subr.bf16.mxu0 0
    %2169 = vmatpush1.bf16.msra.mxu0 0
    %2170 = vmatprep.subr.bf16.mxu0 0
    %2171 = vmatpush1.bf16.msra.mxu0 0
    %2172 = vmatprep.subr.bf16.mxu0 0
    %2173 = vmatpush1.bf16.msra.mxu0 0
    %2174 = vmatprep.subr.bf16.mxu0 0
    %2175 = vmatpush1.bf16.msra.mxu0 0
    %2176 = vmatprep.subr.bf16.mxu0 0
    %2177 = vmatpush1.bf16.msra.mxu0 0
    %2178 = vmatprep.subr.bf16.mxu0 0
    %2179 = vmatpush1.bf16.msra.mxu0 0
    %2180 = vmatprep.subr.bf16.mxu0 0
    %2181 = vmatpush1.bf16.msra.mxu0 0
    %2182 = vmatprep.mubr.bf16.mxu0 0
    %2183 = vmatmul.mubr.bf16.gmra.mrb[0].mxu0 %v1022
    %v2184 = vpop.f32.mrb[0].mxu0
    %v2185 = vadd.f32 0.0, %v2184
    %v2186 = vpop.f32.mrb[0].mxu0
    %v2187 = vpop.f32.mrb[0].mxu0
    %v2188 = vadd.f32 0.0, %v2187
    %v2189 = vpop.f32.mrb[0].mxu0
    %2190 = vdwg.mxu0
    %v2191 = vpack.c.bf16 %v2188, %v2185
    %s2192 = scalar_lea.vmem [#allocation25], 320
    %v2193 = vld [vmem:[%s2192] sm:$0xf]
    %v2194 = vld [vmem:[%s2192 + $0x4] sm:$0xf]
    %v2195 = vld [vmem:[%s2192 + $0x8] sm:$0xf]
    %v2196 = vld [vmem:[%s2192 + $0xc] sm:$0xf]
    %v2197 = vld [vmem:[%s2192 + $0x10] sm:$0xf]
    %v2198 = vld [vmem:[%s2192 + $0x14] sm:$0xf]
    %v2199 = vld [vmem:[%s2192 + $0x18] sm:$0xf]
    %v2200 = vld [vmem:[%s2192 + $0x1c] sm:$0xf]
    %v2201 = vld [vmem:[%s2192 + $0x20] sm:$0xf]
    %v2202 = vld [vmem:[%s2192 + $0x24] sm:$0xf]
    %v2203 = vld [vmem:[%s2192 + $0x28] sm:$0xf]
    %v2204 = vld [vmem:[%s2192 + $0x2c] sm:$0xf]
    %v2205 = vld [vmem:[%s2192 + $0x30] sm:$0xf]
    %v2206 = vld [vmem:[%s2192 + $0x34] sm:$0xf]
    %v2207 = vld [vmem:[%s2192 + $0x38] sm:$0xf]
    %v2208 = vld [vmem:[%s2192 + $0x3c] sm:$0xf]
    %v2225 = vunpack.c.l.b16 %v2193
    %v2226 = vunpack.c.l.b16 %v2194
    %v2227 = vunpack.c.l.b16 %v2195
    %v2228 = vunpack.c.l.b16 %v2196
    %v2229 = vunpack.c.l.b16 %v2197
    %v2230 = vunpack.c.l.b16 %v2198
    %v2231 = vunpack.c.l.b16 %v2199
    %v2232 = vunpack.c.l.b16 %v2200
    %v2233 = vunpack.c.l.b16 %v2201
    %v2234 = vunpack.c.l.b16 %v2202
    %v2235 = vunpack.c.l.b16 %v2203
    %v2236 = vunpack.c.l.b16 %v2204
    %v2237 = vunpack.c.l.b16 %v2205
    %v2238 = vunpack.c.l.b16 %v2206
    %v2239 = vunpack.c.l.b16 %v2207
    %v2240 = vunpack.c.l.b16 %v2208
    %v2241 = vpack.c.b16 %v2226, %v2225
    %v2242 = vpack.c.b16 %v2228, %v2227
    %v2243 = vpack.c.b16 %v2230, %v2229
    %v2244 = vpack.c.b16 %v2232, %v2231
    %v2245 = vpack.c.b16 %v2234, %v2233
    %v2246 = vpack.c.b16 %v2236, %v2235
    %v2247 = vpack.c.b16 %v2238, %v2237
    %v2248 = vpack.c.b16 %v2240, %v2239
    %2257 = vmatprep.subr.bf16.mxu0 0
    %2258 = vmatpush1.bf16.msra.mxu0 %v2241
    %2259 = vmatprep.subr.bf16.mxu0 0
    %2260 = vmatpush1.bf16.msra.mxu0 %v2242
    %2261 = vmatprep.subr.bf16.mxu0 0
    %2262 = vmatpush1.bf16.msra.mxu0 %v2243
    %2263 = vmatprep.subr.bf16.mxu0 0
    %2264 = vmatpush1.bf16.msra.mxu0 %v2244
    %2265 = vmatprep.subr.bf16.mxu0 0
    %2266 = vmatpush1.bf16.msra.mxu0 %v2245
    %2267 = vmatprep.subr.bf16.mxu0 0
    %2268 = vmatpush1.bf16.msra.mxu0 %v2246
    %2269 = vmatprep.subr.bf16.mxu0 0
    %2270 = vmatpush1.bf16.msra.mxu0 %v2247
    %2271 = vmatprep.subr.bf16.mxu0 0
    %2272 = vmatpush1.bf16.msra.mxu0 %v2248
    %2273 = vmatprep.subr.bf16.mxu0 0
    %2274 = vmatpush1.bf16.msra.mxu0 0
    %2275 = vmatprep.subr.bf16.mxu0 0
    %2276 = vmatpush1.bf16.msra.mxu0 0
    %2277 = vmatprep.subr.bf16.mxu0 0
    %2278 = vmatpush1.bf16.msra.mxu0 0
    %2279 = vmatprep.subr.bf16.mxu0 0
    %2280 = vmatpush1.bf16.msra.mxu0 0
    %2281 = vmatprep.subr.bf16.mxu0 0
    %2282 = vmatpush1.bf16.msra.mxu0 0
    %2283 = vmatprep.subr.bf16.mxu0 0
    %2284 = vmatpush1.bf16.msra.mxu0 0
    %2285 = vmatprep.subr.bf16.mxu0 0
    %2286 = vmatpush1.bf16.msra.mxu0 0
    %2287 = vmatprep.subr.bf16.mxu0 0
    %2288 = vmatpush1.bf16.msra.mxu0 0
    %2289 = vmatprep.mubr.bf16.mxu0 0
    %2290 = vmatmul.mubr.bf16.gmra.mrb[0].mxu0 %v2191
    %v2291 = vpop.f32.mrb[0].mxu0
    %v2292 = vadd.f32 0.0, %v2291
    %v2293 = vpop.f32.mrb[0].mxu0
    %v2294 = vpop.f32.mrb[0].mxu0
    %v2295 = vadd.f32 0.0, %v2294
    %v2296 = vpop.f32.mrb[0].mxu0
    %2297 = vdwg.mxu0
    %v2298 = vadd.f32 %v2144, %v2292
    %v2299 = vadd.f32 %v2147, %v2295
    %s2300 = scalar_lea.vmem %s17, 1
    %v2301 = vld [vmem:[%s2300] sm:$0x1]
    %v2303 = vlaneseq
    %v2304 = vshrl.u32 %v2303, 7
    %v2305 = vsub.s32 0, %v2304
    %v2306 = vrot.slane %v2301, %v2305
    %v2308 = vadd.f32 %v2298, %v2306
    %v2309 = vadd.f32 %v2299, %v2306
    %v2310 = vmax.f32 %v2308, 0.0
    %v2311 = vmax.f32 %v2309, 0.0
    %v2312 = vpack.c.bf16 %v2311, %v2310
    %2313 = vmatprep.subr.bf16.mxu0 0
    %2314 = vmatpush1.bf16.msra.mxu0 %v2312
    %2315 = vmatprep.subr.bf16.mxu0 0
    %2316 = vmatpush1.bf16.msra.mxu0 0
    %2317 = vmatprep.subr.bf16.mxu0 0
    %2318 = vmatpush1.bf16.msra.mxu0 0
    %2319 = vmatprep.subr.bf16.mxu0 0
    %2320 = vmatpush1.bf16.msra.mxu0 0
    %2321 = vmatprep.subr.bf16.mxu0 0
    %2322 = vmatpush1.bf16.msra.mxu0 0
    %2323 = vmatprep.subr.bf16.mxu0 0
    %2324 = vmatpush1.bf16.msra.mxu0 0
    %2325 = vmatprep.subr.bf16.mxu0 0
    %2326 = vmatpush1.bf16.msra.mxu0 0
    %2327 = vmatprep.subr.bf16.mxu0 0
    %2328 = vmatpush1.bf16.msra.mxu0 0
    %2329 = vmatprep.subr.bf16.mxu0 0
    %2330 = vmatpush1.bf16.msra.mxu0 0
    %2331 = vmatprep.subr.bf16.mxu0 0
    %2332 = vmatpush1.bf16.msra.mxu0 0
    %2333 = vmatprep.subr.bf16.mxu0 0
    %2334 = vmatpush1.bf16.msra.mxu0 0
    %2335 = vmatprep.subr.bf16.mxu0 0
    %2336 = vmatpush1.bf16.msra.mxu0 0
    %2337 = vmatprep.subr.bf16.mxu0 0
    %2338 = vmatpush1.bf16.msra.mxu0 0
    %2339 = vmatprep.subr.bf16.mxu0 0
    %2340 = vmatpush1.bf16.msra.mxu0 0
    %2341 = vmatprep.subr.bf16.mxu0 0
    %2342 = vmatpush1.bf16.msra.mxu0 0
    %2343 = vmatprep.subr.bf16.mxu0 0
    %2344 = vmatpush1.bf16.msra.mxu0 0
    %2345 = vmatprep.mubr.bf16.mxu0 0
    %2346 = vmatmul.mubr.bf16.gmra.mrb[0].mxu0 %v509
    %v2347 = vpop.f32.mrb[0].mxu0
    %v2348 = vadd.f32 0.0, %v2347
    %v2349 = vpop.f32.mrb[0].mxu0
    %v2350 = vpop.f32.mrb[0].mxu0
    %v2351 = vadd.f32 0.0, %v2350
    %v2352 = vpop.f32.mrb[0].mxu0
    %2353 = vdwg.mxu0
    %2354 = vmatprep.subr.bf16.mxu0 0
    %2355 = vmatpush1.bf16.msra.mxu0 %v2312
    %2356 = vmatprep.subr.bf16.mxu0 0
    %2357 = vmatpush1.bf16.msra.mxu0 0
    %2358 = vmatprep.subr.bf16.mxu0 0
    %2359 = vmatpush1.bf16.msra.mxu0 0
    %2360 = vmatprep.subr.bf16.mxu0 0
    %2361 = vmatpush1.bf16.msra.mxu0 0
    %2362 = vmatprep.subr.bf16.mxu0 0
    %2363 = vmatpush1.bf16.msra.mxu0 0
    %2364 = vmatprep.subr.bf16.mxu0 0
    %2365 = vmatpush1.bf16.msra.mxu0 0
    %2366 = vmatprep.subr.bf16.mxu0 0
    %2367 = vmatpush1.bf16.msra.mxu0 0
    %2368 = vmatprep.subr.bf16.mxu0 0
    %2369 = vmatpush1.bf16.msra.mxu0 0
    %2370 = vmatprep.subr.bf16.mxu0 0
    %2371 = vmatpush1.bf16.msra.mxu0 0
    %2372 = vmatprep.subr.bf16.mxu0 0
    %2373 = vmatpush1.bf16.msra.mxu0 0
    %2374 = vmatprep.subr.bf16.mxu0 0
    %2375 = vmatpush1.bf16.msra.mxu0 0
    %2376 = vmatprep.subr.bf16.mxu0 0
    %2377 = vmatpush1.bf16.msra.mxu0 0
    %2378 = vmatprep.subr.bf16.mxu0 0
    %2379 = vmatpush1.bf16.msra.mxu0 0
    %2380 = vmatprep.subr.bf16.mxu0 0
    %2381 = vmatpush1.bf16.msra.mxu0 0
    %2382 = vmatprep.subr.bf16.mxu0 0
    %2383 = vmatpush1.bf16.msra.mxu0 0
    %2384 = vmatprep.subr.bf16.mxu0 0
    %2385 = vmatpush1.bf16.msra.mxu0 0
    %2386 = vmatprep.mubr.bf16.mxu0 0
    %2387 = vmatmul.mubr.bf16.gmra.mrb[0].mxu0 %v560
    %v2388 = vpop.f32.mrb[0].mxu0
    %v2389 = vadd.f32 0.0, %v2388
    %v2390 = vpop.f32.mrb[0].mxu0
    %v2391 = vpop.f32.mrb[0].mxu0
    %v2392 = vadd.f32 0.0, %v2391
    %v2393 = vpop.f32.mrb[0].mxu0
    %2394 = vdwg.mxu0
    %v2395 = vpack.c.bf16 %v2351, %v2348
    %s2396 = scalar_lea.vmem [#allocation17], 128
    %v2397 = vld [vmem:[%s2396] sm:$0xf]
    %v2398 = vld [vmem:[%s2396 + $0x4] sm:$0xf]
    %v2399 = vld [vmem:[%s2396 + $0x8] sm:$0xf]
    %v2400 = vld [vmem:[%s2396 + $0xc] sm:$0xf]
    %v2401 = vld [vmem:[%s2396 + $0x10] sm:$0xf]
    %v2402 = vld [vmem:[%s2396 + $0x14] sm:$0xf]
    %v2403 = vld [vmem:[%s2396 + $0x18] sm:$0xf]
    %v2404 = vld [vmem:[%s2396 + $0x1c] sm:$0xf]
    %v2405 = vld [vmem:[%s2396 + $0x20] sm:$0xf]
    %v2406 = vld [vmem:[%s2396 + $0x24] sm:$0xf]
    %v2407 = vld [vmem:[%s2396 + $0x28] sm:$0xf]
    %v2408 = vld [vmem:[%s2396 + $0x2c] sm:$0xf]
    %v2409 = vld [vmem:[%s2396 + $0x30] sm:$0xf]
    %v2410 = vld [vmem:[%s2396 + $0x34] sm:$0xf]
    %v2411 = vld [vmem:[%s2396 + $0x38] sm:$0xf]
    %v2412 = vld [vmem:[%s2396 + $0x3c] sm:$0xf]
    %v2413 = vpack.c.bf16 %v2392, %v2389
    %s2414 = scalar_lea.vmem [#allocation19], 128
    %v2415 = vld [vmem:[%s2414] sm:$0xf]
    %v2416 = vld [vmem:[%s2414 + $0x4] sm:$0xf]
    %v2417 = vld [vmem:[%s2414 + $0x8] sm:$0xf]
    %v2418 = vld [vmem:[%s2414 + $0xc] sm:$0xf]
    %v2419 = vld [vmem:[%s2414 + $0x10] sm:$0xf]
    %v2420 = vld [vmem:[%s2414 + $0x14] sm:$0xf]
    %v2421 = vld [vmem:[%s2414 + $0x18] sm:$0xf]
    %v2422 = vld [vmem:[%s2414 + $0x1c] sm:$0xf]
    %v2423 = vld [vmem:[%s2414 + $0x20] sm:$0xf]
    %v2424 = vld [vmem:[%s2414 + $0x24] sm:$0xf]
    %v2425 = vld [vmem:[%s2414 + $0x28] sm:$0xf]
    %v2426 = vld [vmem:[%s2414 + $0x2c] sm:$0xf]
    %v2427 = vld [vmem:[%s2414 + $0x30] sm:$0xf]
    %v2428 = vld [vmem:[%s2414 + $0x34] sm:$0xf]
    %v2429 = vld [vmem:[%s2414 + $0x38] sm:$0xf]
    %v2430 = vld [vmem:[%s2414 + $0x3c] sm:$0xf]
    %v2447 = vunpack.c.l.b16 %v2415
    %v2448 = vunpack.c.l.b16 %v2416
    %v2449 = vunpack.c.l.b16 %v2417
    %v2450 = vunpack.c.l.b16 %v2418
    %v2451 = vunpack.c.l.b16 %v2419
    %v2452 = vunpack.c.l.b16 %v2420
    %v2453 = vunpack.c.l.b16 %v2421
    %v2454 = vunpack.c.l.b16 %v2422
    %v2455 = vunpack.c.l.b16 %v2423
    %v2456 = vunpack.c.l.b16 %v2424
    %v2457 = vunpack.c.l.b16 %v2425
    %v2458 = vunpack.c.l.b16 %v2426
    %v2459 = vunpack.c.l.b16 %v2427
    %v2460 = vunpack.c.l.b16 %v2428
    %v2461 = vunpack.c.l.b16 %v2429
    %v2462 = vunpack.c.l.b16 %v2430
    %v2463 = vpack.c.b16 %v2448, %v2447
    %v2464 = vpack.c.b16 %v2450, %v2449
    %v2465 = vpack.c.b16 %v2452, %v2451
    %v2466 = vpack.c.b16 %v2454, %v2453
    %v2467 = vpack.c.b16 %v2456, %v2455
    %v2468 = vpack.c.b16 %v2458, %v2457
    %v2469 = vpack.c.b16 %v2460, %v2459
    %v2470 = vpack.c.b16 %v2462, %v2461
    %2479 = vmatprep.subr.bf16.mxu0 0
    %2480 = vmatpush1.bf16.msra.mxu0 %v2463
    %2481 = vmatprep.subr.bf16.mxu0 0
    %2482 = vmatpush1.bf16.msra.mxu0 %v2464
    %2483 = vmatprep.subr.bf16.mxu0 0
    %2484 = vmatpush1.bf16.msra.mxu0 %v2465
    %2485 = vmatprep.subr.bf16.mxu0 0
    %2486 = vmatpush1.bf16.msra.mxu0 %v2466
    %2487 = vmatprep.subr.bf16.mxu0 0
    %2488 = vmatpush1.bf16.msra.mxu0 %v2467
    %2489 = vmatprep.subr.bf16.mxu0 0
    %2490 = vmatpush1.bf16.msra.mxu0 %v2468
    %2491 = vmatprep.subr.bf16.mxu0 0
    %2492 = vmatpush1.bf16.msra.mxu0 %v2469
    %2493 = vmatprep.subr.bf16.mxu0 0
    %2494 = vmatpush1.bf16.msra.mxu0 %v2470
    %2495 = vmatprep.subr.bf16.mxu0 0
    %2496 = vmatpush1.bf16.msra.mxu0 0
    %2497 = vmatprep.subr.bf16.mxu0 0
    %2498 = vmatpush1.bf16.msra.mxu0 0
    %2499 = vmatprep.subr.bf16.mxu0 0
    %2500 = vmatpush1.bf16.msra.mxu0 0
    %2501 = vmatprep.subr.bf16.mxu0 0
    %2502 = vmatpush1.bf16.msra.mxu0 0
    %2503 = vmatprep.subr.bf16.mxu0 0
    %2504 = vmatpush1.bf16.msra.mxu0 0
    %2505 = vmatprep.subr.bf16.mxu0 0
    %2506 = vmatpush1.bf16.msra.mxu0 0
    %2507 = vmatprep.subr.bf16.mxu0 0
    %2508 = vmatpush1.bf16.msra.mxu0 0
    %2509 = vmatprep.subr.bf16.mxu0 0
    %2510 = vmatpush1.bf16.msra.mxu0 0
    %2511 = vmatprep.mubr.bf16.mxu0 0
    %2512 = vmatmul.mubr.bf16.gmra.mrb[0].mxu0 %v2413
    %v2513 = vpop.f32.mrb[0].mxu0
    %v2514 = vadd.f32 0.0, %v2513
    %v2515 = vpop.f32.mrb[0].mxu0
    %v2516 = vpop.f32.mrb[0].mxu0
    %v2517 = vadd.f32 0.0, %v2516
    %v2518 = vpop.f32.mrb[0].mxu0
    %2519 = vdwg.mxu0
    %v2536 = vunpack.c.l.b16 %v2397
    %v2537 = vunpack.c.l.b16 %v2398
    %v2538 = vunpack.c.l.b16 %v2399
    %v2539 = vunpack.c.l.b16 %v2400
    %v2540 = vunpack.c.l.b16 %v2401
    %v2541 = vunpack.c.l.b16 %v2402
    %v2542 = vunpack.c.l.b16 %v2403
    %v2543 = vunpack.c.l.b16 %v2404
    %v2544 = vunpack.c.l.b16 %v2405
    %v2545 = vunpack.c.l.b16 %v2406
    %v2546 = vunpack.c.l.b16 %v2407
    %v2547 = vunpack.c.l.b16 %v2408
    %v2548 = vunpack.c.l.b16 %v2409
    %v2549 = vunpack.c.l.b16 %v2410
    %v2550 = vunpack.c.l.b16 %v2411
    %v2551 = vunpack.c.l.b16 %v2412
    %v2552 = vpack.c.b16 %v2537, %v2536
    %v2553 = vpack.c.b16 %v2539, %v2538
    %v2554 = vpack.c.b16 %v2541, %v2540
    %v2555 = vpack.c.b16 %v2543, %v2542
    %v2556 = vpack.c.b16 %v2545, %v2544
    %v2557 = vpack.c.b16 %v2547, %v2546
    %v2558 = vpack.c.b16 %v2549, %v2548
    %v2559 = vpack.c.b16 %v2551, %v2550
    %2568 = vmatprep.subr.bf16.mxu0 0
    %2569 = vmatpush1.bf16.msra.mxu0 %v2552
    %2570 = vmatprep.subr.bf16.mxu0 0
    %2571 = vmatpush1.bf16.msra.mxu0 %v2553
    %2572 = vmatprep.subr.bf16.mxu0 0
    %2573 = vmatpush1.bf16.msra.mxu0 %v2554
    %2574 = vmatprep.subr.bf16.mxu0 0
    %2575 = vmatpush1.bf16.msra.mxu0 %v2555
    %2576 = vmatprep.subr.bf16.mxu0 0
    %2577 = vmatpush1.bf16.msra.mxu0 %v2556
    %2578 = vmatprep.subr.bf16.mxu0 0
    %2579 = vmatpush1.bf16.msra.mxu0 %v2557
    %2580 = vmatprep.subr.bf16.mxu0 0
    %2581 = vmatpush1.bf16.msra.mxu0 %v2558
    %2582 = vmatprep.subr.bf16.mxu0 0
    %2583 = vmatpush1.bf16.msra.mxu0 %v2559
    %2584 = vmatprep.subr.bf16.mxu0 0
    %2585 = vmatpush1.bf16.msra.mxu0 0
    %2586 = vmatprep.subr.bf16.mxu0 0
    %2587 = vmatpush1.bf16.msra.mxu0 0
    %2588 = vmatprep.subr.bf16.mxu0 0
    %2589 = vmatpush1.bf16.msra.mxu0 0
    %2590 = vmatprep.subr.bf16.mxu0 0
    %2591 = vmatpush1.bf16.msra.mxu0 0
    %2592 = vmatprep.subr.bf16.mxu0 0
    %2593 = vmatpush1.bf16.msra.mxu0 0
    %2594 = vmatprep.subr.bf16.mxu0 0
    %2595 = vmatpush1.bf16.msra.mxu0 0
    %2596 = vmatprep.subr.bf16.mxu0 0
    %2597 = vmatpush1.bf16.msra.mxu0 0
    %2598 = vmatprep.subr.bf16.mxu0 0
    %2599 = vmatpush1.bf16.msra.mxu0 0
    %2600 = vmatprep.mubr.bf16.mxu0 0
    %2601 = vmatmul.mubr.bf16.gmra.mrb[0].mxu0 %v2395
    %v2602 = vpop.f32.mrb[0].mxu0
    %v2603 = vadd.f32 %v2514, %v2602
    %v2604 = vpop.f32.mrb[0].mxu0
    %v2605 = vpop.f32.mrb[0].mxu0
    %v2606 = vadd.f32 %v2517, %v2605
    %v2607 = vpop.f32.mrb[0].mxu0
    %2608 = vdwg.mxu0
    %s2609 = scalar_lea.vmem %s15, 32
    %v2610 = vld [vmem:[%s2609] sm:$0xff]
    %v2611 = vld [vmem:[%s2609 + $0x8] sm:$0xff]
    %v2612 = vadd.f32 %v2603, %v2610
    %v2613 = vadd.f32 %v2606, %v2611
    %s2614 = scalar_lea.vmem [#allocation20], 2
    %v2615 = vld [vmem:[%s2614] sm:$0x1]
    %v2617 = vlaneseq
    %v2618 = vshrl.u32 %v2617, 7
    %v2619 = vsub.s32 0, %v2618
    %v2620 = vrot.slane %v2615, %v2619
    %v2622 = vadd.f32 %v2612, %v2620
    %v2623 = vadd.f32 %v2613, %v2620
    %v2624 = vmax.f32 %v2622, 0.0
    %v2625 = vmax.f32 %v2623, 0.0
    %v2626 = vpack.c.bf16 %v2625, %v2624
    %s2627 = scalar_lea.vmem [#allocation22], 128
    %v2628 = vld [vmem:[%s2627] sm:$0xf]
    %v2629 = vld [vmem:[%s2627 + $0x4] sm:$0xf]
    %v2630 = vld [vmem:[%s2627 + $0x8] sm:$0xf]
    %v2631 = vld [vmem:[%s2627 + $0xc] sm:$0xf]
    %v2632 = vld [vmem:[%s2627 + $0x10] sm:$0xf]
    %v2633 = vld [vmem:[%s2627 + $0x14] sm:$0xf]
    %v2634 = vld [vmem:[%s2627 + $0x18] sm:$0xf]
    %v2635 = vld [vmem:[%s2627 + $0x1c] sm:$0xf]
    %v2636 = vld [vmem:[%s2627 + $0x20] sm:$0xf]
    %v2637 = vld [vmem:[%s2627 + $0x24] sm:$0xf]
    %v2638 = vld [vmem:[%s2627 + $0x28] sm:$0xf]
    %v2639 = vld [vmem:[%s2627 + $0x2c] sm:$0xf]
    %v2640 = vld [vmem:[%s2627 + $0x30] sm:$0xf]
    %v2641 = vld [vmem:[%s2627 + $0x34] sm:$0xf]
    %v2642 = vld [vmem:[%s2627 + $0x38] sm:$0xf]
    %v2643 = vld [vmem:[%s2627 + $0x3c] sm:$0xf]
    %s2644 = scalar_lea.vmem [#allocation23], 2
    %v2645 = vld [vmem:[%s2644] sm:$0x1]
    %v2647 = vlaneseq
    %v2648 = vshrl.u32 %v2647, 7
    %v2649 = vsub.s32 0, %v2648
    %v2650 = vrot.slane %v2645, %v2649
    %v2668 = vunpack.c.l.b16 %v2628
    %v2669 = vunpack.c.l.b16 %v2629
    %v2670 = vunpack.c.l.b16 %v2630
    %v2671 = vunpack.c.l.b16 %v2631
    %v2672 = vunpack.c.l.b16 %v2632
    %v2673 = vunpack.c.l.b16 %v2633
    %v2674 = vunpack.c.l.b16 %v2634
    %v2675 = vunpack.c.l.b16 %v2635
    %v2676 = vunpack.c.l.b16 %v2636
    %v2677 = vunpack.c.l.b16 %v2637
    %v2678 = vunpack.c.l.b16 %v2638
    %v2679 = vunpack.c.l.b16 %v2639
    %v2680 = vunpack.c.l.b16 %v2640
    %v2681 = vunpack.c.l.b16 %v2641
    %v2682 = vunpack.c.l.b16 %v2642
    %v2683 = vunpack.c.l.b16 %v2643
    %v2684 = vpack.c.b16 %v2669, %v2668
    %v2685 = vpack.c.b16 %v2671, %v2670
    %v2686 = vpack.c.b16 %v2673, %v2672
    %v2687 = vpack.c.b16 %v2675, %v2674
    %v2688 = vpack.c.b16 %v2677, %v2676
    %v2689 = vpack.c.b16 %v2679, %v2678
    %v2690 = vpack.c.b16 %v2681, %v2680
    %v2691 = vpack.c.b16 %v2683, %v2682
    %2700 = vmatprep.subr.bf16.mxu0 0
    %2701 = vmatpush1.bf16.msra.mxu0 %v2684
    %2702 = vmatprep.subr.bf16.mxu0 0
    %2703 = vmatpush1.bf16.msra.mxu0 %v2685
    %2704 = vmatprep.subr.bf16.mxu0 0
    %2705 = vmatpush1.bf16.msra.mxu0 %v2686
    %2706 = vmatprep.subr.bf16.mxu0 0
    %2707 = vmatpush1.bf16.msra.mxu0 %v2687
    %2708 = vmatprep.subr.bf16.mxu0 0
    %2709 = vmatpush1.bf16.msra.mxu0 %v2688
    %2710 = vmatprep.subr.bf16.mxu0 0
    %2711 = vmatpush1.bf16.msra.mxu0 %v2689
    %2712 = vmatprep.subr.bf16.mxu0 0
    %2713 = vmatpush1.bf16.msra.mxu0 %v2690
    %2714 = vmatprep.subr.bf16.mxu0 0
    %2715 = vmatpush1.bf16.msra.mxu0 %v2691
    %2716 = vmatprep.subr.bf16.mxu0 0
    %2717 = vmatpush1.bf16.msra.mxu0 0
    %2718 = vmatprep.subr.bf16.mxu0 0
    %2719 = vmatpush1.bf16.msra.mxu0 0
    %2720 = vmatprep.subr.bf16.mxu0 0
    %2721 = vmatpush1.bf16.msra.mxu0 0
    %2722 = vmatprep.subr.bf16.mxu0 0
    %2723 = vmatpush1.bf16.msra.mxu0 0
    %2724 = vmatprep.subr.bf16.mxu0 0
    %2725 = vmatpush1.bf16.msra.mxu0 0
    %2726 = vmatprep.subr.bf16.mxu0 0
    %2727 = vmatpush1.bf16.msra.mxu0 0
    %2728 = vmatprep.subr.bf16.mxu0 0
    %2729 = vmatpush1.bf16.msra.mxu0 0
    %2730 = vmatprep.subr.bf16.mxu0 0
    %2731 = vmatpush1.bf16.msra.mxu0 0
    %2732 = vmatprep.mubr.bf16.mxu0 0
    %2733 = vmatmul.mubr.bf16.gmra.mrb[0].mxu0 %v2626
    %v2734 = vpop.f32.mrb[0].mxu0
    %v2735 = vadd.f32 %v2650, %v2734
    %v2736 = vpop.f32.mrb[0].mxu0
    %v2737 = vpop.f32.mrb[0].mxu0
    %v2738 = vadd.f32 %v2650, %v2737
    %v2739 = vpop.f32.mrb[0].mxu0
    %2740 = vdwg.mxu0
    %v2741 = vpack.c.bf16 %v2738, %v2735
    %2742 = vmatprep.subr.bf16.mxu0 0
    %2743 = vmatpush1.bf16.msra.mxu0 %v2741
    %2744 = vmatprep.subr.bf16.mxu0 0
    %2745 = vmatpush1.bf16.msra.mxu0 0
    %2746 = vmatprep.subr.bf16.mxu0 0
    %2747 = vmatpush1.bf16.msra.mxu0 0
    %2748 = vmatprep.subr.bf16.mxu0 0
    %2749 = vmatpush1.bf16.msra.mxu0 0
    %2750 = vmatprep.subr.bf16.mxu0 0
    %2751 = vmatpush1.bf16.msra.mxu0 0
    %2752 = vmatprep.subr.bf16.mxu0 0
    %2753 = vmatpush1.bf16.msra.mxu0 0
    %2754 = vmatprep.subr.bf16.mxu0 0
    %2755 = vmatpush1.bf16.msra.mxu0 0
    %2756 = vmatprep.subr.bf16.mxu0 0
    %2757 = vmatpush1.bf16.msra.mxu0 0
    %2758 = vmatprep.subr.bf16.mxu0 0
    %2759 = vmatpush1.bf16.msra.mxu0 0
    %2760 = vmatprep.subr.bf16.mxu0 0
    %2761 = vmatpush1.bf16.msra.mxu0 0
    %2762 = vmatprep.subr.bf16.mxu0 0
    %2763 = vmatpush1.bf16.msra.mxu0 0
    %2764 = vmatprep.subr.bf16.mxu0 0
    %2765 = vmatpush1.bf16.msra.mxu0 0
    %2766 = vmatprep.subr.bf16.mxu0 0
    %2767 = vmatpush1.bf16.msra.mxu0 0
    %2768 = vmatprep.subr.bf16.mxu0 0
    %2769 = vmatpush1.bf16.msra.mxu0 0
    %2770 = vmatprep.subr.bf16.mxu0 0
    %2771 = vmatpush1.bf16.msra.mxu0 0
    %2772 = vmatprep.subr.bf16.mxu0 0
    %2773 = vmatpush1.bf16.msra.mxu0 0
    %2774 = vmatprep.mubr.bf16.mxu0 0
    %2775 = vmatmul.mubr.bf16.gmra.mrb[0].mxu0 %v952
    %v2776 = vpop.f32.mrb[0].mxu0
    %v2777 = vadd.f32 0.0, %v2776
    %v2778 = vpop.f32.mrb[0].mxu0
    %v2779 = vpop.f32.mrb[0].mxu0
    %v2780 = vadd.f32 0.0, %v2779
    %v2781 = vpop.f32.mrb[0].mxu0
    %2782 = vdwg.mxu0
    %2783 = vst [vmem:[#allocation26] sm:$0xff] %v2777
    %2784 = vst [vmem:[#allocation26 + $0x8] sm:$0xff] %v2780
    // Predicated region
    $region134: #{tpu_custom_call.1} parent=1 // pred_check
      _
    $region135: #{tpu_custom_call.1} parent=1 // pred_check_branch
      %2786 = sbr.rel (0) target = $region137
    $region136: #{tpu_custom_call.1} parent=1 // pred_region
      %s2788 = ssub.s32 256, 256
      %2789 = vsyncadd [#allocation4], %s2788
      %s2790 = sshll.u32 [#allocation26], 4
      %s2791 = int_to_ptr.vmem [resolvable:$true] %s2790
      %2796 = dma.vmem_to_hbm [thread:$0]  %s2791, 256, %s18, [#allocation4], 128, 128, 8
    $region137: #{tpu_custom_call.1} parent=1 // pred_fallthru
      _
    // Predicated region
    $region138: #{tpu_custom_call.1} parent=1 // pred_check
      _
    $region139: #{tpu_custom_call.1} parent=1 // pred_check_branch
      %2798 = sbr.rel (0) target = $region141
    $region140: #{tpu_custom_call.1} parent=1 // pred_region
      %2799 = dma.done [#allocation4], 256
    $region141: #{tpu_custom_call.1} parent=1 // pred_fallthru
      _
    %2800 = vsyncpa [#allocation3], 1
    %2801 = vsyncpa [#allocation6], 1
    %2802 = vsyncpa [#allocation9], 1
    %2803 = vsyncpa [#allocation12], 1
    %2804 = vsyncpa [#allocation15], 1
    %2805 = vsyncpa [#allocation18], 1
    %2806 = vsyncpa [#allocation21], 1
    %2807 = vsyncpa [#allocation24], 1
    %2808 = vsyncpa [#allocation4], 1

</llo_original>
